<compile_context>
chip_gen: v7x
topology: tpu7x:2x2x1
jax: 0.10.0
libtpu: 0.0.40
codegen_flags: <defaults>
</compile_context>

<pallas_src>
import functools

import jax
import jax.numpy as jnp
from jax.experimental import pallas as pl
from jax.experimental.pallas import tpu as pltpu

LANE = 128


# ----------------------------------------------------------------------------
# Fused BasicBlock kernel (one batch image per grid step).
# ----------------------------------------------------------------------------
def _pad_hw1(x):
    """Zero-pad by 1 on both spatial axes of an (H, W, C) value, in-register."""
    H, W, C = x.shape
    zc = jnp.zeros((H, 1, C), x.dtype)
    x = jnp.concatenate([zc, x, zc], axis=1)          # (H, W+2, C)
    zr = jnp.zeros((1, W + 2, C), x.dtype)
    return jnp.concatenate([zr, x, zr], axis=0)       # (H+2, W+2, C)


def _im2col_3x3(xp, H, W):
    """(H+2, W+2, C) -> (H*W, 9*C); column order (kh, kw, c), c fastest."""
    C = xp.shape[-1]
    cols = [xp[kh:kh + H, kw:kw + W, :].reshape(H * W, C)
            for kh in range(3) for kw in range(3)]
    return jnp.concatenate(cols, axis=-1)


def _basic_block_kernel(x_ref, w1_ref, b1_ref, w2_ref, b2_ref, o_ref,
                        *, H, W, Cin, Cp):
    # --- conv1 (3x3, pad 1) + bias + ReLU: one im2col matmul, K = 9*Cin ---
    x = x_ref[0].astype(jnp.bfloat16)                          # (H, W, Cin)
    p1 = _im2col_3x3(_pad_hw1(x), H, W)                        # (H*W, 9*Cin)
    a1 = jnp.dot(p1, w1_ref[...], preferred_element_type=jnp.float32)
    a1 = jnp.maximum(a1 + b1_ref[...], 0.0)                    # f32 elementwise

    # --- conv2 (3x3, pad 1) + fused 1x1 shortcut: one matmul, K = 9*Cp+Cin ---
    h = a1.reshape(H, W, Cp).astype(jnp.bfloat16)
    p2 = jnp.concatenate(
        [_im2col_3x3(_pad_hw1(h), H, W),                       # conv2 taps
         x.reshape(H * W, Cin)],                               # 1x1 shortcut tap
        axis=-1)                                               # (H*W, 9*Cp+Cin)
    y = jnp.dot(p2, w2_ref[...], preferred_element_type=jnp.float32)
    o_ref[0] = (y + b2_ref[...]).reshape(H, W, Cp)             # lane-dense store


def basic_block_pallas(x_nhwc, kw):
    """x_nhwc: (N, H, W, Cin) f32. Returns (N, H, W, Cout) f32 (no pooling)."""
    N, H, W, Cin = x_nhwc.shape
    Cp, Cout = kw["cp"], kw["cout"]
    K1 = 9 * Cin
    K2 = 9 * Cp + Cin

    kernel = functools.partial(_basic_block_kernel, H=H, W=W, Cin=Cin, Cp=Cp)

    # VMEM limit sized from the actual block footprint (with generous margin).
    block_bytes = (H * W * Cin * 4 + H * W * Cp * 4) * 2            # dbl-buffered io
    weight_bytes = (K1 * Cp + K2 * Cp) * 2 * 2 + 2 * Cp * 4 * 2
    temp_bytes = (H * W * (K1 + K2)) * 2 + 2 * H * W * Cp * 4 \
        + (H + 2) * (W + 2) * (Cin + Cp) * 2
    est = block_bytes + weight_bytes + temp_bytes
    vmem_limit = int(min(64 << 20, max(32 << 20, 2 * est)))

    flops = 2 * N * H * W * Cp * (K1 + K2)
    bytes_accessed = int(N * H * W * Cin * 4 + N * H * W * Cp * 4
                         + (K1 * Cp + K2 * Cp) * 2 + 2 * Cp * 4)

    out = pl.pallas_call(
        kernel,
        out_shape=jax.ShapeDtypeStruct((N, H, W, Cp), jnp.float32),
        grid_spec=pltpu.PrefetchScalarGridSpec(
            num_scalar_prefetch=0,
            grid=(N,),
            in_specs=[
                pl.BlockSpec((1, H, W, Cin), lambda n: (n, 0, 0, 0)),
                pl.BlockSpec((K1, Cp), lambda n: (0, 0)),
                pl.BlockSpec((1, Cp), lambda n: (0, 0)),
                pl.BlockSpec((K2, Cp), lambda n: (0, 0)),
                pl.BlockSpec((1, Cp), lambda n: (0, 0)),
            ],
            out_specs=pl.BlockSpec((1, H, W, Cp), lambda n: (n, 0, 0, 0)),
        ),
        compiler_params=pltpu.CompilerParams(
            dimension_semantics=("parallel",),
            vmem_limit_bytes=vmem_limit,
        ),
        cost_estimate=pl.CostEstimate(flops=flops, transcendentals=0,
                                      bytes_accessed=bytes_accessed),
    )(x_nhwc.astype(jnp.float32), kw["w1_flat"], kw["b1"],
      kw["w2sc_flat"], kw["b2sc"])

    return out if Cp == Cout else out[..., :Cout]
    # TODO(synk): for large H/W (and deeper per-core pipelining on v7x) add
    # spatial row-tiling with a 2-row halo via manual DMA; a 16x16 image fits
    # VMEM trivially so whole-image blocks are used here.


# ----------------------------------------------------------------------------
# Parameter init (deterministic, synthetic) + kernel-ready weight prep.
# ----------------------------------------------------------------------------
def _spectral_norm(w_oihw, key, eps=1e-4, n_iter=1):
    # TODO(synk): torch spectral_norm re-runs a power iteration every forward
    # with a persistent u; here it is applied once at init (eval-style weight).
    cout = w_oihw.shape[0]
    wm = w_oihw.reshape(cout, -1)
    u = jax.random.normal(key, (cout,), jnp.float32)
    u = u / jnp.maximum(jnp.linalg.norm(u), eps)
    v = u
    for _ in range(n_iter):
        v = wm.T @ u
        v = v / jnp.maximum(jnp.linalg.norm(v), eps)
        u = wm @ v
        u = u / jnp.maximum(jnp.linalg.norm(u), eps)
    sigma = u @ (wm @ v)
    return w_oihw / sigma


def _init_conv(key, in_ch, out_ch, ksize, spectral=True):
    kw_, kb_, ku_ = jax.random.split(key, 3)
    w = jax.random.normal(kw_, (out_ch, in_ch, ksize, ksize), jnp.float32) * 0.1
    b = jax.random.normal(kb_, (out_ch,), jnp.float32) * 0.01
    if spectral:
        w = _spectral_norm(w, ku_)
    return jnp.transpose(w, (2, 3, 1, 0)), b            # HWIO, (Cout,)


def init_basic_block_params(key, in_ch, out_ch):
    k1, k2, k3 = jax.random.split(key, 3)
    return {
        "conv1": _init_conv(k1, in_ch, out_ch, 3),
        "conv2": _init_conv(k2, out_ch, out_ch, 3),
        "c_sc":  _init_conv(k3, in_ch, out_ch, 1),
    }


def prepare_kernel_weights(params):
    """Flatten / pad / cast weights once (im2col layout, lane-dense Cout)."""
    w1, b1 = params["conv1"]
    w2, b2 = params["conv2"]
    wsc, bsc = params["c_sc"]
    _, _, Cin, Cout = w1.shape
    Cp = ((Cout + LANE - 1) // LANE) * LANE
    po = Cp - Cout

    w1p = jnp.pad(w1, ((0, 0), (0, 0), (0, 0), (0, po)))        # (3,3,Cin,Cp)
    w2p = jnp.pad(w2, ((0, 0), (0, 0), (0, po), (0, po)))       # (3,3,Cp,Cp)
    wscp = jnp.pad(wsc, ((0, 0), (0, 0), (0, 0), (0, po)))      # (1,1,Cin,Cp)
    b1p = jnp.pad(b1, (0, po))
    b2p = jnp.pad(b2 + bsc, (0, po))                            # fused bias

    w1_flat = w1p.reshape(9 * Cin, Cp).astype(jnp.bfloat16)
    w2sc_flat = jnp.concatenate(
        [w2p.reshape(9 * Cp, Cp), wscp.reshape(Cin, Cp)],
        axis=0).astype(jnp.bfloat16)                            # (9*Cp+Cin, Cp)
    return {
        "w1_flat": w1_flat,
        "w2sc_flat": w2sc_flat,
        "b1": b1p.reshape(1, Cp).astype(jnp.float32),
        "b2sc": b2p.reshape(1, Cp).astype(jnp.float32),
        "cin": int(Cin), "cout": int(Cout), "cp": int(Cp),
    }


# ----------------------------------------------------------------------------
# Public forward (NCHW, matches the PyTorch module) + pure-JAX reference.
# ----------------------------------------------------------------------------
def _avg_pool2x(x_nhwc):
    N, H, W, C = x_nhwc.shape
    return x_nhwc.reshape(N, H // 2, 2, W // 2, 2, C).mean(axis=(2, 4))


def basic_block_forward(x_nchw, kweights, downsample=False):
    x = jnp.transpose(x_nchw, (0, 2, 3, 1)).astype(jnp.float32)   # -> NHWC
    y = basic_block_pallas(x, kweights)
    if downsample:
        # avg_pool2d commutes with the (affine) 1x1 shortcut and the residual
        # add, so pooling the fused output equals
        # avg_pool(conv2(relu(conv1(x)))) + c_sc(avg_pool(x)).
        y = _avg_pool2x(y)
    return jnp.transpose(y, (0, 3, 1, 2))                         # -> NCHW


def basic_block_ref(x_nchw, params, downsample=False):
    """Pure-JAX f32 reference mirroring the PyTorch forward exactly."""
    x = jnp.transpose(x_nchw, (0, 2, 3, 1)).astype(jnp.float32)

    def conv(h, w, b, pad):
        y = jax.lax.conv_general_dilated(
            h, w, (1, 1), ((pad, pad), (pad, pad)),
            dimension_numbers=("NHWC", "HWIO", "NHWC"),
            precision=jax.lax.Precision.HIGHEST)
        return y + b.reshape(1, 1, 1, -1)

    w1, b1 = params["conv1"]
    w2, b2 = params["conv2"]
    wsc, bsc = params["c_sc"]
    h = jnp.maximum(conv(x, w1, b1, 1), 0.0)
    h = conv(h, w2, b2, 1)
    if downsample:
        h = _avg_pool2x(h)
        sc = conv(_avg_pool2x(x), wsc, bsc, 0)
    else:
        sc = conv(x, wsc, bsc, 0)
    return jnp.transpose(h + sc, (0, 3, 1, 2))


if __name__ == "__main__":
    key = jax.random.PRNGKey(0)
    pkey, xkey = jax.random.split(key)

    N, in_ch, out_ch, H, W = 2, 64, 128, 16, 16
    params = init_basic_block_params(pkey, in_ch, out_ch)
    kweights = prepare_kernel_weights(params)

    x = jax.random.normal(xkey, (N, in_ch, H, W), jnp.float32)

    # downsample=False (module default)
    y = jax.block_until_ready(basic_block_forward(x, kweights, downsample=False))
    assert y.shape == (N, out_ch, H, W), y.shape
    assert bool(jnp.all(jnp.isfinite(y)))
    y_ref = basic_block_ref(x, params, downsample=False)
    scale = float(jnp.sqrt(jnp.mean(y_ref ** 2)))
    err = float(jnp.max(jnp.abs(y - y_ref)))
    assert err <= 0.1 * scale + 1e-3, (err, scale)

    # downsample=True
    yd = jax.block_until_ready(basic_block_forward(x, kweights, downsample=True))
    assert yd.shape == (N, out_ch, H // 2, W // 2), yd.shape
    assert bool(jnp.all(jnp.isfinite(yd)))
    yd_ref = basic_block_ref(x, params, downsample=True)
    scaled = float(jnp.sqrt(jnp.mean(yd_ref ** 2)))
    errd = float(jnp.max(jnp.abs(yd - yd_ref)))
    assert errd <= 0.1 * scaled + 1e-3, (errd, scaled)

    print("KERNEL_OK")
</pallas_src>

<mosaic_0001>
module attributes {stable_mosaic.version = 11 : i64} {
  func.func @_basic_block_kernel(%arg0: i32, %arg1: memref<1x16x16x64xf32, #tpu.memory_space<vmem>>, %arg2: memref<576x128xbf16, #tpu.memory_space<vmem>>, %arg3: memref<1x128xf32, #tpu.memory_space<vmem>>, %arg4: memref<1216x128xbf16, #tpu.memory_space<vmem>>, %arg5: memref<1x128xf32, #tpu.memory_space<vmem>>, %arg6: memref<1x16x16x128xf32, #tpu.memory_space<vmem>>) attributes {dimension_semantics = [#tpu.dimension_semantics<parallel>], iteration_bounds = array<i64: 2>, scalar_prefetch = 0 : i64, scratch_operands = 0 : i64, tpu.core_type = #tpu.core_type<tc>, window_params = [{transform_indices = @transform_0, window_bounds = array<i64: 1, 16, 16, 64>}, {pipeline_mode = #tpu.pipeline_mode<synchronous>, transform_indices = @transform_1, window_bounds = array<i64: 576, 128>}, {pipeline_mode = #tpu.pipeline_mode<synchronous>, transform_indices = @transform_2, window_bounds = array<i64: 1, 128>}, {pipeline_mode = #tpu.pipeline_mode<synchronous>, transform_indices = @transform_3, window_bounds = array<i64: 1216, 128>}, {pipeline_mode = #tpu.pipeline_mode<synchronous>, transform_indices = @transform_4, window_bounds = array<i64: 1, 128>}, {transform_indices = @transform_5, window_bounds = array<i64: 1, 16, 16, 128>}]} {
    %c0 = arith.constant 0 : index
    %c0_0 = arith.constant 0 : index
    %c0_1 = arith.constant 0 : index
    %c0_2 = arith.constant 0 : index
    %0 = vector.load %arg1[%c0, %c0_0, %c0_1, %c0_2] : memref<1x16x16x64xf32, #tpu.memory_space<vmem>>, vector<1x16x16x64xf32>
    %1 = vector.shape_cast %0 : vector<1x16x16x64xf32> to vector<16x16x64xf32>
    %2 = arith.truncf %1 : vector<16x16x64xf32> to vector<16x16x64xbf16>
    %cst = arith.constant 0.000000e+00 : bf16
    %3 = vector.broadcast %cst : bf16 to vector<16x1x64xbf16>
    %4 = tpu.concatenate %3, %2, %3 in 1 : vector<16x1x64xbf16>, vector<16x16x64xbf16>, vector<16x1x64xbf16> -> vector<16x18x64xbf16>
    %cst_3 = arith.constant 0.000000e+00 : bf16
    %5 = vector.broadcast %cst_3 : bf16 to vector<1x18x64xbf16>
    %6 = tpu.concatenate %5, %4, %5 in 0 : vector<1x18x64xbf16>, vector<16x18x64xbf16>, vector<1x18x64xbf16> -> vector<18x18x64xbf16>
    %7 = vector.extract_strided_slice %6 {offsets = [0, 0, 0], sizes = [16, 16, 64], strides = [1, 1, 1]} : vector<18x18x64xbf16> to vector<16x16x64xbf16>
    %8 = vector.shape_cast %7 : vector<16x16x64xbf16> to vector<256x64xbf16>
    %9 = vector.extract_strided_slice %6 {offsets = [0, 1, 0], sizes = [16, 16, 64], strides = [1, 1, 1]} : vector<18x18x64xbf16> to vector<16x16x64xbf16>
    %10 = vector.shape_cast %9 : vector<16x16x64xbf16> to vector<256x64xbf16>
    %11 = vector.extract_strided_slice %6 {offsets = [0, 2, 0], sizes = [16, 16, 64], strides = [1, 1, 1]} : vector<18x18x64xbf16> to vector<16x16x64xbf16>
    %12 = vector.shape_cast %11 : vector<16x16x64xbf16> to vector<256x64xbf16>
    %13 = vector.extract_strided_slice %6 {offsets = [1, 0, 0], sizes = [16, 16, 64], strides = [1, 1, 1]} : vector<18x18x64xbf16> to vector<16x16x64xbf16>
    %14 = vector.shape_cast %13 : vector<16x16x64xbf16> to vector<256x64xbf16>
    %15 = vector.extract_strided_slice %6 {offsets = [1, 1, 0], sizes = [16, 16, 64], strides = [1, 1, 1]} : vector<18x18x64xbf16> to vector<16x16x64xbf16>
    %16 = vector.shape_cast %15 : vector<16x16x64xbf16> to vector<256x64xbf16>
    %17 = vector.extract_strided_slice %6 {offsets = [1, 2, 0], sizes = [16, 16, 64], strides = [1, 1, 1]} : vector<18x18x64xbf16> to vector<16x16x64xbf16>
    %18 = vector.shape_cast %17 : vector<16x16x64xbf16> to vector<256x64xbf16>
    %19 = vector.extract_strided_slice %6 {offsets = [2, 0, 0], sizes = [16, 16, 64], strides = [1, 1, 1]} : vector<18x18x64xbf16> to vector<16x16x64xbf16>
    %20 = vector.shape_cast %19 : vector<16x16x64xbf16> to vector<256x64xbf16>
    %21 = vector.extract_strided_slice %6 {offsets = [2, 1, 0], sizes = [16, 16, 64], strides = [1, 1, 1]} : vector<18x18x64xbf16> to vector<16x16x64xbf16>
    %22 = vector.shape_cast %21 : vector<16x16x64xbf16> to vector<256x64xbf16>
    %23 = vector.extract_strided_slice %6 {offsets = [2, 2, 0], sizes = [16, 16, 64], strides = [1, 1, 1]} : vector<18x18x64xbf16> to vector<16x16x64xbf16>
    %24 = vector.shape_cast %23 : vector<16x16x64xbf16> to vector<256x64xbf16>
    %25 = tpu.concatenate %8, %10, %12, %14, %16, %18, %20, %22, %24 in 1 : vector<256x64xbf16>, vector<256x64xbf16>, vector<256x64xbf16>, vector<256x64xbf16>, vector<256x64xbf16>, vector<256x64xbf16>, vector<256x64xbf16>, vector<256x64xbf16>, vector<256x64xbf16> -> vector<256x576xbf16>
    %c0_4 = arith.constant 0 : index
    %c0_5 = arith.constant 0 : index
    %26 = vector.load %arg2[%c0_4, %c0_5] : memref<576x128xbf16, #tpu.memory_space<vmem>>, vector<576x128xbf16>
    %cst_6 = arith.constant dense<0.000000e+00> : vector<256x128xf32>
    %27 = tpu.matmul %25, %26, %cst_6 {dimension_numbers = #tpu.dot_dimension_numbers<[1], [0], [0], [1], [0, 0, 1, 1], [], []>} : vector<256x576xbf16>, vector<576x128xbf16>, vector<256x128xf32> -> vector<256x128xf32>
    %c0_7 = arith.constant 0 : index
    %c0_8 = arith.constant 0 : index
    %28 = vector.load %arg3[%c0_7, %c0_8] : memref<1x128xf32, #tpu.memory_space<vmem>>, vector<1x128xf32>
    %29 = vector.broadcast %28 : vector<1x128xf32> to vector<256x128xf32>
    %30 = arith.addf %27, %29 : vector<256x128xf32>
    %cst_9 = arith.constant 0.000000e+00 : f32
    %31 = vector.broadcast %cst_9 : f32 to vector<256x128xf32>
    %32 = arith.maximumf %30, %31 : vector<256x128xf32>
    %33 = vector.shape_cast %32 : vector<256x128xf32> to vector<16x16x128xf32>
    %34 = arith.truncf %33 : vector<16x16x128xf32> to vector<16x16x128xbf16>
    %cst_10 = arith.constant 0.000000e+00 : bf16
    %35 = vector.broadcast %cst_10 : bf16 to vector<16x1x128xbf16>
    %36 = tpu.concatenate %35, %34, %35 in 1 : vector<16x1x128xbf16>, vector<16x16x128xbf16>, vector<16x1x128xbf16> -> vector<16x18x128xbf16>
    %cst_11 = arith.constant 0.000000e+00 : bf16
    %37 = vector.broadcast %cst_11 : bf16 to vector<1x18x128xbf16>
    %38 = tpu.concatenate %37, %36, %37 in 0 : vector<1x18x128xbf16>, vector<16x18x128xbf16>, vector<1x18x128xbf16> -> vector<18x18x128xbf16>
    %39 = vector.extract_strided_slice %38 {offsets = [0, 0, 0], sizes = [16, 16, 128], strides = [1, 1, 1]} : vector<18x18x128xbf16> to vector<16x16x128xbf16>
    %40 = vector.shape_cast %39 : vector<16x16x128xbf16> to vector<256x128xbf16>
    %41 = vector.extract_strided_slice %38 {offsets = [0, 1, 0], sizes = [16, 16, 128], strides = [1, 1, 1]} : vector<18x18x128xbf16> to vector<16x16x128xbf16>
    %42 = vector.shape_cast %41 : vector<16x16x128xbf16> to vector<256x128xbf16>
    %43 = vector.extract_strided_slice %38 {offsets = [0, 2, 0], sizes = [16, 16, 128], strides = [1, 1, 1]} : vector<18x18x128xbf16> to vector<16x16x128xbf16>
    %44 = vector.shape_cast %43 : vector<16x16x128xbf16> to vector<256x128xbf16>
    %45 = vector.extract_strided_slice %38 {offsets = [1, 0, 0], sizes = [16, 16, 128], strides = [1, 1, 1]} : vector<18x18x128xbf16> to vector<16x16x128xbf16>
    %46 = vector.shape_cast %45 : vector<16x16x128xbf16> to vector<256x128xbf16>
    %47 = vector.extract_strided_slice %38 {offsets = [1, 1, 0], sizes = [16, 16, 128], strides = [1, 1, 1]} : vector<18x18x128xbf16> to vector<16x16x128xbf16>
    %48 = vector.shape_cast %47 : vector<16x16x128xbf16> to vector<256x128xbf16>
    %49 = vector.extract_strided_slice %38 {offsets = [1, 2, 0], sizes = [16, 16, 128], strides = [1, 1, 1]} : vector<18x18x128xbf16> to vector<16x16x128xbf16>
    %50 = vector.shape_cast %49 : vector<16x16x128xbf16> to vector<256x128xbf16>
    %51 = vector.extract_strided_slice %38 {offsets = [2, 0, 0], sizes = [16, 16, 128], strides = [1, 1, 1]} : vector<18x18x128xbf16> to vector<16x16x128xbf16>
    %52 = vector.shape_cast %51 : vector<16x16x128xbf16> to vector<256x128xbf16>
    %53 = vector.extract_strided_slice %38 {offsets = [2, 1, 0], sizes = [16, 16, 128], strides = [1, 1, 1]} : vector<18x18x128xbf16> to vector<16x16x128xbf16>
    %54 = vector.shape_cast %53 : vector<16x16x128xbf16> to vector<256x128xbf16>
    %55 = vector.extract_strided_slice %38 {offsets = [2, 2, 0], sizes = [16, 16, 128], strides = [1, 1, 1]} : vector<18x18x128xbf16> to vector<16x16x128xbf16>
    %56 = vector.shape_cast %55 : vector<16x16x128xbf16> to vector<256x128xbf16>
    %57 = tpu.concatenate %40, %42, %44, %46, %48, %50, %52, %54, %56 in 1 : vector<256x128xbf16>, vector<256x128xbf16>, vector<256x128xbf16>, vector<256x128xbf16>, vector<256x128xbf16>, vector<256x128xbf16>, vector<256x128xbf16>, vector<256x128xbf16>, vector<256x128xbf16> -> vector<256x1152xbf16>
    %58 = vector.shape_cast %2 : vector<16x16x64xbf16> to vector<256x64xbf16>
    %59 = tpu.concatenate %57, %58 in 1 : vector<256x1152xbf16>, vector<256x64xbf16> -> vector<256x1216xbf16>
    %c0_12 = arith.constant 0 : index
    %c0_13 = arith.constant 0 : index
    %60 = vector.load %arg4[%c0_12, %c0_13] : memref<1216x128xbf16, #tpu.memory_space<vmem>>, vector<1216x128xbf16>
    %cst_14 = arith.constant dense<0.000000e+00> : vector<256x128xf32>
    %61 = tpu.matmul %59, %60, %cst_14 {dimension_numbers = #tpu.dot_dimension_numbers<[1], [0], [0], [1], [0, 0, 1, 1], [], []>} : vector<256x1216xbf16>, vector<1216x128xbf16>, vector<256x128xf32> -> vector<256x128xf32>
    %c0_15 = arith.constant 0 : index
    %c0_16 = arith.constant 0 : index
    %62 = vector.load %arg5[%c0_15, %c0_16] : memref<1x128xf32, #tpu.memory_space<vmem>>, vector<1x128xf32>
    %63 = vector.broadcast %62 : vector<1x128xf32> to vector<256x128xf32>
    %64 = arith.addf %61, %63 : vector<256x128xf32>
    %65 = vector.shape_cast %64 : vector<256x128xf32> to vector<16x16x128xf32>
    %c0_17 = arith.constant 0 : index
    %c0_18 = arith.constant 0 : index
    %c0_19 = arith.constant 0 : index
    %c0_20 = arith.constant 0 : index
    %66 = vector.load %arg6[%c0_17, %c0_18, %c0_19, %c0_20] : memref<1x16x16x128xf32, #tpu.memory_space<vmem>>, vector<1x16x16x128xf32>
    %67 = vector.shape_cast %66 : vector<1x16x16x128xf32> to vector<16x16x128xf32>
    %68 = vector.shape_cast %65 : vector<16x16x128xf32> to vector<1x16x16x128xf32>
    tpu.vector_store %arg6[%c0_17, %c0_18, %c0_19, %c0_20], %68 {strides = array<i32>} : memref<1x16x16x128xf32, #tpu.memory_space<vmem>>, vector<1x16x16x128xf32>,
    return
  }
  func.func @transform_0(%arg0: i32) -> (i32, i32, i32, i32) {
    %c0_i32 = arith.constant 0 : i32
    %c0_i32_0 = arith.constant 0 : i32
    %c0_i32_1 = arith.constant 0 : i32
    %c0_i32_2 = arith.constant 0 : i32
    return %arg0, %c0_i32, %c0_i32_0, %c0_i32_1 : i32, i32, i32, i32
  }
  func.func @transform_1(%arg0: i32) -> (i32, i32) {
    %c0_i32 = arith.constant 0 : i32
    %c0_i32_0 = arith.constant 0 : i32
    %c0_i32_1 = arith.constant 0 : i32
    return %c0_i32, %c0_i32_0 : i32, i32
  }
  func.func @transform_2(%arg0: i32) -> (i32, i32) {
    %c0_i32 = arith.constant 0 : i32
    %c0_i32_0 = arith.constant 0 : i32
    %c0_i32_1 = arith.constant 0 : i32
    return %c0_i32, %c0_i32_0 : i32, i32
  }
  func.func @transform_3(%arg0: i32) -> (i32, i32) {
    %c0_i32 = arith.constant 0 : i32
    %c0_i32_0 = arith.constant 0 : i32
    %c0_i32_1 = arith.constant 0 : i32
    return %c0_i32, %c0_i32_0 : i32, i32
  }
  func.func @transform_4(%arg0: i32) -> (i32, i32) {
    %c0_i32 = arith.constant 0 : i32
    %c0_i32_0 = arith.constant 0 : i32
    %c0_i32_1 = arith.constant 0 : i32
    return %c0_i32, %c0_i32_0 : i32, i32
  }
  func.func @transform_5(%arg0: i32) -> (i32, i32, i32, i32) {
    %c0_i32 = arith.constant 0 : i32
    %c0_i32_0 = arith.constant 0 : i32
    %c0_i32_1 = arith.constant 0 : i32
    %c0_i32_2 = arith.constant 0 : i32
    return %arg0, %c0_i32, %c0_i32_0, %c0_i32_1 : i32, i32, i32, i32
  }
}

</mosaic_0001>

<llo_original>
// kernel: tpu_custom_call.1
$region0: #{tpu_custom_call.1}
  #allocation0 [shape = 'u32[]', space=smem, size = 0x4, offset = 0x4, fixed_abs, tag = 'smem constant byte address 0x4 - core index']
  #allocation1 [shape = 'u32[144,128]{1,0:T(1,128)}', space=vmem, size = 0x12000, scoped, tag = 'internal scratch']
  %s0 = inlined_call_operand.hbm [shape: f32[2,16,16,64], index: 0, kind: input, shape index: {}]
  %s1 = inlined_call_operand.hbm [shape: bf16[576,128], index: 1, kind: input, shape index: {}]
  %s2 = inlined_call_operand.vmem [shape: f32[1,128], index: 2, kind: input, shape index: {}]
  %s3 = inlined_call_operand.hbm [shape: bf16[1216,128], index: 3, kind: input, shape index: {}]
  %s4 = inlined_call_operand.vmem [shape: f32[1,128], index: 4, kind: input, shape index: {}]
  %s5 = inlined_call_operand.hbm [shape: f32[2,16,16,128], index: 5, kind: output, shape index: {}]
  %s6 = sld [smem:[#allocation0]]
  $region65: #{tpu_custom_call.1} parent=0
    _
  %s8 = ssub.s32 1, %s6
  %s9 = scalar_select 0, %s8, %s6
  $region1: #{tpu_custom_call.1} parent=0
    #allocation2 [shape = 'u8[262144]{0}', space=vmem, size = 0x40000, scoped, tag = 'input window, operand 0']
    #allocation3 [shape = 's32[2]{0}', space=sflag, size = 0x8, scoped, tag = 'scoped memory for tpu_custom_call.1']
    #allocation4 [shape = 's32[2]{0}', space=sflag, size = 0x8, scoped, tag = 'scoped memory for tpu_custom_call.1']
    #allocation5 [shape = 'u8[147456]{0}', space=vmem, size = 0x24000, scoped, tag = 'input window, operand 1, single buffered']
    #allocation6 [shape = 's32[1]{0}', space=sflag, size = 0x4, scoped, tag = 'scoped memory for tpu_custom_call.1']
    #allocation7 [shape = 'u8[311296]{0}', space=vmem, size = 0x4c000, scoped, tag = 'input window, operand 3, single buffered']
    #allocation8 [shape = 'u8[262144]{0}', space=vmem, size = 0x40000, scoped, tag = 'output window, operand 0']
    %10 = vsyncpa [#allocation3], 0
    %s11 = scalar_lea.sflag [#allocation3], 1
    %12 = vsyncpa %s11, 0
    %13 = vsyncpa [#allocation6], 0
    %14 = vsyncpa [#allocation4], 0
    %s15 = scalar_lea.sflag [#allocation4], 1
    %16 = vsyncpa %s15, 0
    loop: start=0, step=1, limit=4
    $region2: #{tpu_custom_call.1} parent=1 // loop_pre_header
      _
    $region3: #{tpu_custom_call.1} parent=1 // loop_header
      %s18 = sphi 0, %s22
      %p19 = scmp.ge.s32.totalorder %s18, 4
      %s28 = sphi 0, %s30
      %s31 = sphi 0, %s28
      %s32 = sphi 0, %s31
      %s48 = sphi 0, %s32
      %s52 = sphi 0, %s52
      %s54 = sphi 0, %s52
      %s55 = sphi 0, %s54
      %s69 = sphi 0, %s55
      %s73 = sphi 0, %s73
      %s75 = sphi 0, %s73
      %s76 = sphi 0, %s75
      %s90 = sphi 0, %s76
      %s94 = sphi 0, %s94
      %s96 = sphi 0, %s94
      %s97 = sphi 0, %s96
      %s111 = sphi 0, %s97
      %s115 = sphi 0, %s115
      %s117 = sphi 0, %s115
      %s118 = sphi 0, %s117
      %s132 = sphi 0, %s118
      %s138 = sphi 0, %s140
      %s141 = sphi 0, %s138
      %s142 = sphi 0, %s141
      %s158 = sphi 0, %s142
    $region4: #{tpu_custom_call.1} parent=1 // loop_header_branch
      %21 = sbr.rel (%p19) target = $region8
    $region5: #{tpu_custom_call.1} parent=1 // loop_body
      %s23 = ssub.s32 %s18, 1
      %s24 = ssub.s32 %s18, 2
      %s25 = sadd.s32 %s18, 1
      %s26 = ssub.s32 %s18, %s25
      %p27 = scmp.eq.s32.totalorder %s26, 0
      %s29 = sadd.s32 %s28, 1
      %s30 = scalar_select %p27, %s28, %s29
      %p33 = pneg %p27
      %p34 = scmp.eq.s32.totalorder %s18, 1
      %p35 = por %p33, %p34
      %p36 = scmp.ne.s32.totalorder %s28, %s31
      %p37 = scmp.eq.s32.totalorder %s18, 0
      %p38 = por %p36, %p37
      %p39 = scmp.ne.s32.totalorder %s28, %s31
      %p40 = scmp.eq.s32.totalorder %s23, 1
      %p41 = por %p39, %p40
      %p42 = scmp.ne.s32.totalorder %s31, %s32
      %p43 = scmp.eq.s32.totalorder %s23, 0
      %p44 = por %p42, %p43
      %p45 = scmp.ne.s32.totalorder %s31, %s32
      %p46 = scmp.eq.s32.totalorder %s24, 1
      %p47 = por %p45, %p46
      %p49 = scmp.ne.s32.totalorder %s32, %s48
      %p50 = scmp.eq.s32.totalorder %s24, 0
      %p51 = por %p49, %p50
      %s53 = sadd.s32 %s52, 1
      %p56 = scmp.eq.s32.totalorder %s18, 1
      %p57 = scmp.ne.s32.totalorder %s52, %s54
      %p58 = scmp.eq.s32.totalorder %s18, 0
      %p59 = por %p57, %p58
      %p60 = scmp.ne.s32.totalorder %s52, %s54
      %p61 = scmp.eq.s32.totalorder %s23, 1
      %p62 = por %p60, %p61
      %p63 = scmp.ne.s32.totalorder %s54, %s55
      %p64 = scmp.eq.s32.totalorder %s23, 0
      %p65 = por %p63, %p64
      %p66 = scmp.ne.s32.totalorder %s54, %s55
      %p67 = scmp.eq.s32.totalorder %s24, 1
      %p68 = por %p66, %p67
      %p70 = scmp.ne.s32.totalorder %s55, %s69
      %p71 = scmp.eq.s32.totalorder %s24, 0
      %p72 = por %p70, %p71
      %s74 = sadd.s32 %s73, 1
      %p77 = scmp.eq.s32.totalorder %s18, 1
      %p78 = scmp.ne.s32.totalorder %s73, %s75
      %p79 = scmp.eq.s32.totalorder %s18, 0
      %p80 = por %p78, %p79
      %p81 = scmp.ne.s32.totalorder %s73, %s75
      %p82 = scmp.eq.s32.totalorder %s23, 1
      %p83 = por %p81, %p82
      %p84 = scmp.ne.s32.totalorder %s75, %s76
      %p85 = scmp.eq.s32.totalorder %s23, 0
      %p86 = por %p84, %p85
      %p87 = scmp.ne.s32.totalorder %s75, %s76
      %p88 = scmp.eq.s32.totalorder %s24, 1
      %p89 = por %p87, %p88
      %p91 = scmp.ne.s32.totalorder %s76, %s90
      %p92 = scmp.eq.s32.totalorder %s24, 0
      %p93 = por %p91, %p92
      %s95 = sadd.s32 %s94, 1
      %p98 = scmp.eq.s32.totalorder %s18, 1
      %p99 = scmp.ne.s32.totalorder %s94, %s96
      %p100 = scmp.eq.s32.totalorder %s18, 0
      %p101 = por %p99, %p100
      %p102 = scmp.ne.s32.totalorder %s94, %s96
      %p103 = scmp.eq.s32.totalorder %s23, 1
      %p104 = por %p102, %p103
      %p105 = scmp.ne.s32.totalorder %s96, %s97
      %p106 = scmp.eq.s32.totalorder %s23, 0
      %p107 = por %p105, %p106
      %p108 = scmp.ne.s32.totalorder %s96, %s97
      %p109 = scmp.eq.s32.totalorder %s24, 1
      %p110 = por %p108, %p109
      %p112 = scmp.ne.s32.totalorder %s97, %s111
      %p113 = scmp.eq.s32.totalorder %s24, 0
      %p114 = por %p112, %p113
      %s116 = sadd.s32 %s115, 1
      %p119 = scmp.eq.s32.totalorder %s18, 1
      %p120 = scmp.ne.s32.totalorder %s115, %s117
      %p121 = scmp.eq.s32.totalorder %s18, 0
      %p122 = por %p120, %p121
      %p123 = scmp.ne.s32.totalorder %s115, %s117
      %p124 = scmp.eq.s32.totalorder %s23, 1
      %p125 = por %p123, %p124
      %p126 = scmp.ne.s32.totalorder %s117, %s118
      %p127 = scmp.eq.s32.totalorder %s23, 0
      %p128 = por %p126, %p127
      %p129 = scmp.ne.s32.totalorder %s117, %s118
      %p130 = scmp.eq.s32.totalorder %s24, 1
      %p131 = por %p129, %p130
      %p133 = scmp.ne.s32.totalorder %s118, %s132
      %p134 = scmp.eq.s32.totalorder %s24, 0
      %p135 = por %p133, %p134
      %s136 = ssub.s32 %s18, %s25
      %p137 = scmp.eq.s32.totalorder %s136, 0
      %s139 = sadd.s32 %s138, 1
      %s140 = scalar_select %p137, %s138, %s139
      %p143 = pneg %p137
      %p144 = scmp.eq.s32.totalorder %s18, 1
      %p145 = por %p143, %p144
      %p146 = scmp.ne.s32.totalorder %s138, %s141
      %p147 = scmp.eq.s32.totalorder %s18, 0
      %p148 = por %p146, %p147
      %p149 = scmp.ne.s32.totalorder %s138, %s141
      %p150 = scmp.eq.s32.totalorder %s23, 1
      %p151 = por %p149, %p150
      %p152 = scmp.ne.s32.totalorder %s141, %s142
      %p153 = scmp.eq.s32.totalorder %s23, 0
      %p154 = por %p152, %p153
      %p155 = scmp.ne.s32.totalorder %s141, %s142
      %p156 = scmp.eq.s32.totalorder %s24, 1
      %p157 = por %p155, %p156
      %p159 = scmp.ne.s32.totalorder %s142, %s158
      %p160 = scmp.eq.s32.totalorder %s24, 0
      %p161 = por %p159, %p160
      %p162 = scmp.le.s32.totalorder 1, %s18
      %p163 = scmp.lt.s32.totalorder %s18, 3
      %p164 = pnand %p162, %p163
      %p165 = pneg %p164
      // Predicated region
      $region9: #{tpu_custom_call.1} parent=5 // pred_check
        _
      $region10: #{tpu_custom_call.1} parent=5 // pred_check_branch
        %167 = sbr.rel (%p164) target = $region12
      $region11: #{tpu_custom_call.1} parent=5 // pred_region
        %s168 = ssub.s32 %s18, 1
        // Predicated region
        $region13: #{tpu_custom_call.1} parent=11 // pred_check
          %p169 = pneg %p65
        $region14: #{tpu_custom_call.1} parent=11 // pred_check_branch
          %171 = sbr.rel (%p169) target = $region16
        $region15: #{tpu_custom_call.1} parent=11 // pred_region
          %s173 = ssub.s32 4608, 4608
          %174 = vsyncadd [#allocation6], %s173
          %s175 = sshll.u32 [#allocation5], 4
          %s176 = int_to_ptr.vmem [resolvable:$true] %s175
          %181 = dma.hbm_to_vmem [thread:$0]  %s1, 4608, %s176, [#allocation6], 64, 64, 4
        $region16: #{tpu_custom_call.1} parent=11 // pred_fallthru
          _
        // Predicated region
        $region17: #{tpu_custom_call.1} parent=11 // pred_check
          %p182 = pneg %p86
        $region18: #{tpu_custom_call.1} parent=11 // pred_check_branch
          %184 = sbr.rel (%p182) target = $region20
        $region19: #{tpu_custom_call.1} parent=11 // pred_region
          _
        $region20: #{tpu_custom_call.1} parent=11 // pred_fallthru
          _
        // Predicated region
        $region21: #{tpu_custom_call.1} parent=11 // pred_check
          %p185 = pneg %p107
        $region22: #{tpu_custom_call.1} parent=11 // pred_check_branch
          %187 = sbr.rel (%p185) target = $region24
        $region23: #{tpu_custom_call.1} parent=11 // pred_region
          %s189 = ssub.s32 9728, 9728
          %190 = vsyncadd [#allocation6], %s189
          %s191 = sshll.u32 [#allocation7], 4
          %s192 = int_to_ptr.vmem [resolvable:$true] %s191
          %197 = dma.hbm_to_vmem [thread:$0]  %s3, 9728, %s192, [#allocation6], 64, 64, 4
        $region24: #{tpu_custom_call.1} parent=11 // pred_fallthru
          _
        // Predicated region
        $region25: #{tpu_custom_call.1} parent=11 // pred_check
          %p198 = pneg %p128
        $region26: #{tpu_custom_call.1} parent=11 // pred_check_branch
          %200 = sbr.rel (%p198) target = $region28
        $region27: #{tpu_custom_call.1} parent=11 // pred_region
          _
        $region28: #{tpu_custom_call.1} parent=11 // pred_fallthru
          _
      $region12: #{tpu_custom_call.1} parent=5 // pred_fallthru
        _
      %p201 = scmp.lt.s32.totalorder %s18, 2
      // Predicated region
      $region29: #{tpu_custom_call.1} parent=5 // pred_check
        %p202 = pneg %p201
      $region30: #{tpu_custom_call.1} parent=5 // pred_check_branch
        %204 = sbr.rel (%p202) target = $region32
      $region31: #{tpu_custom_call.1} parent=5 // pred_region
        // Predicated region
        $region33: #{tpu_custom_call.1} parent=31 // pred_check
          %p205 = pneg %p38
        $region34: #{tpu_custom_call.1} parent=31 // pred_check_branch
          %207 = sbr.rel (%p205) target = $region36
        $region35: #{tpu_custom_call.1} parent=31 // pred_region
          %s208 = sand.u32 %s28, 1
          %s209 = scalar_lea.sflag [#allocation3], %s208
          %s210 = sand.u32 %s28, 1
          %s211 = smul.addr %s210, 256
          %s212 = scalar_lea.vmem [#allocation2], %s211
          %s214 = ssub.s32 4096, 4096
          %215 = vsyncadd %s209, %s214
          %s216 = smul.addr %s18, 32
          %s217 = smul.addr %s216, 128
          %s218 = scalar_lea.hbm %s0, %s217
          %s219 = sshll.u32 %s212, 4
          %s220 = int_to_ptr.vmem [resolvable:$true] %s219
          %225 = dma.hbm_to_vmem [thread:$0]  %s218, 4096, %s220, %s209, 128, 128, 8
        $region36: #{tpu_custom_call.1} parent=31 // pred_fallthru
          _
      $region32: #{tpu_custom_call.1} parent=5 // pred_fallthru
        _
      %p226 = scmp.le.s32.totalorder 1, %s18
      %p227 = scmp.lt.s32.totalorder %s18, 3
      %p228 = pnand %p226, %p227
      %p229 = pneg %p228
      // Predicated region
      $region37: #{tpu_custom_call.1} parent=5 // pred_check
        _
      $region38: #{tpu_custom_call.1} parent=5 // pred_check_branch
        %231 = sbr.rel (%p228) target = $region40
      $region39: #{tpu_custom_call.1} parent=5 // pred_region
        %s232 = ssub.s32 %s18, 1
        %s233 = sand.u32 %s31, 1
        %s234 = scalar_lea.sflag [#allocation3], %s233
        %s235 = sand.u32 %s31, 1
        %s236 = smul.addr %s235, 256
        %s237 = scalar_lea.vmem [#allocation2], %s236
        // Predicated region
        $region41: #{tpu_custom_call.1} parent=39 // pred_check
          %p238 = pneg %p44
        $region42: #{tpu_custom_call.1} parent=39 // pred_check_branch
          %240 = sbr.rel (%p238) target = $region44
        $region43: #{tpu_custom_call.1} parent=39 // pred_region
          %241 = dma.done %s234, 4096
        $region44: #{tpu_custom_call.1} parent=39 // pred_fallthru
          _
        // Predicated region
        $region45: #{tpu_custom_call.1} parent=39 // pred_check
          %p242 = pneg %p65
        $region46: #{tpu_custom_call.1} parent=39 // pred_check_branch
          %244 = sbr.rel (%p242) target = $region48
        $region47: #{tpu_custom_call.1} parent=39 // pred_region
          %245 = dma.done [#allocation6], 4608
        $region48: #{tpu_custom_call.1} parent=39 // pred_fallthru
          _
        // Predicated region
        $region49: #{tpu_custom_call.1} parent=39 // pred_check
          %p246 = pneg %p107
        $region50: #{tpu_custom_call.1} parent=39 // pred_check_branch
          %248 = sbr.rel (%p246) target = $region52
        $region51: #{tpu_custom_call.1} parent=39 // pred_region
          %249 = dma.done [#allocation6], 9728
        $region52: #{tpu_custom_call.1} parent=39 // pred_fallthru
          _
        %s250 = sand.u32 %s31, 1
        %s251 = scalar_lea.sflag [#allocation3], %s250
        %s252 = sand.u32 %s31, 1
        %s253 = smul.addr %s252, 256
        %s254 = scalar_lea.vmem [#allocation2], %s253
        %p255 = pneg %p44
        %p256 = pneg %p41
        %p257 = pneg %p65
        %p258 = pneg %p62
        %p259 = pneg %p86
        %p260 = pneg %p83
        %p261 = pneg %p107
        %p262 = pneg %p104
        %p263 = pneg %p128
        %p264 = pneg %p125
        %p265 = pneg %p154
        %p266 = pneg %p151
        %s267 = sand.u32 %s141, 1
        %s268 = scalar_lea.sflag [#allocation4], %s267
        %s269 = sand.u32 %s141, 1
        %s270 = smul.addr %s269, 256
        %s271 = scalar_lea.vmem [#allocation8], %s270
        %v273 = vld [vmem:[%s237] sm:$0xff]
        %v274 = vld [vmem:[%s237 + $0x8] sm:$0xff]
        %v275 = vld [vmem:[%s237 + $0x10] sm:$0xff]
        %v276 = vld [vmem:[%s237 + $0x18] sm:$0xff]
        %v277 = vld [vmem:[%s237 + $0x20] sm:$0xff]
        %v278 = vld [vmem:[%s237 + $0x28] sm:$0xff]
        %v279 = vld [vmem:[%s237 + $0x30] sm:$0xff]
        %v280 = vld [vmem:[%s237 + $0x38] sm:$0xff]
        %v281 = vld [vmem:[%s237 + $0x40] sm:$0xff]
        %v282 = vld [vmem:[%s237 + $0x48] sm:$0xff]
        %v283 = vld [vmem:[%s237 + $0x50] sm:$0xff]
        %v284 = vld [vmem:[%s237 + $0x58] sm:$0xff]
        %v285 = vld [vmem:[%s237 + $0x60] sm:$0xff]
        %v286 = vld [vmem:[%s237 + $0x68] sm:$0xff]
        %v287 = vld [vmem:[%s237 + $0x70] sm:$0xff]
        %v288 = vld [vmem:[%s237 + $0x78] sm:$0xff]
        %v289 = vld [vmem:[%s237 + $0x80] sm:$0xff]
        %v290 = vld [vmem:[%s237 + $0x88] sm:$0xff]
        %v291 = vld [vmem:[%s237 + $0x90] sm:$0xff]
        %v292 = vld [vmem:[%s237 + $0x98] sm:$0xff]
        %v293 = vld [vmem:[%s237 + $0xa0] sm:$0xff]
        %v294 = vld [vmem:[%s237 + $0xa8] sm:$0xff]
        %v295 = vld [vmem:[%s237 + $0xb0] sm:$0xff]
        %v296 = vld [vmem:[%s237 + $0xb8] sm:$0xff]
        %v297 = vld [vmem:[%s237 + $0xc0] sm:$0xff]
        %v298 = vld [vmem:[%s237 + $0xc8] sm:$0xff]
        %v299 = vld [vmem:[%s237 + $0xd0] sm:$0xff]
        %v300 = vld [vmem:[%s237 + $0xd8] sm:$0xff]
        %v301 = vld [vmem:[%s237 + $0xe0] sm:$0xff]
        %v302 = vld [vmem:[%s237 + $0xe8] sm:$0xff]
        %v303 = vld [vmem:[%s237 + $0xf0] sm:$0xff]
        %v304 = vld [vmem:[%s237 + $0xf8] sm:$0xff]
        %v305 = vpack.c.bf16 %v274, %v273
        %v306 = vpack.c.bf16 %v276, %v275
        %v307 = vpack.c.bf16 %v278, %v277
        %v308 = vpack.c.bf16 %v280, %v279
        %v309 = vpack.c.bf16 %v282, %v281
        %v310 = vpack.c.bf16 %v284, %v283
        %v311 = vpack.c.bf16 %v286, %v285
        %v312 = vpack.c.bf16 %v288, %v287
        %v313 = vpack.c.bf16 %v290, %v289
        %v314 = vpack.c.bf16 %v292, %v291
        %v315 = vpack.c.bf16 %v294, %v293
        %v316 = vpack.c.bf16 %v296, %v295
        %v317 = vpack.c.bf16 %v298, %v297
        %v318 = vpack.c.bf16 %v300, %v299
        %v319 = vpack.c.bf16 %v302, %v301
        %v320 = vpack.c.bf16 %v304, %v303
        %v322 = vshrl.u32 %v305, 16
        %v324 = vrot.slane %v322, 7
        %v325 = vshll.u32 %v305, 16
        %v327 = vor.u32 %v324, %v325
        %v329 = vshrl.u32 %v306, 16
        %v331 = vrot.slane %v329, 7
        %v332 = vshll.u32 %v306, 16
        %v334 = vor.u32 %v331, %v332
        %v336 = vshrl.u32 %v307, 16
        %v338 = vrot.slane %v336, 7
        %v339 = vshll.u32 %v307, 16
        %v341 = vor.u32 %v338, %v339
        %v343 = vshrl.u32 %v308, 16
        %v345 = vrot.slane %v343, 7
        %v346 = vshll.u32 %v308, 16
        %v348 = vor.u32 %v345, %v346
        %v350 = vshrl.u32 %v309, 16
        %v352 = vrot.slane %v350, 7
        %v353 = vshll.u32 %v309, 16
        %v355 = vor.u32 %v352, %v353
        %v357 = vshrl.u32 %v310, 16
        %v359 = vrot.slane %v357, 7
        %v360 = vshll.u32 %v310, 16
        %v362 = vor.u32 %v359, %v360
        %v364 = vshrl.u32 %v311, 16
        %v366 = vrot.slane %v364, 7
        %v367 = vshll.u32 %v311, 16
        %v369 = vor.u32 %v366, %v367
        %v371 = vshrl.u32 %v312, 16
        %v373 = vrot.slane %v371, 7
        %v374 = vshll.u32 %v312, 16
        %v376 = vor.u32 %v373, %v374
        %v378 = vshrl.u32 %v313, 16
        %v380 = vrot.slane %v378, 7
        %v381 = vshll.u32 %v313, 16
        %v383 = vor.u32 %v380, %v381
        %v385 = vshrl.u32 %v314, 16
        %v387 = vrot.slane %v385, 7
        %v388 = vshll.u32 %v314, 16
        %v390 = vor.u32 %v387, %v388
        %v392 = vshrl.u32 %v315, 16
        %v394 = vrot.slane %v392, 7
        %v395 = vshll.u32 %v315, 16
        %v397 = vor.u32 %v394, %v395
        %v399 = vshrl.u32 %v316, 16
        %v401 = vrot.slane %v399, 7
        %v402 = vshll.u32 %v316, 16
        %v404 = vor.u32 %v401, %v402
        %v406 = vshrl.u32 %v317, 16
        %v408 = vrot.slane %v406, 7
        %v409 = vshll.u32 %v317, 16
        %v411 = vor.u32 %v408, %v409
        %v413 = vshrl.u32 %v318, 16
        %v415 = vrot.slane %v413, 7
        %v416 = vshll.u32 %v318, 16
        %v418 = vor.u32 %v415, %v416
        %v420 = vshrl.u32 %v319, 16
        %v422 = vrot.slane %v420, 7
        %v423 = vshll.u32 %v319, 16
        %v425 = vor.u32 %v422, %v423
        %v427 = vshrl.u32 %v320, 16
        %v429 = vrot.slane %v427, 7
        %v430 = vshll.u32 %v320, 16
        %v432 = vor.u32 %v429, %v430
        %vm465 = vcmask 1040384
        %vm466 = vsmask.f32 256
        %vm467 = vmand %vm465, %vm466
        %v468 = vsel %vm467, 0, %v327
        %v469 = vsel %vm467, 0, %v334
        %v470 = vsel %vm467, 0, %v341
        %v471 = vsel %vm467, 0, %v348
        %v472 = vsel %vm467, 0, %v355
        %v473 = vsel %vm467, 0, %v362
        %v474 = vsel %vm467, 0, %v369
        %v475 = vsel %vm467, 0, %v376
        %v476 = vsel %vm467, 0, %v383
        %v477 = vsel %vm467, 0, %v390
        %v478 = vsel %vm467, 0, %v397
        %v479 = vsel %vm467, 0, %v404
        %v480 = vsel %vm467, 0, %v411
        %v481 = vsel %vm467, 0, %v418
        %v482 = vsel %vm467, 0, %v425
        %v483 = vsel %vm467, 0, %v432
        %v484 = vsel %vm467, %v324, 0
        %v485 = vsel %vm467, %v331, 0
        %v486 = vsel %vm467, %v338, 0
        %v487 = vsel %vm467, %v345, 0
        %v488 = vsel %vm467, %v352, 0
        %v489 = vsel %vm467, %v359, 0
        %v490 = vsel %vm467, %v366, 0
        %v491 = vsel %vm467, %v373, 0
        %v492 = vsel %vm467, %v380, 0
        %v493 = vsel %vm467, %v387, 0
        %v494 = vsel %vm467, %v394, 0
        %v495 = vsel %vm467, %v401, 0
        %v496 = vsel %vm467, %v408, 0
        %v497 = vsel %vm467, %v415, 0
        %v498 = vsel %vm467, %v422, 0
        %v499 = vsel %vm467, %v429, 0
        %vm500 = vsmask.f32 7424
        %v502 = vshrl.u32 0, 16
        %v504 = vshll.u32 0, 16
        %v506 = vrot.slane %v504, 1
        %v507 = vor.u32 %v502, %v506
        %v508 = vsel %vm500, %v507, %v506
        %v510 = vshrl.u32 %v468, 16
        %v512 = vshll.u32 %v468, 16
        %v514 = vrot.slane %v512, 1
        %v515 = vor.u32 %v510, %v514
        %v517 = vshll.u32 %v484, 16
        %v519 = vrot.slane %v517, 1
        %v520 = vsel %vm500, %v515, %v519
        %v522 = vshrl.u32 %v469, 16
        %v524 = vshll.u32 %v469, 16
        %v526 = vrot.slane %v524, 1
        %v527 = vor.u32 %v522, %v526
        %v529 = vshll.u32 %v485, 16
        %v531 = vrot.slane %v529, 1
        %v532 = vsel %vm500, %v527, %v531
        %v534 = vshrl.u32 %v470, 16
        %v536 = vshll.u32 %v470, 16
        %v538 = vrot.slane %v536, 1
        %v539 = vor.u32 %v534, %v538
        %v541 = vshll.u32 %v486, 16
        %v543 = vrot.slane %v541, 1
        %v544 = vsel %vm500, %v539, %v543
        %v546 = vshrl.u32 %v471, 16
        %v548 = vshll.u32 %v471, 16
        %v550 = vrot.slane %v548, 1
        %v551 = vor.u32 %v546, %v550
        %v553 = vshll.u32 %v487, 16
        %v555 = vrot.slane %v553, 1
        %v556 = vsel %vm500, %v551, %v555
        %v558 = vshrl.u32 %v472, 16
        %v560 = vshll.u32 %v472, 16
        %v562 = vrot.slane %v560, 1
        %v563 = vor.u32 %v558, %v562
        %v565 = vshll.u32 %v488, 16
        %v567 = vrot.slane %v565, 1
        %v568 = vsel %vm500, %v563, %v567
        %v570 = vshrl.u32 %v473, 16
        %v572 = vshll.u32 %v473, 16
        %v574 = vrot.slane %v572, 1
        %v575 = vor.u32 %v570, %v574
        %v577 = vshll.u32 %v489, 16
        %v579 = vrot.slane %v577, 1
        %v580 = vsel %vm500, %v575, %v579
        %v582 = vshrl.u32 %v474, 16
        %v584 = vshll.u32 %v474, 16
        %v586 = vrot.slane %v584, 1
        %v587 = vor.u32 %v582, %v586
        %v589 = vshll.u32 %v490, 16
        %v591 = vrot.slane %v589, 1
        %v592 = vsel %vm500, %v587, %v591
        %v594 = vshrl.u32 %v475, 16
        %v596 = vshll.u32 %v475, 16
        %v598 = vrot.slane %v596, 1
        %v599 = vor.u32 %v594, %v598
        %v601 = vshll.u32 %v491, 16
        %v603 = vrot.slane %v601, 1
        %v604 = vsel %vm500, %v599, %v603
        %v606 = vshrl.u32 %v476, 16
        %v608 = vshll.u32 %v476, 16
        %v610 = vrot.slane %v608, 1
        %v611 = vor.u32 %v606, %v610
        %v613 = vshll.u32 %v492, 16
        %v615 = vrot.slane %v613, 1
        %v616 = vsel %vm500, %v611, %v615
        %v618 = vshrl.u32 %v477, 16
        %v620 = vshll.u32 %v477, 16
        %v622 = vrot.slane %v620, 1
        %v623 = vor.u32 %v618, %v622
        %v625 = vshll.u32 %v493, 16
        %v627 = vrot.slane %v625, 1
        %v628 = vsel %vm500, %v623, %v627
        %v630 = vshrl.u32 %v478, 16
        %v632 = vshll.u32 %v478, 16
        %v634 = vrot.slane %v632, 1
        %v635 = vor.u32 %v630, %v634
        %v637 = vshll.u32 %v494, 16
        %v639 = vrot.slane %v637, 1
        %v640 = vsel %vm500, %v635, %v639
        %v642 = vshrl.u32 %v479, 16
        %v644 = vshll.u32 %v479, 16
        %v646 = vrot.slane %v644, 1
        %v647 = vor.u32 %v642, %v646
        %v649 = vshll.u32 %v495, 16
        %v651 = vrot.slane %v649, 1
        %v652 = vsel %vm500, %v647, %v651
        %v654 = vshrl.u32 %v480, 16
        %v656 = vshll.u32 %v480, 16
        %v658 = vrot.slane %v656, 1
        %v659 = vor.u32 %v654, %v658
        %v661 = vshll.u32 %v496, 16
        %v663 = vrot.slane %v661, 1
        %v664 = vsel %vm500, %v659, %v663
        %v666 = vshrl.u32 %v481, 16
        %v668 = vshll.u32 %v481, 16
        %v670 = vrot.slane %v668, 1
        %v671 = vor.u32 %v666, %v670
        %v673 = vshll.u32 %v497, 16
        %v675 = vrot.slane %v673, 1
        %v676 = vsel %vm500, %v671, %v675
        %v678 = vshrl.u32 %v482, 16
        %v680 = vshll.u32 %v482, 16
        %v682 = vrot.slane %v680, 1
        %v683 = vor.u32 %v678, %v682
        %v685 = vshll.u32 %v498, 16
        %v687 = vrot.slane %v685, 1
        %v688 = vsel %vm500, %v683, %v687
        %vm720 = vcmask 1046528
        %v721 = vrot.slane 0, 1
        %v722 = vsel %vm720, %v721, %v721
        %v723 = vrot.slane %v468, 1
        %v724 = vrot.slane %v484, 1
        %v725 = vsel %vm720, %v723, %v724
        %v726 = vrot.slane %v469, 1
        %v727 = vrot.slane %v485, 1
        %v728 = vsel %vm720, %v726, %v727
        %v729 = vrot.slane %v470, 1
        %v730 = vrot.slane %v486, 1
        %v731 = vsel %vm720, %v729, %v730
        %v732 = vrot.slane %v471, 1
        %v733 = vrot.slane %v487, 1
        %v734 = vsel %vm720, %v732, %v733
        %v735 = vrot.slane %v472, 1
        %v736 = vrot.slane %v488, 1
        %v737 = vsel %vm720, %v735, %v736
        %v738 = vrot.slane %v473, 1
        %v739 = vrot.slane %v489, 1
        %v740 = vsel %vm720, %v738, %v739
        %v741 = vrot.slane %v474, 1
        %v742 = vrot.slane %v490, 1
        %v743 = vsel %vm720, %v741, %v742
        %v744 = vrot.slane %v475, 1
        %v745 = vrot.slane %v491, 1
        %v746 = vsel %vm720, %v744, %v745
        %v747 = vrot.slane %v476, 1
        %v748 = vrot.slane %v492, 1
        %v749 = vsel %vm720, %v747, %v748
        %v750 = vrot.slane %v477, 1
        %v751 = vrot.slane %v493, 1
        %v752 = vsel %vm720, %v750, %v751
        %v753 = vrot.slane %v478, 1
        %v754 = vrot.slane %v494, 1
        %v755 = vsel %vm720, %v753, %v754
        %v756 = vrot.slane %v479, 1
        %v757 = vrot.slane %v495, 1
        %v758 = vsel %vm720, %v756, %v757
        %v759 = vrot.slane %v480, 1
        %v760 = vrot.slane %v496, 1
        %v761 = vsel %vm720, %v759, %v760
        %v762 = vrot.slane %v481, 1
        %v763 = vrot.slane %v497, 1
        %v764 = vsel %vm720, %v762, %v763
        %v765 = vrot.slane %v482, 1
        %v766 = vrot.slane %v498, 1
        %v767 = vsel %vm720, %v765, %v766
        %v769 = vshrl.u32 %v483, 16
        %v771 = vshll.u32 %v483, 16
        %v773 = vrot.slane %v771, 1
        %v774 = vor.u32 %v769, %v773
        %v776 = vshll.u32 %v499, 16
        %v778 = vrot.slane %v776, 1
        %v779 = vsel %vm500, %v774, %v778
        %v782 = vrot.slane %v483, 1
        %v783 = vrot.slane %v499, 1
        %v784 = vsel %vm720, %v782, %v783
        %785 = vrot.lane.b32.xlu0 %v508, 64
        %v786 = vpop.permute.xlu0 %785
        %787 = vrot.lane.b32.xlu0 %v520, 64
        %v788 = vpop.permute.xlu0 %787
        %789 = vrot.lane.b32.xlu0 %v532, 64
        %v790 = vpop.permute.xlu0 %789
        %791 = vrot.lane.b32.xlu0 %v544, 64
        %v792 = vpop.permute.xlu0 %791
        %793 = vrot.lane.b32.xlu0 %v556, 64
        %v794 = vpop.permute.xlu0 %793
        %795 = vrot.lane.b32.xlu0 %v568, 64
        %v796 = vpop.permute.xlu0 %795
        %797 = vrot.lane.b32.xlu0 %v580, 64
        %v798 = vpop.permute.xlu0 %797
        %799 = vrot.lane.b32.xlu0 %v592, 64
        %v800 = vpop.permute.xlu0 %799
        %801 = vrot.lane.b32.xlu0 %v604, 64
        %v802 = vpop.permute.xlu0 %801
        %803 = vrot.lane.b32.xlu0 %v616, 64
        %v804 = vpop.permute.xlu0 %803
        %805 = vrot.lane.b32.xlu0 %v628, 64
        %v806 = vpop.permute.xlu0 %805
        %807 = vrot.lane.b32.xlu0 %v640, 64
        %v808 = vpop.permute.xlu0 %807
        %809 = vrot.lane.b32.xlu0 %v652, 64
        %v810 = vpop.permute.xlu0 %809
        %811 = vrot.lane.b32.xlu0 %v664, 64
        %v812 = vpop.permute.xlu0 %811
        %813 = vrot.lane.b32.xlu0 %v676, 64
        %v814 = vpop.permute.xlu0 %813
        %815 = vrot.lane.b32.xlu0 %v688, 64
        %v816 = vpop.permute.xlu0 %815
        %817 = vrot.lane.b32.xlu0 %v468, 64
        %v818 = vpop.permute.xlu0 %817
        %819 = vrot.lane.b32.xlu0 %v469, 64
        %v820 = vpop.permute.xlu0 %819
        %821 = vrot.lane.b32.xlu0 %v470, 64
        %v822 = vpop.permute.xlu0 %821
        %823 = vrot.lane.b32.xlu0 %v471, 64
        %v824 = vpop.permute.xlu0 %823
        %825 = vrot.lane.b32.xlu0 %v472, 64
        %v826 = vpop.permute.xlu0 %825
        %827 = vrot.lane.b32.xlu0 %v473, 64
        %v828 = vpop.permute.xlu0 %827
        %829 = vrot.lane.b32.xlu0 %v474, 64
        %v830 = vpop.permute.xlu0 %829
        %831 = vrot.lane.b32.xlu0 %v475, 64
        %v832 = vpop.permute.xlu0 %831
        %833 = vrot.lane.b32.xlu0 %v476, 64
        %v834 = vpop.permute.xlu0 %833
        %835 = vrot.lane.b32.xlu0 %v477, 64
        %v836 = vpop.permute.xlu0 %835
        %837 = vrot.lane.b32.xlu0 %v478, 64
        %v838 = vpop.permute.xlu0 %837
        %839 = vrot.lane.b32.xlu0 %v479, 64
        %v840 = vpop.permute.xlu0 %839
        %841 = vrot.lane.b32.xlu0 %v480, 64
        %v842 = vpop.permute.xlu0 %841
        %843 = vrot.lane.b32.xlu0 %v481, 64
        %v844 = vpop.permute.xlu0 %843
        %845 = vrot.lane.b32.xlu0 %v482, 64
        %v846 = vpop.permute.xlu0 %845
        %847 = vrot.lane.b32.xlu0 %v483, 64
        %v848 = vpop.permute.xlu0 %847
        %849 = vrot.lane.b32.xlu0 %v725, 64
        %v850 = vpop.permute.xlu0 %849
        %851 = vrot.lane.b32.xlu0 %v728, 64
        %v852 = vpop.permute.xlu0 %851
        %853 = vrot.lane.b32.xlu0 %v731, 64
        %v854 = vpop.permute.xlu0 %853
        %855 = vrot.lane.b32.xlu0 %v734, 64
        %v856 = vpop.permute.xlu0 %855
        %857 = vrot.lane.b32.xlu0 %v737, 64
        %v858 = vpop.permute.xlu0 %857
        %859 = vrot.lane.b32.xlu0 %v740, 64
        %v860 = vpop.permute.xlu0 %859
        %861 = vrot.lane.b32.xlu0 %v743, 64
        %v862 = vpop.permute.xlu0 %861
        %863 = vrot.lane.b32.xlu0 %v746, 64
        %v864 = vpop.permute.xlu0 %863
        %865 = vrot.lane.b32.xlu0 %v749, 64
        %v866 = vpop.permute.xlu0 %865
        %867 = vrot.lane.b32.xlu0 %v752, 64
        %v868 = vpop.permute.xlu0 %867
        %869 = vrot.lane.b32.xlu0 %v755, 64
        %v870 = vpop.permute.xlu0 %869
        %871 = vrot.lane.b32.xlu0 %v758, 64
        %v872 = vpop.permute.xlu0 %871
        %873 = vrot.lane.b32.xlu0 %v761, 64
        %v874 = vpop.permute.xlu0 %873
        %875 = vrot.lane.b32.xlu0 %v764, 64
        %v876 = vpop.permute.xlu0 %875
        %877 = vrot.lane.b32.xlu0 %v767, 64
        %v878 = vpop.permute.xlu0 %877
        %879 = vrot.lane.b32.xlu0 %v784, 64
        %v880 = vpop.permute.xlu0 %879
        %881 = vrot.lane.b32.xlu0 %v779, 64
        %v882 = vpop.permute.xlu0 %881
        %vm883 = vcmask 523264
        %v885 = vsel %vm883, 0, %v786
        %v888 = vsel %vm883, %v468, %v788
        %v891 = vsel %vm883, %v469, %v790
        %v894 = vsel %vm883, %v470, %v792
        %v897 = vsel %vm883, %v471, %v794
        %v900 = vsel %vm883, %v472, %v796
        %v903 = vsel %vm883, %v473, %v798
        %v906 = vsel %vm883, %v474, %v800
        %v909 = vsel %vm883, %v475, %v802
        %v912 = vsel %vm883, %v476, %v804
        %v915 = vsel %vm883, %v477, %v806
        %v918 = vsel %vm883, %v478, %v808
        %v921 = vsel %vm883, %v479, %v810
        %v924 = vsel %vm883, %v480, %v812
        %v927 = vsel %vm883, %v481, %v814
        %v930 = vsel %vm883, %v482, %v816
        %v934 = vsel %vm883, %v722, %v818
        %v938 = vsel %vm883, %v725, %v820
        %v942 = vsel %vm883, %v728, %v822
        %v946 = vsel %vm883, %v731, %v824
        %v950 = vsel %vm883, %v734, %v826
        %v954 = vsel %vm883, %v737, %v828
        %v958 = vsel %vm883, %v740, %v830
        %v962 = vsel %vm883, %v743, %v832
        %v966 = vsel %vm883, %v746, %v834
        %v970 = vsel %vm883, %v749, %v836
        %v974 = vsel %vm883, %v752, %v838
        %v978 = vsel %vm883, %v755, %v840
        %v982 = vsel %vm883, %v758, %v842
        %v986 = vsel %vm883, %v761, %v844
        %v990 = vsel %vm883, %v764, %v846
        %v994 = vsel %vm883, %v767, %v848
        %v998 = vsel %vm883, %v520, %v850
        %v1002 = vsel %vm883, %v532, %v852
        %v1006 = vsel %vm883, %v544, %v854
        %v1010 = vsel %vm883, %v556, %v856
        %v1014 = vsel %vm883, %v568, %v858
        %v1018 = vsel %vm883, %v580, %v860
        %v1022 = vsel %vm883, %v592, %v862
        %v1026 = vsel %vm883, %v604, %v864
        %v1030 = vsel %vm883, %v616, %v866
        %v1034 = vsel %vm883, %v628, %v868
        %v1038 = vsel %vm883, %v640, %v870
        %v1042 = vsel %vm883, %v652, %v872
        %v1046 = vsel %vm883, %v664, %v874
        %v1050 = vsel %vm883, %v676, %v876
        %v1054 = vsel %vm883, %v688, %v878
        %v1058 = vsel %vm883, %v779, %v880
        %v1061 = vsel %vm883, %v483, %v882
        %v1063 = vld [vmem:[#allocation5] sm:$0xf]
        %v1064 = vld [vmem:[#allocation5 + $0x4] sm:$0xf]
        %v1065 = vld [vmem:[#allocation5 + $0x8] sm:$0xf]
        %v1066 = vld [vmem:[#allocation5 + $0xc] sm:$0xf]
        %v1067 = vld [vmem:[#allocation5 + $0x10] sm:$0xf]
        %v1068 = vld [vmem:[#allocation5 + $0x14] sm:$0xf]
        %v1069 = vld [vmem:[#allocation5 + $0x18] sm:$0xf]
        %v1070 = vld [vmem:[#allocation5 + $0x1c] sm:$0xf]
        %v1071 = vld [vmem:[#allocation5 + $0x20] sm:$0xf]
        %v1072 = vld [vmem:[#allocation5 + $0x24] sm:$0xf]
        %v1073 = vld [vmem:[#allocation5 + $0x28] sm:$0xf]
        %v1074 = vld [vmem:[#allocation5 + $0x2c] sm:$0xf]
        %v1075 = vld [vmem:[#allocation5 + $0x30] sm:$0xf]
        %v1076 = vld [vmem:[#allocation5 + $0x34] sm:$0xf]
        %v1077 = vld [vmem:[#allocation5 + $0x38] sm:$0xf]
        %v1078 = vld [vmem:[#allocation5 + $0x3c] sm:$0xf]
        %v1079 = vld [vmem:[#allocation5 + $0x40] sm:$0xf]
        %v1080 = vld [vmem:[#allocation5 + $0x44] sm:$0xf]
        %v1081 = vld [vmem:[#allocation5 + $0x48] sm:$0xf]
        %v1082 = vld [vmem:[#allocation5 + $0x4c] sm:$0xf]
        %v1083 = vld [vmem:[#allocation5 + $0x50] sm:$0xf]
        %v1084 = vld [vmem:[#allocation5 + $0x54] sm:$0xf]
        %v1085 = vld [vmem:[#allocation5 + $0x58] sm:$0xf]
        %v1086 = vld [vmem:[#allocation5 + $0x5c] sm:$0xf]
        %v1087 = vld [vmem:[#allocation5 + $0x60] sm:$0xf]
        %v1088 = vld [vmem:[#allocation5 + $0x64] sm:$0xf]
        %v1089 = vld [vmem:[#allocation5 + $0x68] sm:$0xf]
        %v1090 = vld [vmem:[#allocation5 + $0x6c] sm:$0xf]
        %v1091 = vld [vmem:[#allocation5 + $0x70] sm:$0xf]
        %v1092 = vld [vmem:[#allocation5 + $0x74] sm:$0xf]
        %v1093 = vld [vmem:[#allocation5 + $0x78] sm:$0xf]
        %v1094 = vld [vmem:[#allocation5 + $0x7c] sm:$0xf]
        %v1095 = vld [vmem:[#allocation5 + $0x80] sm:$0xf]
        %v1096 = vld [vmem:[#allocation5 + $0x84] sm:$0xf]
        %v1097 = vld [vmem:[#allocation5 + $0x88] sm:$0xf]
        %v1098 = vld [vmem:[#allocation5 + $0x8c] sm:$0xf]
        %v1099 = vld [vmem:[#allocation5 + $0x90] sm:$0xf]
        %v1100 = vld [vmem:[#allocation5 + $0x94] sm:$0xf]
        %v1101 = vld [vmem:[#allocation5 + $0x98] sm:$0xf]
        %v1102 = vld [vmem:[#allocation5 + $0x9c] sm:$0xf]
        %v1103 = vld [vmem:[#allocation5 + $0xa0] sm:$0xf]
        %v1104 = vld [vmem:[#allocation5 + $0xa4] sm:$0xf]
        %v1105 = vld [vmem:[#allocation5 + $0xa8] sm:$0xf]
        %v1106 = vld [vmem:[#allocation5 + $0xac] sm:$0xf]
        %v1107 = vld [vmem:[#allocation5 + $0xb0] sm:$0xf]
        %v1108 = vld [vmem:[#allocation5 + $0xb4] sm:$0xf]
        %v1109 = vld [vmem:[#allocation5 + $0xb8] sm:$0xf]
        %v1110 = vld [vmem:[#allocation5 + $0xbc] sm:$0xf]
        %v1111 = vld [vmem:[#allocation5 + $0xc0] sm:$0xf]
        %v1112 = vld [vmem:[#allocation5 + $0xc4] sm:$0xf]
        %v1113 = vld [vmem:[#allocation5 + $0xc8] sm:$0xf]
        %v1114 = vld [vmem:[#allocation5 + $0xcc] sm:$0xf]
        %v1115 = vld [vmem:[#allocation5 + $0xd0] sm:$0xf]
        %v1116 = vld [vmem:[#allocation5 + $0xd4] sm:$0xf]
        %v1117 = vld [vmem:[#allocation5 + $0xd8] sm:$0xf]
        %v1118 = vld [vmem:[#allocation5 + $0xdc] sm:$0xf]
        %v1119 = vld [vmem:[#allocation5 + $0xe0] sm:$0xf]
        %v1120 = vld [vmem:[#allocation5 + $0xe4] sm:$0xf]
        %v1121 = vld [vmem:[#allocation5 + $0xe8] sm:$0xf]
        %v1122 = vld [vmem:[#allocation5 + $0xec] sm:$0xf]
        %v1123 = vld [vmem:[#allocation5 + $0xf0] sm:$0xf]
        %v1124 = vld [vmem:[#allocation5 + $0xf4] sm:$0xf]
        %v1125 = vld [vmem:[#allocation5 + $0xf8] sm:$0xf]
        %v1126 = vld [vmem:[#allocation5 + $0xfc] sm:$0xf]
        %v1127 = vld [vmem:[#allocation5 + $0x100] sm:$0xf]
        %v1128 = vld [vmem:[#allocation5 + $0x104] sm:$0xf]
        %v1129 = vld [vmem:[#allocation5 + $0x108] sm:$0xf]
        %v1130 = vld [vmem:[#allocation5 + $0x10c] sm:$0xf]
        %v1131 = vld [vmem:[#allocation5 + $0x110] sm:$0xf]
        %v1132 = vld [vmem:[#allocation5 + $0x114] sm:$0xf]
        %v1133 = vld [vmem:[#allocation5 + $0x118] sm:$0xf]
        %v1134 = vld [vmem:[#allocation5 + $0x11c] sm:$0xf]
        %v1135 = vld [vmem:[%s2] sm:$0x1]
        %v1137 = vlaneseq
        %v1138 = vshrl.u32 %v1137, 7
        %v1139 = vsub.s32 0, %v1138
        %v1140 = vrot.slane %v1135, %v1139
        %v1214 = vunpack.c.l.b16 %v1063
        %v1215 = vunpack.c.l.b16 %v1064
        %v1216 = vunpack.c.l.b16 %v1065
        %v1217 = vunpack.c.l.b16 %v1066
        %v1218 = vunpack.c.l.b16 %v1067
        %v1219 = vunpack.c.l.b16 %v1068
        %v1220 = vunpack.c.l.b16 %v1069
        %v1221 = vunpack.c.l.b16 %v1070
        %v1222 = vunpack.c.l.b16 %v1071
        %v1223 = vunpack.c.l.b16 %v1072
        %v1224 = vunpack.c.l.b16 %v1073
        %v1225 = vunpack.c.l.b16 %v1074
        %v1226 = vunpack.c.l.b16 %v1075
        %v1227 = vunpack.c.l.b16 %v1076
        %v1228 = vunpack.c.l.b16 %v1077
        %v1229 = vunpack.c.l.b16 %v1078
        %v1230 = vunpack.c.l.b16 %v1079
        %v1231 = vunpack.c.l.b16 %v1080
        %v1232 = vunpack.c.l.b16 %v1081
        %v1233 = vunpack.c.l.b16 %v1082
        %v1234 = vunpack.c.l.b16 %v1083
        %v1235 = vunpack.c.l.b16 %v1084
        %v1236 = vunpack.c.l.b16 %v1085
        %v1237 = vunpack.c.l.b16 %v1086
        %v1238 = vunpack.c.l.b16 %v1087
        %v1239 = vunpack.c.l.b16 %v1088
        %v1240 = vunpack.c.l.b16 %v1089
        %v1241 = vunpack.c.l.b16 %v1090
        %v1242 = vunpack.c.l.b16 %v1091
        %v1243 = vunpack.c.l.b16 %v1092
        %v1244 = vunpack.c.l.b16 %v1093
        %v1245 = vunpack.c.l.b16 %v1094
        %v1246 = vunpack.c.l.b16 %v1095
        %v1247 = vunpack.c.l.b16 %v1096
        %v1248 = vunpack.c.l.b16 %v1097
        %v1249 = vunpack.c.l.b16 %v1098
        %v1250 = vunpack.c.l.b16 %v1099
        %v1251 = vunpack.c.l.b16 %v1100
        %v1252 = vunpack.c.l.b16 %v1101
        %v1253 = vunpack.c.l.b16 %v1102
        %v1254 = vunpack.c.l.b16 %v1103
        %v1255 = vunpack.c.l.b16 %v1104
        %v1256 = vunpack.c.l.b16 %v1105
        %v1257 = vunpack.c.l.b16 %v1106
        %v1258 = vunpack.c.l.b16 %v1107
        %v1259 = vunpack.c.l.b16 %v1108
        %v1260 = vunpack.c.l.b16 %v1109
        %v1261 = vunpack.c.l.b16 %v1110
        %v1262 = vunpack.c.l.b16 %v1111
        %v1263 = vunpack.c.l.b16 %v1112
        %v1264 = vunpack.c.l.b16 %v1113
        %v1265 = vunpack.c.l.b16 %v1114
        %v1266 = vunpack.c.l.b16 %v1115
        %v1267 = vunpack.c.l.b16 %v1116
        %v1268 = vunpack.c.l.b16 %v1117
        %v1269 = vunpack.c.l.b16 %v1118
        %v1270 = vunpack.c.l.b16 %v1119
        %v1271 = vunpack.c.l.b16 %v1120
        %v1272 = vunpack.c.l.b16 %v1121
        %v1273 = vunpack.c.l.b16 %v1122
        %v1274 = vunpack.c.l.b16 %v1123
        %v1275 = vunpack.c.l.b16 %v1124
        %v1276 = vunpack.c.l.b16 %v1125
        %v1277 = vunpack.c.l.b16 %v1126
        %v1278 = vunpack.c.l.b16 %v1127
        %v1279 = vunpack.c.l.b16 %v1128
        %v1280 = vunpack.c.l.b16 %v1129
        %v1281 = vunpack.c.l.b16 %v1130
        %v1282 = vunpack.c.l.b16 %v1131
        %v1283 = vunpack.c.l.b16 %v1132
        %v1284 = vunpack.c.l.b16 %v1133
        %v1285 = vunpack.c.l.b16 %v1134
        %v1286 = vpack.c.b16 %v1215, %v1214
        %v1287 = vpack.c.b16 %v1217, %v1216
        %v1288 = vpack.c.b16 %v1219, %v1218
        %v1289 = vpack.c.b16 %v1221, %v1220
        %v1290 = vpack.c.b16 %v1223, %v1222
        %v1291 = vpack.c.b16 %v1225, %v1224
        %v1292 = vpack.c.b16 %v1227, %v1226
        %v1293 = vpack.c.b16 %v1229, %v1228
        %v1294 = vpack.c.b16 %v1231, %v1230
        %v1295 = vpack.c.b16 %v1233, %v1232
        %v1296 = vpack.c.b16 %v1235, %v1234
        %v1297 = vpack.c.b16 %v1237, %v1236
        %v1298 = vpack.c.b16 %v1239, %v1238
        %v1299 = vpack.c.b16 %v1241, %v1240
        %v1300 = vpack.c.b16 %v1243, %v1242
        %v1301 = vpack.c.b16 %v1245, %v1244
        %v1302 = vpack.c.b16 %v1247, %v1246
        %v1303 = vpack.c.b16 %v1249, %v1248
        %v1304 = vpack.c.b16 %v1251, %v1250
        %v1305 = vpack.c.b16 %v1253, %v1252
        %v1306 = vpack.c.b16 %v1255, %v1254
        %v1307 = vpack.c.b16 %v1257, %v1256
        %v1308 = vpack.c.b16 %v1259, %v1258
        %v1309 = vpack.c.b16 %v1261, %v1260
        %v1310 = vpack.c.b16 %v1263, %v1262
        %v1311 = vpack.c.b16 %v1265, %v1264
        %v1312 = vpack.c.b16 %v1267, %v1266
        %v1313 = vpack.c.b16 %v1269, %v1268
        %v1314 = vpack.c.b16 %v1271, %v1270
        %v1315 = vpack.c.b16 %v1273, %v1272
        %v1316 = vpack.c.b16 %v1275, %v1274
        %v1317 = vpack.c.b16 %v1277, %v1276
        %v1318 = vpack.c.b16 %v1279, %v1278
        %v1319 = vpack.c.b16 %v1281, %v1280
        %v1320 = vpack.c.b16 %v1283, %v1282
        %v1321 = vpack.c.b16 %v1285, %v1284
        %v1358 = vsel %vm883, %v728, 0
        %v1360 = vsel %vm883, %v731, 0
        %v1362 = vsel %vm883, %v734, 0
        %v1364 = vsel %vm883, %v737, 0
        %v1366 = vsel %vm883, %v740, 0
        %v1368 = vsel %vm883, %v743, 0
        %v1370 = vsel %vm883, %v746, 0
        %v1372 = vsel %vm883, %v749, 0
        %v1374 = vsel %vm883, %v752, 0
        %v1376 = vsel %vm883, %v755, 0
        %v1378 = vsel %vm883, %v758, 0
        %v1380 = vsel %vm883, %v761, 0
        %v1382 = vsel %vm883, %v764, 0
        %v1384 = vsel %vm883, %v767, 0
        %v1387 = vsel %vm883, %v784, 0
        %v1389 = vsel %vm883, %v722, 0
        %1391 = vmatprep.subr.bf16.mxu0 0
        %1392 = vmatpush1.bf16.msra.mxu0 %v1286
        %1393 = vmatprep.subr.bf16.mxu0 0
        %1394 = vmatpush1.bf16.msra.mxu0 %v1287
        %1395 = vmatprep.subr.bf16.mxu0 0
        %1396 = vmatpush1.bf16.msra.mxu0 %v1288
        %1397 = vmatprep.subr.bf16.mxu0 0
        %1398 = vmatpush1.bf16.msra.mxu0 %v1289
        %1399 = vmatprep.subr.bf16.mxu0 0
        %1400 = vmatpush1.bf16.msra.mxu0 %v1290
        %1401 = vmatprep.subr.bf16.mxu0 0
        %1402 = vmatpush1.bf16.msra.mxu0 %v1291
        %1403 = vmatprep.subr.bf16.mxu0 0
        %1404 = vmatpush1.bf16.msra.mxu0 %v1292
        %1405 = vmatprep.subr.bf16.mxu0 0
        %1406 = vmatpush1.bf16.msra.mxu0 %v1293
        %1407 = vmatprep.subr.bf16.mxu0 0
        %1408 = vmatpush1.bf16.msra.mxu0 %v1294
        %1409 = vmatprep.subr.bf16.mxu0 0
        %1410 = vmatpush1.bf16.msra.mxu0 %v1295
        %1411 = vmatprep.subr.bf16.mxu0 0
        %1412 = vmatpush1.bf16.msra.mxu0 %v1296
        %1413 = vmatprep.subr.bf16.mxu0 0
        %1414 = vmatpush1.bf16.msra.mxu0 %v1297
        %1415 = vmatprep.subr.bf16.mxu0 0
        %1416 = vmatpush1.bf16.msra.mxu0 %v1298
        %1417 = vmatprep.subr.bf16.mxu0 0
        %1418 = vmatpush1.bf16.msra.mxu0 %v1299
        %1419 = vmatprep.subr.bf16.mxu0 0
        %1420 = vmatpush1.bf16.msra.mxu0 %v1300
        %1421 = vmatprep.subr.bf16.mxu0 0
        %1422 = vmatpush1.bf16.msra.mxu0 %v1301
        %1423 = vmatprep.mubr.bf16.mxu0 %v934
        %1424 = vmatmul.mubr.bf16.gmra.mrb[0].mxu0 %v885
        %v1425 = vpop.f32.mrb[0].mxu0
        %v1426 = vadd.f32 %v1140, %v1425
        %v1427 = vpop.f32.mrb[0].mxu0
        %v1428 = vpop.f32.mrb[0].mxu0
        %v1429 = vadd.f32 %v1140, %v1428
        %v1430 = vpop.f32.mrb[0].mxu0
        %1431 = vmatprep.mubr.bf16.mxu0 %v938
        %1432 = vmatmul.mubr.bf16.gmra.mrb[0].mxu0 %v888
        %v1433 = vpop.f32.mrb[0].mxu0
        %v1434 = vadd.f32 %v1140, %v1433
        %v1435 = vpop.f32.mrb[0].mxu0
        %v1436 = vpop.f32.mrb[0].mxu0
        %v1437 = vadd.f32 %v1140, %v1436
        %v1438 = vpop.f32.mrb[0].mxu0
        %1439 = vmatprep.mubr.bf16.mxu0 %v942
        %1440 = vmatmul.mubr.bf16.gmra.mrb[0].mxu0 %v891
        %v1441 = vpop.f32.mrb[0].mxu0
        %v1442 = vadd.f32 %v1140, %v1441
        %v1443 = vpop.f32.mrb[0].mxu0
        %v1444 = vpop.f32.mrb[0].mxu0
        %v1445 = vadd.f32 %v1140, %v1444
        %v1446 = vpop.f32.mrb[0].mxu0
        %1447 = vmatprep.mubr.bf16.mxu0 %v946
        %1448 = vmatmul.mubr.bf16.gmra.mrb[0].mxu0 %v894
        %v1449 = vpop.f32.mrb[0].mxu0
        %v1450 = vadd.f32 %v1140, %v1449
        %v1451 = vpop.f32.mrb[0].mxu0
        %v1452 = vpop.f32.mrb[0].mxu0
        %v1453 = vadd.f32 %v1140, %v1452
        %v1454 = vpop.f32.mrb[0].mxu0
        %1455 = vmatprep.mubr.bf16.mxu0 %v950
        %1456 = vmatmul.mubr.bf16.gmra.mrb[0].mxu0 %v897
        %v1457 = vpop.f32.mrb[0].mxu0
        %v1458 = vadd.f32 %v1140, %v1457
        %v1459 = vpop.f32.mrb[0].mxu0
        %v1460 = vpop.f32.mrb[0].mxu0
        %v1461 = vadd.f32 %v1140, %v1460
        %v1462 = vpop.f32.mrb[0].mxu0
        %1463 = vmatprep.mubr.bf16.mxu0 %v954
        %1464 = vmatmul.mubr.bf16.gmra.mrb[0].mxu0 %v900
        %v1465 = vpop.f32.mrb[0].mxu0
        %v1466 = vadd.f32 %v1140, %v1465
        %v1467 = vpop.f32.mrb[0].mxu0
        %v1468 = vpop.f32.mrb[0].mxu0
        %v1469 = vadd.f32 %v1140, %v1468
        %v1470 = vpop.f32.mrb[0].mxu0
        %1471 = vmatprep.mubr.bf16.mxu0 %v958
        %1472 = vmatmul.mubr.bf16.gmra.mrb[0].mxu0 %v903
        %v1473 = vpop.f32.mrb[0].mxu0
        %v1474 = vadd.f32 %v1140, %v1473
        %v1475 = vpop.f32.mrb[0].mxu0
        %v1476 = vpop.f32.mrb[0].mxu0
        %v1477 = vadd.f32 %v1140, %v1476
        %v1478 = vpop.f32.mrb[0].mxu0
        %1479 = vmatprep.mubr.bf16.mxu0 %v962
        %1480 = vmatmul.mubr.bf16.gmra.mrb[0].mxu0 %v906
        %v1481 = vpop.f32.mrb[0].mxu0
        %v1482 = vadd.f32 %v1140, %v1481
        %v1483 = vpop.f32.mrb[0].mxu0
        %v1484 = vpop.f32.mrb[0].mxu0
        %v1485 = vadd.f32 %v1140, %v1484
        %v1486 = vpop.f32.mrb[0].mxu0
        %1487 = vmatprep.mubr.bf16.mxu0 %v966
        %1488 = vmatmul.mubr.bf16.gmra.mrb[0].mxu0 %v909
        %v1489 = vpop.f32.mrb[0].mxu0
        %v1490 = vadd.f32 %v1140, %v1489
        %v1491 = vpop.f32.mrb[0].mxu0
        %v1492 = vpop.f32.mrb[0].mxu0
        %v1493 = vadd.f32 %v1140, %v1492
        %v1494 = vpop.f32.mrb[0].mxu0
        %1495 = vmatprep.mubr.bf16.mxu0 %v970
        %1496 = vmatmul.mubr.bf16.gmra.mrb[0].mxu0 %v912
        %v1497 = vpop.f32.mrb[0].mxu0
        %v1498 = vadd.f32 %v1140, %v1497
        %v1499 = vpop.f32.mrb[0].mxu0
        %v1500 = vpop.f32.mrb[0].mxu0
        %v1501 = vadd.f32 %v1140, %v1500
        %v1502 = vpop.f32.mrb[0].mxu0
        %1503 = vmatprep.mubr.bf16.mxu0 %v974
        %1504 = vmatmul.mubr.bf16.gmra.mrb[0].mxu0 %v915
        %v1505 = vpop.f32.mrb[0].mxu0
        %v1506 = vadd.f32 %v1140, %v1505
        %v1507 = vpop.f32.mrb[0].mxu0
        %v1508 = vpop.f32.mrb[0].mxu0
        %v1509 = vadd.f32 %v1140, %v1508
        %v1510 = vpop.f32.mrb[0].mxu0
        %1511 = vmatprep.mubr.bf16.mxu0 %v978
        %1512 = vmatmul.mubr.bf16.gmra.mrb[0].mxu0 %v918
        %v1513 = vpop.f32.mrb[0].mxu0
        %v1514 = vadd.f32 %v1140, %v1513
        %v1515 = vpop.f32.mrb[0].mxu0
        %v1516 = vpop.f32.mrb[0].mxu0
        %v1517 = vadd.f32 %v1140, %v1516
        %v1518 = vpop.f32.mrb[0].mxu0
        %1519 = vmatprep.mubr.bf16.mxu0 %v982
        %1520 = vmatmul.mubr.bf16.gmra.mrb[0].mxu0 %v921
        %v1521 = vpop.f32.mrb[0].mxu0
        %v1522 = vadd.f32 %v1140, %v1521
        %v1523 = vpop.f32.mrb[0].mxu0
        %v1524 = vpop.f32.mrb[0].mxu0
        %v1525 = vadd.f32 %v1140, %v1524
        %v1526 = vpop.f32.mrb[0].mxu0
        %1527 = vmatprep.mubr.bf16.mxu0 %v986
        %1528 = vmatmul.mubr.bf16.gmra.mrb[0].mxu0 %v924
        %v1529 = vpop.f32.mrb[0].mxu0
        %v1530 = vadd.f32 %v1140, %v1529
        %v1531 = vpop.f32.mrb[0].mxu0
        %v1532 = vpop.f32.mrb[0].mxu0
        %v1533 = vadd.f32 %v1140, %v1532
        %v1534 = vpop.f32.mrb[0].mxu0
        %1535 = vmatprep.mubr.bf16.mxu0 %v990
        %1536 = vmatmul.mubr.bf16.gmra.mrb[0].mxu0 %v927
        %v1537 = vpop.f32.mrb[0].mxu0
        %v1538 = vadd.f32 %v1140, %v1537
        %v1539 = vpop.f32.mrb[0].mxu0
        %v1540 = vpop.f32.mrb[0].mxu0
        %v1541 = vadd.f32 %v1140, %v1540
        %v1542 = vpop.f32.mrb[0].mxu0
        %1543 = vmatprep.mubr.bf16.mxu0 %v994
        %1544 = vmatmul.mubr.bf16.gmra.mrb[0].mxu0 %v930
        %v1545 = vpop.f32.mrb[0].mxu0
        %v1546 = vadd.f32 %v1140, %v1545
        %v1547 = vpop.f32.mrb[0].mxu0
        %v1548 = vpop.f32.mrb[0].mxu0
        %v1549 = vadd.f32 %v1140, %v1548
        %v1550 = vpop.f32.mrb[0].mxu0
        %1551 = vdwg.mxu0
        %1552 = vmatprep.subr.bf16.mxu0 0
        %1553 = vmatpush1.bf16.msra.mxu0 %v1302
        %1554 = vmatprep.subr.bf16.mxu0 0
        %1555 = vmatpush1.bf16.msra.mxu0 %v1303
        %1556 = vmatprep.subr.bf16.mxu0 0
        %1557 = vmatpush1.bf16.msra.mxu0 %v1304
        %1558 = vmatprep.subr.bf16.mxu0 0
        %1559 = vmatpush1.bf16.msra.mxu0 %v1305
        %1560 = vmatprep.subr.bf16.mxu0 0
        %1561 = vmatpush1.bf16.msra.mxu0 %v1306
        %1562 = vmatprep.subr.bf16.mxu0 0
        %1563 = vmatpush1.bf16.msra.mxu0 %v1307
        %1564 = vmatprep.subr.bf16.mxu0 0
        %1565 = vmatpush1.bf16.msra.mxu0 %v1308
        %1566 = vmatprep.subr.bf16.mxu0 0
        %1567 = vmatpush1.bf16.msra.mxu0 %v1309
        %1568 = vmatprep.subr.bf16.mxu0 0
        %1569 = vmatpush1.bf16.msra.mxu0 %v1310
        %1570 = vmatprep.subr.bf16.mxu0 0
        %1571 = vmatpush1.bf16.msra.mxu0 %v1311
        %1572 = vmatprep.subr.bf16.mxu0 0
        %1573 = vmatpush1.bf16.msra.mxu0 %v1312
        %1574 = vmatprep.subr.bf16.mxu0 0
        %1575 = vmatpush1.bf16.msra.mxu0 %v1313
        %1576 = vmatprep.subr.bf16.mxu0 0
        %1577 = vmatpush1.bf16.msra.mxu0 %v1314
        %1578 = vmatprep.subr.bf16.mxu0 0
        %1579 = vmatpush1.bf16.msra.mxu0 %v1315
        %1580 = vmatprep.subr.bf16.mxu0 0
        %1581 = vmatpush1.bf16.msra.mxu0 %v1316
        %1582 = vmatprep.subr.bf16.mxu0 0
        %1583 = vmatpush1.bf16.msra.mxu0 %v1317
        %1584 = vmatprep.mubr.bf16.mxu0 %v891
        %1585 = vmatmul.mubr.bf16.gmra.mrb[0].mxu0 %v998
        %v1586 = vpop.f32.mrb[0].mxu0
        %v1587 = vadd.f32 %v1426, %v1586
        %v1588 = vpop.f32.mrb[0].mxu0
        %v1589 = vpop.f32.mrb[0].mxu0
        %v1590 = vadd.f32 %v1429, %v1589
        %v1591 = vpop.f32.mrb[0].mxu0
        %1592 = vmatprep.mubr.bf16.mxu0 %v894
        %1593 = vmatmul.mubr.bf16.gmra.mrb[0].mxu0 %v1002
        %v1594 = vpop.f32.mrb[0].mxu0
        %v1595 = vadd.f32 %v1434, %v1594
        %v1596 = vpop.f32.mrb[0].mxu0
        %v1597 = vpop.f32.mrb[0].mxu0
        %v1598 = vadd.f32 %v1437, %v1597
        %v1599 = vpop.f32.mrb[0].mxu0
        %1600 = vmatprep.mubr.bf16.mxu0 %v897
        %1601 = vmatmul.mubr.bf16.gmra.mrb[0].mxu0 %v1006
        %v1602 = vpop.f32.mrb[0].mxu0
        %v1603 = vadd.f32 %v1442, %v1602
        %v1604 = vpop.f32.mrb[0].mxu0
        %v1605 = vpop.f32.mrb[0].mxu0
        %v1606 = vadd.f32 %v1445, %v1605
        %v1607 = vpop.f32.mrb[0].mxu0
        %1608 = vmatprep.mubr.bf16.mxu0 %v900
        %1609 = vmatmul.mubr.bf16.gmra.mrb[0].mxu0 %v1010
        %v1610 = vpop.f32.mrb[0].mxu0
        %v1611 = vadd.f32 %v1450, %v1610
        %v1612 = vpop.f32.mrb[0].mxu0
        %v1613 = vpop.f32.mrb[0].mxu0
        %v1614 = vadd.f32 %v1453, %v1613
        %v1615 = vpop.f32.mrb[0].mxu0
        %1616 = vmatprep.mubr.bf16.mxu0 %v903
        %1617 = vmatmul.mubr.bf16.gmra.mrb[0].mxu0 %v1014
        %v1618 = vpop.f32.mrb[0].mxu0
        %v1619 = vadd.f32 %v1458, %v1618
        %v1620 = vpop.f32.mrb[0].mxu0
        %v1621 = vpop.f32.mrb[0].mxu0
        %v1622 = vadd.f32 %v1461, %v1621
        %v1623 = vpop.f32.mrb[0].mxu0
        %1624 = vmatprep.mubr.bf16.mxu0 %v906
        %1625 = vmatmul.mubr.bf16.gmra.mrb[0].mxu0 %v1018
        %v1626 = vpop.f32.mrb[0].mxu0
        %v1627 = vadd.f32 %v1466, %v1626
        %v1628 = vpop.f32.mrb[0].mxu0
        %v1629 = vpop.f32.mrb[0].mxu0
        %v1630 = vadd.f32 %v1469, %v1629
        %v1631 = vpop.f32.mrb[0].mxu0
        %1632 = vmatprep.mubr.bf16.mxu0 %v909
        %1633 = vmatmul.mubr.bf16.gmra.mrb[0].mxu0 %v1022
        %v1634 = vpop.f32.mrb[0].mxu0
        %v1635 = vadd.f32 %v1474, %v1634
        %v1636 = vpop.f32.mrb[0].mxu0
        %v1637 = vpop.f32.mrb[0].mxu0
        %v1638 = vadd.f32 %v1477, %v1637
        %v1639 = vpop.f32.mrb[0].mxu0
        %1640 = vmatprep.mubr.bf16.mxu0 %v912
        %1641 = vmatmul.mubr.bf16.gmra.mrb[0].mxu0 %v1026
        %v1642 = vpop.f32.mrb[0].mxu0
        %v1643 = vadd.f32 %v1482, %v1642
        %v1644 = vpop.f32.mrb[0].mxu0
        %v1645 = vpop.f32.mrb[0].mxu0
        %v1646 = vadd.f32 %v1485, %v1645
        %v1647 = vpop.f32.mrb[0].mxu0
        %1648 = vmatprep.mubr.bf16.mxu0 %v915
        %1649 = vmatmul.mubr.bf16.gmra.mrb[0].mxu0 %v1030
        %v1650 = vpop.f32.mrb[0].mxu0
        %v1651 = vadd.f32 %v1490, %v1650
        %v1652 = vpop.f32.mrb[0].mxu0
        %v1653 = vpop.f32.mrb[0].mxu0
        %v1654 = vadd.f32 %v1493, %v1653
        %v1655 = vpop.f32.mrb[0].mxu0
        %1656 = vmatprep.mubr.bf16.mxu0 %v918
        %1657 = vmatmul.mubr.bf16.gmra.mrb[0].mxu0 %v1034
        %v1658 = vpop.f32.mrb[0].mxu0
        %v1659 = vadd.f32 %v1498, %v1658
        %v1660 = vpop.f32.mrb[0].mxu0
        %v1661 = vpop.f32.mrb[0].mxu0
        %v1662 = vadd.f32 %v1501, %v1661
        %v1663 = vpop.f32.mrb[0].mxu0
        %1664 = vmatprep.mubr.bf16.mxu0 %v921
        %1665 = vmatmul.mubr.bf16.gmra.mrb[0].mxu0 %v1038
        %v1666 = vpop.f32.mrb[0].mxu0
        %v1667 = vadd.f32 %v1506, %v1666
        %v1668 = vpop.f32.mrb[0].mxu0
        %v1669 = vpop.f32.mrb[0].mxu0
        %v1670 = vadd.f32 %v1509, %v1669
        %v1671 = vpop.f32.mrb[0].mxu0
        %1672 = vmatprep.mubr.bf16.mxu0 %v924
        %1673 = vmatmul.mubr.bf16.gmra.mrb[0].mxu0 %v1042
        %v1674 = vpop.f32.mrb[0].mxu0
        %v1675 = vadd.f32 %v1514, %v1674
        %v1676 = vpop.f32.mrb[0].mxu0
        %v1677 = vpop.f32.mrb[0].mxu0
        %v1678 = vadd.f32 %v1517, %v1677
        %v1679 = vpop.f32.mrb[0].mxu0
        %1680 = vmatprep.mubr.bf16.mxu0 %v927
        %1681 = vmatmul.mubr.bf16.gmra.mrb[0].mxu0 %v1046
        %v1682 = vpop.f32.mrb[0].mxu0
        %v1683 = vadd.f32 %v1522, %v1682
        %v1684 = vpop.f32.mrb[0].mxu0
        %v1685 = vpop.f32.mrb[0].mxu0
        %v1686 = vadd.f32 %v1525, %v1685
        %v1687 = vpop.f32.mrb[0].mxu0
        %1688 = vmatprep.mubr.bf16.mxu0 %v930
        %1689 = vmatmul.mubr.bf16.gmra.mrb[0].mxu0 %v1050
        %v1690 = vpop.f32.mrb[0].mxu0
        %v1691 = vadd.f32 %v1530, %v1690
        %v1692 = vpop.f32.mrb[0].mxu0
        %v1693 = vpop.f32.mrb[0].mxu0
        %v1694 = vadd.f32 %v1533, %v1693
        %v1695 = vpop.f32.mrb[0].mxu0
        %1696 = vmatprep.mubr.bf16.mxu0 %v1061
        %1697 = vmatmul.mubr.bf16.gmra.mrb[0].mxu0 %v1054
        %v1698 = vpop.f32.mrb[0].mxu0
        %v1699 = vadd.f32 %v1538, %v1698
        %v1700 = vpop.f32.mrb[0].mxu0
        %v1701 = vpop.f32.mrb[0].mxu0
        %v1702 = vadd.f32 %v1541, %v1701
        %v1703 = vpop.f32.mrb[0].mxu0
        %1704 = vmatprep.mubr.bf16.mxu0 %v885
        %1705 = vmatmul.mubr.bf16.gmra.mrb[0].mxu0 %v1058
        %v1706 = vpop.f32.mrb[0].mxu0
        %v1707 = vadd.f32 %v1546, %v1706
        %v1708 = vpop.f32.mrb[0].mxu0
        %v1709 = vpop.f32.mrb[0].mxu0
        %v1710 = vadd.f32 %v1549, %v1709
        %v1711 = vpop.f32.mrb[0].mxu0
        %1712 = vdwg.mxu0
        %1713 = vmatprep.subr.bf16.mxu0 0
        %1714 = vmatpush1.bf16.msra.mxu0 %v1318
        %1715 = vmatprep.subr.bf16.mxu0 0
        %1716 = vmatpush1.bf16.msra.mxu0 %v1319
        %1717 = vmatprep.subr.bf16.mxu0 0
        %1718 = vmatpush1.bf16.msra.mxu0 %v1320
        %1719 = vmatprep.subr.bf16.mxu0 0
        %1720 = vmatpush1.bf16.msra.mxu0 %v1321
        %1721 = vmatprep.subr.bf16.mxu0 0
        %1722 = vmatpush1.bf16.msra.mxu0 0
        %1723 = vmatprep.subr.bf16.mxu0 0
        %1724 = vmatpush1.bf16.msra.mxu0 0
        %1725 = vmatprep.subr.bf16.mxu0 0
        %1726 = vmatpush1.bf16.msra.mxu0 0
        %1727 = vmatprep.subr.bf16.mxu0 0
        %1728 = vmatpush1.bf16.msra.mxu0 0
        %1729 = vmatprep.subr.bf16.mxu0 0
        %1730 = vmatpush1.bf16.msra.mxu0 0
        %1731 = vmatprep.subr.bf16.mxu0 0
        %1732 = vmatpush1.bf16.msra.mxu0 0
        %1733 = vmatprep.subr.bf16.mxu0 0
        %1734 = vmatpush1.bf16.msra.mxu0 0
        %1735 = vmatprep.subr.bf16.mxu0 0
        %1736 = vmatpush1.bf16.msra.mxu0 0
        %1737 = vmatprep.subr.bf16.mxu0 0
        %1738 = vmatpush1.bf16.msra.mxu0 0
        %1739 = vmatprep.subr.bf16.mxu0 0
        %1740 = vmatpush1.bf16.msra.mxu0 0
        %1741 = vmatprep.subr.bf16.mxu0 0
        %1742 = vmatpush1.bf16.msra.mxu0 0
        %1743 = vmatprep.subr.bf16.mxu0 0
        %1744 = vmatpush1.bf16.msra.mxu0 0
        %1745 = vmatprep.mubr.bf16.mxu0 0
        %1746 = vmatmul.mubr.bf16.gmra.mrb[0].mxu0 %v1358
        %v1747 = vpop.f32.mrb[0].mxu0
        %v1748 = vadd.f32 %v1587, %v1747
        %v1749 = vpop.f32.mrb[0].mxu0
        %v1750 = vpop.f32.mrb[0].mxu0
        %v1751 = vadd.f32 %v1590, %v1750
        %v1752 = vpop.f32.mrb[0].mxu0
        %1753 = vmatprep.mubr.bf16.mxu0 0
        %1754 = vmatmul.mubr.bf16.gmra.mrb[0].mxu0 %v1360
        %v1755 = vpop.f32.mrb[0].mxu0
        %v1756 = vadd.f32 %v1595, %v1755
        %v1757 = vpop.f32.mrb[0].mxu0
        %v1758 = vpop.f32.mrb[0].mxu0
        %v1759 = vadd.f32 %v1598, %v1758
        %v1760 = vpop.f32.mrb[0].mxu0
        %1761 = vmatprep.mubr.bf16.mxu0 0
        %1762 = vmatmul.mubr.bf16.gmra.mrb[0].mxu0 %v1362
        %v1763 = vpop.f32.mrb[0].mxu0
        %v1764 = vadd.f32 %v1603, %v1763
        %v1765 = vpop.f32.mrb[0].mxu0
        %v1766 = vpop.f32.mrb[0].mxu0
        %v1767 = vadd.f32 %v1606, %v1766
        %v1768 = vpop.f32.mrb[0].mxu0
        %1769 = vmatprep.mubr.bf16.mxu0 0
        %1770 = vmatmul.mubr.bf16.gmra.mrb[0].mxu0 %v1364
        %v1771 = vpop.f32.mrb[0].mxu0
        %v1772 = vadd.f32 %v1611, %v1771
        %v1773 = vpop.f32.mrb[0].mxu0
        %v1774 = vpop.f32.mrb[0].mxu0
        %v1775 = vadd.f32 %v1614, %v1774
        %v1776 = vpop.f32.mrb[0].mxu0
        %1777 = vmatprep.mubr.bf16.mxu0 0
        %1778 = vmatmul.mubr.bf16.gmra.mrb[0].mxu0 %v1366
        %v1779 = vpop.f32.mrb[0].mxu0
        %v1780 = vadd.f32 %v1619, %v1779
        %v1781 = vpop.f32.mrb[0].mxu0
        %v1782 = vpop.f32.mrb[0].mxu0
        %v1783 = vadd.f32 %v1622, %v1782
        %v1784 = vpop.f32.mrb[0].mxu0
        %1785 = vmatprep.mubr.bf16.mxu0 0
        %1786 = vmatmul.mubr.bf16.gmra.mrb[0].mxu0 %v1368
        %v1787 = vpop.f32.mrb[0].mxu0
        %v1788 = vadd.f32 %v1627, %v1787
        %v1789 = vpop.f32.mrb[0].mxu0
        %v1790 = vpop.f32.mrb[0].mxu0
        %v1791 = vadd.f32 %v1630, %v1790
        %v1792 = vpop.f32.mrb[0].mxu0
        %1793 = vmatprep.mubr.bf16.mxu0 0
        %1794 = vmatmul.mubr.bf16.gmra.mrb[0].mxu0 %v1370
        %v1795 = vpop.f32.mrb[0].mxu0
        %v1796 = vadd.f32 %v1635, %v1795
        %v1797 = vpop.f32.mrb[0].mxu0
        %v1798 = vpop.f32.mrb[0].mxu0
        %v1799 = vadd.f32 %v1638, %v1798
        %v1800 = vpop.f32.mrb[0].mxu0
        %1801 = vmatprep.mubr.bf16.mxu0 0
        %1802 = vmatmul.mubr.bf16.gmra.mrb[0].mxu0 %v1372
        %v1803 = vpop.f32.mrb[0].mxu0
        %v1804 = vadd.f32 %v1643, %v1803
        %v1805 = vpop.f32.mrb[0].mxu0
        %v1806 = vpop.f32.mrb[0].mxu0
        %v1807 = vadd.f32 %v1646, %v1806
        %v1808 = vpop.f32.mrb[0].mxu0
        %1809 = vmatprep.mubr.bf16.mxu0 0
        %1810 = vmatmul.mubr.bf16.gmra.mrb[0].mxu0 %v1374
        %v1811 = vpop.f32.mrb[0].mxu0
        %v1812 = vadd.f32 %v1651, %v1811
        %v1813 = vpop.f32.mrb[0].mxu0
        %v1814 = vpop.f32.mrb[0].mxu0
        %v1815 = vadd.f32 %v1654, %v1814
        %v1816 = vpop.f32.mrb[0].mxu0
        %1817 = vmatprep.mubr.bf16.mxu0 0
        %1818 = vmatmul.mubr.bf16.gmra.mrb[0].mxu0 %v1376
        %v1819 = vpop.f32.mrb[0].mxu0
        %v1820 = vadd.f32 %v1659, %v1819
        %v1821 = vpop.f32.mrb[0].mxu0
        %v1822 = vpop.f32.mrb[0].mxu0
        %v1823 = vadd.f32 %v1662, %v1822
        %v1824 = vpop.f32.mrb[0].mxu0
        %1825 = vmatprep.mubr.bf16.mxu0 0
        %1826 = vmatmul.mubr.bf16.gmra.mrb[0].mxu0 %v1378
        %v1827 = vpop.f32.mrb[0].mxu0
        %v1828 = vadd.f32 %v1667, %v1827
        %v1829 = vpop.f32.mrb[0].mxu0
        %v1830 = vpop.f32.mrb[0].mxu0
        %v1831 = vadd.f32 %v1670, %v1830
        %v1832 = vpop.f32.mrb[0].mxu0
        %1833 = vmatprep.mubr.bf16.mxu0 0
        %1834 = vmatmul.mubr.bf16.gmra.mrb[0].mxu0 %v1380
        %v1835 = vpop.f32.mrb[0].mxu0
        %v1836 = vadd.f32 %v1675, %v1835
        %v1837 = vpop.f32.mrb[0].mxu0
        %v1838 = vpop.f32.mrb[0].mxu0
        %v1839 = vadd.f32 %v1678, %v1838
        %v1840 = vpop.f32.mrb[0].mxu0
        %1841 = vmatprep.mubr.bf16.mxu0 0
        %1842 = vmatmul.mubr.bf16.gmra.mrb[0].mxu0 %v1382
        %v1843 = vpop.f32.mrb[0].mxu0
        %v1844 = vadd.f32 %v1683, %v1843
        %v1845 = vpop.f32.mrb[0].mxu0
        %v1846 = vpop.f32.mrb[0].mxu0
        %v1847 = vadd.f32 %v1686, %v1846
        %v1848 = vpop.f32.mrb[0].mxu0
        %1849 = vmatprep.mubr.bf16.mxu0 0
        %1850 = vmatmul.mubr.bf16.gmra.mrb[0].mxu0 %v1384
        %v1851 = vpop.f32.mrb[0].mxu0
        %v1852 = vadd.f32 %v1691, %v1851
        %v1853 = vpop.f32.mrb[0].mxu0
        %v1854 = vpop.f32.mrb[0].mxu0
        %v1855 = vadd.f32 %v1694, %v1854
        %v1856 = vpop.f32.mrb[0].mxu0
        %1857 = vmatprep.mubr.bf16.mxu0 0
        %1858 = vmatmul.mubr.bf16.gmra.mrb[0].mxu0 %v1387
        %v1859 = vpop.f32.mrb[0].mxu0
        %v1860 = vadd.f32 %v1699, %v1859
        %v1861 = vpop.f32.mrb[0].mxu0
        %v1862 = vpop.f32.mrb[0].mxu0
        %v1863 = vadd.f32 %v1702, %v1862
        %v1864 = vpop.f32.mrb[0].mxu0
        %1865 = vmatprep.mubr.bf16.mxu0 0
        %1866 = vmatmul.mubr.bf16.gmra.mrb[0].mxu0 %v1389
        %v1867 = vpop.f32.mrb[0].mxu0
        %v1868 = vadd.f32 %v1707, %v1867
        %v1869 = vpop.f32.mrb[0].mxu0
        %v1870 = vpop.f32.mrb[0].mxu0
        %v1871 = vadd.f32 %v1710, %v1870
        %v1872 = vpop.f32.mrb[0].mxu0
        %1873 = vdwg.mxu0
        %v1874 = vmax.f32 %v1748, 0.0
        %v1875 = vmax.f32 %v1751, 0.0
        %v1876 = vmax.f32 %v1756, 0.0
        %v1877 = vmax.f32 %v1759, 0.0
        %v1878 = vmax.f32 %v1764, 0.0
        %v1879 = vmax.f32 %v1767, 0.0
        %v1880 = vmax.f32 %v1772, 0.0
        %v1881 = vmax.f32 %v1775, 0.0
        %v1882 = vmax.f32 %v1780, 0.0
        %v1883 = vmax.f32 %v1783, 0.0
        %v1884 = vmax.f32 %v1788, 0.0
        %v1885 = vmax.f32 %v1791, 0.0
        %v1886 = vmax.f32 %v1796, 0.0
        %v1887 = vmax.f32 %v1799, 0.0
        %v1888 = vmax.f32 %v1804, 0.0
        %v1889 = vmax.f32 %v1807, 0.0
        %v1890 = vmax.f32 %v1812, 0.0
        %v1891 = vmax.f32 %v1815, 0.0
        %v1892 = vmax.f32 %v1820, 0.0
        %v1893 = vmax.f32 %v1823, 0.0
        %v1894 = vmax.f32 %v1828, 0.0
        %v1895 = vmax.f32 %v1831, 0.0
        %v1896 = vmax.f32 %v1836, 0.0
        %v1897 = vmax.f32 %v1839, 0.0
        %v1898 = vmax.f32 %v1844, 0.0
        %v1899 = vmax.f32 %v1847, 0.0
        %v1900 = vmax.f32 %v1852, 0.0
        %v1901 = vmax.f32 %v1855, 0.0
        %v1902 = vmax.f32 %v1860, 0.0
        %v1903 = vmax.f32 %v1863, 0.0
        %v1904 = vmax.f32 %v1868, 0.0
        %v1905 = vmax.f32 %v1871, 0.0
        %v1906 = vpack.c.bf16 %v1875, %v1874
        %v1907 = vpack.c.bf16 %v1877, %v1876
        %v1908 = vpack.c.bf16 %v1879, %v1878
        %v1909 = vpack.c.bf16 %v1881, %v1880
        %v1910 = vpack.c.bf16 %v1883, %v1882
        %v1911 = vpack.c.bf16 %v1885, %v1884
        %v1912 = vpack.c.bf16 %v1887, %v1886
        %v1913 = vpack.c.bf16 %v1889, %v1888
        %v1914 = vpack.c.bf16 %v1891, %v1890
        %v1915 = vpack.c.bf16 %v1893, %v1892
        %v1916 = vpack.c.bf16 %v1895, %v1894
        %v1917 = vpack.c.bf16 %v1897, %v1896
        %v1918 = vpack.c.bf16 %v1899, %v1898
        %v1919 = vpack.c.bf16 %v1901, %v1900
        %v1920 = vpack.c.bf16 %v1903, %v1902
        %v1921 = vpack.c.bf16 %v1905, %v1904
        %v1923 = vshrl.u32 %v1906, 16
        %v1925 = vrot.slane %v1923, 7
        %v1926 = vshll.u32 %v1906, 16
        %v1928 = vor.u32 %v1925, %v1926
        %v1930 = vshrl.u32 %v1907, 16
        %v1932 = vrot.slane %v1930, 7
        %v1933 = vshll.u32 %v1907, 16
        %v1935 = vor.u32 %v1932, %v1933
        %v1937 = vshrl.u32 %v1908, 16
        %v1939 = vrot.slane %v1937, 7
        %v1940 = vshll.u32 %v1908, 16
        %v1942 = vor.u32 %v1939, %v1940
        %v1944 = vshrl.u32 %v1909, 16
        %v1946 = vrot.slane %v1944, 7
        %v1947 = vshll.u32 %v1909, 16
        %v1949 = vor.u32 %v1946, %v1947
        %v1951 = vshrl.u32 %v1910, 16
        %v1953 = vrot.slane %v1951, 7
        %v1954 = vshll.u32 %v1910, 16
        %v1956 = vor.u32 %v1953, %v1954
        %v1958 = vshrl.u32 %v1911, 16
        %v1960 = vrot.slane %v1958, 7
        %v1961 = vshll.u32 %v1911, 16
        %v1963 = vor.u32 %v1960, %v1961
        %v1965 = vshrl.u32 %v1912, 16
        %v1967 = vrot.slane %v1965, 7
        %v1968 = vshll.u32 %v1912, 16
        %v1970 = vor.u32 %v1967, %v1968
        %v1972 = vshrl.u32 %v1913, 16
        %v1974 = vrot.slane %v1972, 7
        %v1975 = vshll.u32 %v1913, 16
        %v1977 = vor.u32 %v1974, %v1975
        %v1979 = vshrl.u32 %v1914, 16
        %v1981 = vrot.slane %v1979, 7
        %v1982 = vshll.u32 %v1914, 16
        %v1984 = vor.u32 %v1981, %v1982
        %v1986 = vshrl.u32 %v1915, 16
        %v1988 = vrot.slane %v1986, 7
        %v1989 = vshll.u32 %v1915, 16
        %v1991 = vor.u32 %v1988, %v1989
        %v1993 = vshrl.u32 %v1916, 16
        %v1995 = vrot.slane %v1993, 7
        %v1996 = vshll.u32 %v1916, 16
        %v1998 = vor.u32 %v1995, %v1996
        %v2000 = vshrl.u32 %v1917, 16
        %v2002 = vrot.slane %v2000, 7
        %v2003 = vshll.u32 %v1917, 16
        %v2005 = vor.u32 %v2002, %v2003
        %v2007 = vshrl.u32 %v1918, 16
        %v2009 = vrot.slane %v2007, 7
        %v2010 = vshll.u32 %v1918, 16
        %v2012 = vor.u32 %v2009, %v2010
        %v2014 = vshrl.u32 %v1919, 16
        %v2016 = vrot.slane %v2014, 7
        %v2017 = vshll.u32 %v1919, 16
        %v2019 = vor.u32 %v2016, %v2017
        %v2021 = vshrl.u32 %v1920, 16
        %v2023 = vrot.slane %v2021, 7
        %v2024 = vshll.u32 %v1920, 16
        %v2026 = vor.u32 %v2023, %v2024
        %v2028 = vshrl.u32 %v1921, 16
        %v2030 = vrot.slane %v2028, 7
        %v2031 = vshll.u32 %v1921, 16
        %v2033 = vor.u32 %v2030, %v2031
        %v2066 = vsel %vm467, 0, %v1928
        %v2067 = vsel %vm467, 0, %v1935
        %v2068 = vsel %vm467, 0, %v1942
        %v2069 = vsel %vm467, 0, %v1949
        %v2070 = vsel %vm467, 0, %v1956
        %v2071 = vsel %vm467, 0, %v1963
        %v2072 = vsel %vm467, 0, %v1970
        %v2073 = vsel %vm467, 0, %v1977
        %v2074 = vsel %vm467, 0, %v1984
        %v2075 = vsel %vm467, 0, %v1991
        %v2076 = vsel %vm467, 0, %v1998
        %v2077 = vsel %vm467, 0, %v2005
        %v2078 = vsel %vm467, 0, %v2012
        %v2079 = vsel %vm467, 0, %v2019
        %v2080 = vsel %vm467, 0, %v2026
        %v2081 = vsel %vm467, 0, %v2033
        %v2082 = vsel %vm467, %v1925, 0
        %v2083 = vsel %vm467, %v1932, 0
        %v2084 = vsel %vm467, %v1939, 0
        %v2085 = vsel %vm467, %v1946, 0
        %v2086 = vsel %vm467, %v1953, 0
        %v2087 = vsel %vm467, %v1960, 0
        %v2088 = vsel %vm467, %v1967, 0
        %v2089 = vsel %vm467, %v1974, 0
        %v2090 = vsel %vm467, %v1981, 0
        %v2091 = vsel %vm467, %v1988, 0
        %v2092 = vsel %vm467, %v1995, 0
        %v2093 = vsel %vm467, %v2002, 0
        %v2094 = vsel %vm467, %v2009, 0
        %v2095 = vsel %vm467, %v2016, 0
        %v2096 = vsel %vm467, %v2023, 0
        %v2097 = vsel %vm467, %v2030, 0
        %v2099 = vshrl.u32 %v2066, 16
        %v2101 = vshll.u32 %v2066, 16
        %v2103 = vrot.slane %v2101, 1
        %v2104 = vor.u32 %v2099, %v2103
        %v2106 = vshll.u32 %v2082, 16
        %v2108 = vrot.slane %v2106, 1
        %v2109 = vsel %vm500, %v2104, %v2108
        %v2111 = vshrl.u32 %v2067, 16
        %v2113 = vshll.u32 %v2067, 16
        %v2115 = vrot.slane %v2113, 1
        %v2116 = vor.u32 %v2111, %v2115
        %v2118 = vshll.u32 %v2083, 16
        %v2120 = vrot.slane %v2118, 1
        %v2121 = vsel %vm500, %v2116, %v2120
        %v2123 = vshrl.u32 %v2068, 16
        %v2125 = vshll.u32 %v2068, 16
        %v2127 = vrot.slane %v2125, 1
        %v2128 = vor.u32 %v2123, %v2127
        %v2130 = vshll.u32 %v2084, 16
        %v2132 = vrot.slane %v2130, 1
        %v2133 = vsel %vm500, %v2128, %v2132
        %v2135 = vshrl.u32 %v2069, 16
        %v2137 = vshll.u32 %v2069, 16
        %v2139 = vrot.slane %v2137, 1
        %v2140 = vor.u32 %v2135, %v2139
        %v2142 = vshll.u32 %v2085, 16
        %v2144 = vrot.slane %v2142, 1
        %v2145 = vsel %vm500, %v2140, %v2144
        %v2147 = vshrl.u32 %v2070, 16
        %v2149 = vshll.u32 %v2070, 16
        %v2151 = vrot.slane %v2149, 1
        %v2152 = vor.u32 %v2147, %v2151
        %v2154 = vshll.u32 %v2086, 16
        %v2156 = vrot.slane %v2154, 1
        %v2157 = vsel %vm500, %v2152, %v2156
        %v2159 = vshrl.u32 %v2071, 16
        %v2161 = vshll.u32 %v2071, 16
        %v2163 = vrot.slane %v2161, 1
        %v2164 = vor.u32 %v2159, %v2163
        %v2166 = vshll.u32 %v2087, 16
        %v2168 = vrot.slane %v2166, 1
        %v2169 = vsel %vm500, %v2164, %v2168
        %v2171 = vshrl.u32 %v2072, 16
        %v2173 = vshll.u32 %v2072, 16
        %v2175 = vrot.slane %v2173, 1
        %v2176 = vor.u32 %v2171, %v2175
        %v2178 = vshll.u32 %v2088, 16
        %v2180 = vrot.slane %v2178, 1
        %v2181 = vsel %vm500, %v2176, %v2180
        %v2183 = vshrl.u32 %v2073, 16
        %v2185 = vshll.u32 %v2073, 16
        %v2187 = vrot.slane %v2185, 1
        %v2188 = vor.u32 %v2183, %v2187
        %v2190 = vshll.u32 %v2089, 16
        %v2192 = vrot.slane %v2190, 1
        %v2193 = vsel %vm500, %v2188, %v2192
        %v2195 = vshrl.u32 %v2074, 16
        %v2197 = vshll.u32 %v2074, 16
        %v2199 = vrot.slane %v2197, 1
        %v2200 = vor.u32 %v2195, %v2199
        %v2202 = vshll.u32 %v2090, 16
        %v2204 = vrot.slane %v2202, 1
        %v2205 = vsel %vm500, %v2200, %v2204
        %v2207 = vshrl.u32 %v2075, 16
        %v2209 = vshll.u32 %v2075, 16
        %v2211 = vrot.slane %v2209, 1
        %v2212 = vor.u32 %v2207, %v2211
        %v2214 = vshll.u32 %v2091, 16
        %v2216 = vrot.slane %v2214, 1
        %v2217 = vsel %vm500, %v2212, %v2216
        %v2219 = vshrl.u32 %v2076, 16
        %v2221 = vshll.u32 %v2076, 16
        %v2223 = vrot.slane %v2221, 1
        %v2224 = vor.u32 %v2219, %v2223
        %v2226 = vshll.u32 %v2092, 16
        %v2228 = vrot.slane %v2226, 1
        %v2229 = vsel %vm500, %v2224, %v2228
        %v2231 = vshrl.u32 %v2077, 16
        %v2233 = vshll.u32 %v2077, 16
        %v2235 = vrot.slane %v2233, 1
        %v2236 = vor.u32 %v2231, %v2235
        %v2238 = vshll.u32 %v2093, 16
        %v2240 = vrot.slane %v2238, 1
        %v2241 = vsel %vm500, %v2236, %v2240
        %v2243 = vshrl.u32 %v2078, 16
        %v2245 = vshll.u32 %v2078, 16
        %v2247 = vrot.slane %v2245, 1
        %v2248 = vor.u32 %v2243, %v2247
        %v2250 = vshll.u32 %v2094, 16
        %v2252 = vrot.slane %v2250, 1
        %v2253 = vsel %vm500, %v2248, %v2252
        %v2255 = vshrl.u32 %v2079, 16
        %v2257 = vshll.u32 %v2079, 16
        %v2259 = vrot.slane %v2257, 1
        %v2260 = vor.u32 %v2255, %v2259
        %v2262 = vshll.u32 %v2095, 16
        %v2264 = vrot.slane %v2262, 1
        %v2265 = vsel %vm500, %v2260, %v2264
        %v2267 = vshrl.u32 %v2080, 16
        %v2269 = vshll.u32 %v2080, 16
        %v2271 = vrot.slane %v2269, 1
        %v2272 = vor.u32 %v2267, %v2271
        %v2274 = vshll.u32 %v2096, 16
        %v2276 = vrot.slane %v2274, 1
        %v2277 = vsel %vm500, %v2272, %v2276
        %v2324 = vrot.slane %v2066, 1
        %v2325 = vrot.slane %v2082, 1
        %v2326 = vsel %vm720, %v2324, %v2325
        %v2327 = vrot.slane %v2067, 1
        %v2328 = vrot.slane %v2083, 1
        %v2329 = vsel %vm720, %v2327, %v2328
        %v2330 = vrot.slane %v2068, 1
        %v2331 = vrot.slane %v2084, 1
        %v2332 = vsel %vm720, %v2330, %v2331
        %v2333 = vrot.slane %v2069, 1
        %v2334 = vrot.slane %v2085, 1
        %v2335 = vsel %vm720, %v2333, %v2334
        %v2336 = vrot.slane %v2070, 1
        %v2337 = vrot.slane %v2086, 1
        %v2338 = vsel %vm720, %v2336, %v2337
        %v2339 = vrot.slane %v2071, 1
        %v2340 = vrot.slane %v2087, 1
        %v2341 = vsel %vm720, %v2339, %v2340
        %v2342 = vrot.slane %v2072, 1
        %v2343 = vrot.slane %v2088, 1
        %v2344 = vsel %vm720, %v2342, %v2343
        %v2345 = vrot.slane %v2073, 1
        %v2346 = vrot.slane %v2089, 1
        %v2347 = vsel %vm720, %v2345, %v2346
        %v2348 = vrot.slane %v2074, 1
        %v2349 = vrot.slane %v2090, 1
        %v2350 = vsel %vm720, %v2348, %v2349
        %v2351 = vrot.slane %v2075, 1
        %v2352 = vrot.slane %v2091, 1
        %v2353 = vsel %vm720, %v2351, %v2352
        %v2354 = vrot.slane %v2076, 1
        %v2355 = vrot.slane %v2092, 1
        %v2356 = vsel %vm720, %v2354, %v2355
        %v2357 = vrot.slane %v2077, 1
        %v2358 = vrot.slane %v2093, 1
        %v2359 = vsel %vm720, %v2357, %v2358
        %v2360 = vrot.slane %v2078, 1
        %v2361 = vrot.slane %v2094, 1
        %v2362 = vsel %vm720, %v2360, %v2361
        %v2363 = vrot.slane %v2079, 1
        %v2364 = vrot.slane %v2095, 1
        %v2365 = vsel %vm720, %v2363, %v2364
        %v2366 = vrot.slane %v2080, 1
        %v2367 = vrot.slane %v2096, 1
        %v2368 = vsel %vm720, %v2366, %v2367
        %v2386 = vshrl.u32 %v2081, 16
        %v2388 = vshll.u32 %v2081, 16
        %v2390 = vrot.slane %v2388, 1
        %v2391 = vor.u32 %v2386, %v2390
        %v2393 = vshll.u32 %v2097, 16
        %v2395 = vrot.slane %v2393, 1
        %v2396 = vsel %vm500, %v2391, %v2395
        %v2400 = vrot.slane %v2081, 1
        %v2401 = vrot.slane %v2097, 1
        %v2402 = vsel %vm720, %v2400, %v2401
        %v2404 = vld [vmem:[#allocation7] sm:$0xf]
        %v2405 = vld [vmem:[#allocation7 + $0x4] sm:$0xf]
        %v2406 = vld [vmem:[#allocation7 + $0x8] sm:$0xf]
        %v2407 = vld [vmem:[#allocation7 + $0xc] sm:$0xf]
        %v2408 = vld [vmem:[#allocation7 + $0x10] sm:$0xf]
        %v2409 = vld [vmem:[#allocation7 + $0x14] sm:$0xf]
        %v2410 = vld [vmem:[#allocation7 + $0x18] sm:$0xf]
        %v2411 = vld [vmem:[#allocation7 + $0x1c] sm:$0xf]
        %v2412 = vld [vmem:[#allocation7 + $0x20] sm:$0xf]
        %v2413 = vld [vmem:[#allocation7 + $0x24] sm:$0xf]
        %v2414 = vld [vmem:[#allocation7 + $0x28] sm:$0xf]
        %v2415 = vld [vmem:[#allocation7 + $0x2c] sm:$0xf]
        %v2416 = vld [vmem:[#allocation7 + $0x30] sm:$0xf]
        %v2417 = vld [vmem:[#allocation7 + $0x34] sm:$0xf]
        %v2418 = vld [vmem:[#allocation7 + $0x38] sm:$0xf]
        %v2419 = vld [vmem:[#allocation7 + $0x3c] sm:$0xf]
        %v2420 = vld [vmem:[#allocation7 + $0x40] sm:$0xf]
        %v2421 = vld [vmem:[#allocation7 + $0x44] sm:$0xf]
        %v2422 = vld [vmem:[#allocation7 + $0x48] sm:$0xf]
        %v2423 = vld [vmem:[#allocation7 + $0x4c] sm:$0xf]
        %v2424 = vld [vmem:[#allocation7 + $0x50] sm:$0xf]
        %v2425 = vld [vmem:[#allocation7 + $0x54] sm:$0xf]
        %v2426 = vld [vmem:[#allocation7 + $0x58] sm:$0xf]
        %v2427 = vld [vmem:[#allocation7 + $0x5c] sm:$0xf]
        %v2428 = vld [vmem:[#allocation7 + $0x60] sm:$0xf]
        %v2429 = vld [vmem:[#allocation7 + $0x64] sm:$0xf]
        %v2430 = vld [vmem:[#allocation7 + $0x68] sm:$0xf]
        %v2431 = vld [vmem:[#allocation7 + $0x6c] sm:$0xf]
        %v2432 = vld [vmem:[#allocation7 + $0x70] sm:$0xf]
        %v2433 = vld [vmem:[#allocation7 + $0x74] sm:$0xf]
        %v2434 = vld [vmem:[#allocation7 + $0x78] sm:$0xf]
        %v2435 = vld [vmem:[#allocation7 + $0x7c] sm:$0xf]
        %v2436 = vld [vmem:[#allocation7 + $0x80] sm:$0xf]
        %v2437 = vld [vmem:[#allocation7 + $0x84] sm:$0xf]
        %v2438 = vld [vmem:[#allocation7 + $0x88] sm:$0xf]
        %v2439 = vld [vmem:[#allocation7 + $0x8c] sm:$0xf]
        %v2440 = vld [vmem:[#allocation7 + $0x90] sm:$0xf]
        %v2441 = vld [vmem:[#allocation7 + $0x94] sm:$0xf]
        %v2442 = vld [vmem:[#allocation7 + $0x98] sm:$0xf]
        %v2443 = vld [vmem:[#allocation7 + $0x9c] sm:$0xf]
        %v2444 = vld [vmem:[#allocation7 + $0xa0] sm:$0xf]
        %v2445 = vld [vmem:[#allocation7 + $0xa4] sm:$0xf]
        %v2446 = vld [vmem:[#allocation7 + $0xa8] sm:$0xf]
        %v2447 = vld [vmem:[#allocation7 + $0xac] sm:$0xf]
        %v2448 = vld [vmem:[#allocation7 + $0xb0] sm:$0xf]
        %v2449 = vld [vmem:[#allocation7 + $0xb4] sm:$0xf]
        %v2450 = vld [vmem:[#allocation7 + $0xb8] sm:$0xf]
        %v2451 = vld [vmem:[#allocation7 + $0xbc] sm:$0xf]
        %v2452 = vld [vmem:[#allocation7 + $0xc0] sm:$0xf]
        %v2453 = vld [vmem:[#allocation7 + $0xc4] sm:$0xf]
        %v2454 = vld [vmem:[#allocation7 + $0xc8] sm:$0xf]
        %v2455 = vld [vmem:[#allocation7 + $0xcc] sm:$0xf]
        %v2456 = vld [vmem:[#allocation7 + $0xd0] sm:$0xf]
        %v2457 = vld [vmem:[#allocation7 + $0xd4] sm:$0xf]
        %v2458 = vld [vmem:[#allocation7 + $0xd8] sm:$0xf]
        %v2459 = vld [vmem:[#allocation7 + $0xdc] sm:$0xf]
        %v2460 = vld [vmem:[#allocation7 + $0xe0] sm:$0xf]
        %v2461 = vld [vmem:[#allocation7 + $0xe4] sm:$0xf]
        %v2462 = vld [vmem:[#allocation7 + $0xe8] sm:$0xf]
        %v2463 = vld [vmem:[#allocation7 + $0xec] sm:$0xf]
        %v2464 = vld [vmem:[#allocation7 + $0xf0] sm:$0xf]
        %v2465 = vld [vmem:[#allocation7 + $0xf4] sm:$0xf]
        %v2466 = vld [vmem:[#allocation7 + $0xf8] sm:$0xf]
        %v2467 = vld [vmem:[#allocation7 + $0xfc] sm:$0xf]
        %v2468 = vld [vmem:[#allocation7 + $0x100] sm:$0xf]
        %v2469 = vld [vmem:[#allocation7 + $0x104] sm:$0xf]
        %v2470 = vld [vmem:[#allocation7 + $0x108] sm:$0xf]
        %v2471 = vld [vmem:[#allocation7 + $0x10c] sm:$0xf]
        %v2472 = vld [vmem:[#allocation7 + $0x110] sm:$0xf]
        %v2473 = vld [vmem:[#allocation7 + $0x114] sm:$0xf]
        %v2474 = vld [vmem:[#allocation7 + $0x118] sm:$0xf]
        %v2475 = vld [vmem:[#allocation7 + $0x11c] sm:$0xf]
        %v2476 = vld [vmem:[#allocation7 + $0x120] sm:$0xf]
        %v2477 = vld [vmem:[#allocation7 + $0x124] sm:$0xf]
        %v2478 = vld [vmem:[#allocation7 + $0x128] sm:$0xf]
        %v2479 = vld [vmem:[#allocation7 + $0x12c] sm:$0xf]
        %v2480 = vld [vmem:[#allocation7 + $0x130] sm:$0xf]
        %v2481 = vld [vmem:[#allocation7 + $0x134] sm:$0xf]
        %v2482 = vld [vmem:[#allocation7 + $0x138] sm:$0xf]
        %v2483 = vld [vmem:[#allocation7 + $0x13c] sm:$0xf]
        %v2484 = vld [vmem:[#allocation7 + $0x140] sm:$0xf]
        %v2485 = vld [vmem:[#allocation7 + $0x144] sm:$0xf]
        %v2486 = vld [vmem:[#allocation7 + $0x148] sm:$0xf]
        %v2487 = vld [vmem:[#allocation7 + $0x14c] sm:$0xf]
        %v2488 = vld [vmem:[#allocation7 + $0x150] sm:$0xf]
        %v2489 = vld [vmem:[#allocation7 + $0x154] sm:$0xf]
        %v2490 = vld [vmem:[#allocation7 + $0x158] sm:$0xf]
        %v2491 = vld [vmem:[#allocation7 + $0x15c] sm:$0xf]
        %v2492 = vld [vmem:[#allocation7 + $0x160] sm:$0xf]
        %v2493 = vld [vmem:[#allocation7 + $0x164] sm:$0xf]
        %v2494 = vld [vmem:[#allocation7 + $0x168] sm:$0xf]
        %v2495 = vld [vmem:[#allocation7 + $0x16c] sm:$0xf]
        %v2496 = vld [vmem:[#allocation7 + $0x170] sm:$0xf]
        %v2497 = vld [vmem:[#allocation7 + $0x174] sm:$0xf]
        %v2498 = vld [vmem:[#allocation7 + $0x178] sm:$0xf]
        %v2499 = vld [vmem:[#allocation7 + $0x17c] sm:$0xf]
        %v2500 = vld [vmem:[#allocation7 + $0x180] sm:$0xf]
        %v2501 = vld [vmem:[#allocation7 + $0x184] sm:$0xf]
        %v2502 = vld [vmem:[#allocation7 + $0x188] sm:$0xf]
        %v2503 = vld [vmem:[#allocation7 + $0x18c] sm:$0xf]
        %v2504 = vld [vmem:[#allocation7 + $0x190] sm:$0xf]
        %v2505 = vld [vmem:[#allocation7 + $0x194] sm:$0xf]
        %v2506 = vld [vmem:[#allocation7 + $0x198] sm:$0xf]
        %v2507 = vld [vmem:[#allocation7 + $0x19c] sm:$0xf]
        %v2508 = vld [vmem:[#allocation7 + $0x1a0] sm:$0xf]
        %v2509 = vld [vmem:[#allocation7 + $0x1a4] sm:$0xf]
        %v2510 = vld [vmem:[#allocation7 + $0x1a8] sm:$0xf]
        %v2511 = vld [vmem:[#allocation7 + $0x1ac] sm:$0xf]
        %v2512 = vld [vmem:[#allocation7 + $0x1b0] sm:$0xf]
        %v2513 = vld [vmem:[#allocation7 + $0x1b4] sm:$0xf]
        %v2514 = vld [vmem:[#allocation7 + $0x1b8] sm:$0xf]
        %v2515 = vld [vmem:[#allocation7 + $0x1bc] sm:$0xf]
        %v2516 = vld [vmem:[#allocation7 + $0x1c0] sm:$0xf]
        %v2517 = vld [vmem:[#allocation7 + $0x1c4] sm:$0xf]
        %v2518 = vld [vmem:[#allocation7 + $0x1c8] sm:$0xf]
        %v2519 = vld [vmem:[#allocation7 + $0x1cc] sm:$0xf]
        %v2520 = vld [vmem:[#allocation7 + $0x1d0] sm:$0xf]
        %v2521 = vld [vmem:[#allocation7 + $0x1d4] sm:$0xf]
        %v2522 = vld [vmem:[#allocation7 + $0x1d8] sm:$0xf]
        %v2523 = vld [vmem:[#allocation7 + $0x1dc] sm:$0xf]
        %v2524 = vld [vmem:[#allocation7 + $0x1e0] sm:$0xf]
        %v2525 = vld [vmem:[#allocation7 + $0x1e4] sm:$0xf]
        %v2526 = vld [vmem:[#allocation7 + $0x1e8] sm:$0xf]
        %v2527 = vld [vmem:[#allocation7 + $0x1ec] sm:$0xf]
        %v2528 = vld [vmem:[#allocation7 + $0x1f0] sm:$0xf]
        %v2529 = vld [vmem:[#allocation7 + $0x1f4] sm:$0xf]
        %v2530 = vld [vmem:[#allocation7 + $0x1f8] sm:$0xf]
        %v2531 = vld [vmem:[#allocation7 + $0x1fc] sm:$0xf]
        %v2532 = vld [vmem:[#allocation7 + $0x200] sm:$0xf]
        %v2533 = vld [vmem:[#allocation7 + $0x204] sm:$0xf]
        %v2534 = vld [vmem:[#allocation7 + $0x208] sm:$0xf]
        %v2535 = vld [vmem:[#allocation7 + $0x20c] sm:$0xf]
        %v2536 = vld [vmem:[#allocation7 + $0x210] sm:$0xf]
        %v2537 = vld [vmem:[#allocation7 + $0x214] sm:$0xf]
        %v2538 = vld [vmem:[#allocation7 + $0x218] sm:$0xf]
        %v2539 = vld [vmem:[#allocation7 + $0x21c] sm:$0xf]
        %v2540 = vld [vmem:[#allocation7 + $0x220] sm:$0xf]
        %v2541 = vld [vmem:[#allocation7 + $0x224] sm:$0xf]
        %v2542 = vld [vmem:[#allocation7 + $0x228] sm:$0xf]
        %v2543 = vld [vmem:[#allocation7 + $0x22c] sm:$0xf]
        %v2544 = vld [vmem:[#allocation7 + $0x230] sm:$0xf]
        %v2545 = vld [vmem:[#allocation7 + $0x234] sm:$0xf]
        %v2546 = vld [vmem:[#allocation7 + $0x238] sm:$0xf]
        %v2547 = vld [vmem:[#allocation7 + $0x23c] sm:$0xf]
        %v2548 = vld [vmem:[#allocation7 + $0x240] sm:$0xf]
        %v2549 = vld [vmem:[#allocation7 + $0x244] sm:$0xf]
        %v2550 = vld [vmem:[#allocation7 + $0x248] sm:$0xf]
        %v2551 = vld [vmem:[#allocation7 + $0x24c] sm:$0xf]
        %v2552 = vld [vmem:[#allocation7 + $0x250] sm:$0xf]
        %v2553 = vld [vmem:[#allocation7 + $0x254] sm:$0xf]
        %v2554 = vld [vmem:[#allocation7 + $0x258] sm:$0xf]
        %v2555 = vld [vmem:[#allocation7 + $0x25c] sm:$0xf]
        %v2556 = vld [vmem:[%s4] sm:$0x1]
        %v2558 = vlaneseq
        %v2559 = vshrl.u32 %v2558, 7
        %v2560 = vsub.s32 0, %v2559
        %v2561 = vrot.slane %v2556, %v2560
        %v2715 = vunpack.c.l.b16 %v2404
        %v2716 = vunpack.c.l.b16 %v2405
        %v2717 = vunpack.c.l.b16 %v2406
        %v2718 = vunpack.c.l.b16 %v2407
        %v2719 = vunpack.c.l.b16 %v2408
        %v2720 = vunpack.c.l.b16 %v2409
        %v2721 = vunpack.c.l.b16 %v2410
        %v2722 = vunpack.c.l.b16 %v2411
        %v2723 = vunpack.c.l.b16 %v2412
        %v2724 = vunpack.c.l.b16 %v2413
        %v2725 = vunpack.c.l.b16 %v2414
        %v2726 = vunpack.c.l.b16 %v2415
        %v2727 = vunpack.c.l.b16 %v2416
        %v2728 = vunpack.c.l.b16 %v2417
        %v2729 = vunpack.c.l.b16 %v2418
        %v2730 = vunpack.c.l.b16 %v2419
        %v2731 = vunpack.c.l.b16 %v2420
        %v2732 = vunpack.c.l.b16 %v2421
        %v2733 = vunpack.c.l.b16 %v2422
        %v2734 = vunpack.c.l.b16 %v2423
        %v2735 = vunpack.c.l.b16 %v2424
        %v2736 = vunpack.c.l.b16 %v2425
        %v2737 = vunpack.c.l.b16 %v2426
        %v2738 = vunpack.c.l.b16 %v2427
        %v2739 = vunpack.c.l.b16 %v2428
        %v2740 = vunpack.c.l.b16 %v2429
        %v2741 = vunpack.c.l.b16 %v2430
        %v2742 = vunpack.c.l.b16 %v2431
        %v2743 = vunpack.c.l.b16 %v2432
        %v2744 = vunpack.c.l.b16 %v2433
        %v2745 = vunpack.c.l.b16 %v2434
        %v2746 = vunpack.c.l.b16 %v2435
        %v2747 = vunpack.c.l.b16 %v2436
        %v2748 = vunpack.c.l.b16 %v2437
        %v2749 = vunpack.c.l.b16 %v2438
        %v2750 = vunpack.c.l.b16 %v2439
        %v2751 = vunpack.c.l.b16 %v2440
        %v2752 = vunpack.c.l.b16 %v2441
        %v2753 = vunpack.c.l.b16 %v2442
        %v2754 = vunpack.c.l.b16 %v2443
        %v2755 = vunpack.c.l.b16 %v2444
        %v2756 = vunpack.c.l.b16 %v2445
        %v2757 = vunpack.c.l.b16 %v2446
        %v2758 = vunpack.c.l.b16 %v2447
        %v2759 = vunpack.c.l.b16 %v2448
        %v2760 = vunpack.c.l.b16 %v2449
        %v2761 = vunpack.c.l.b16 %v2450
        %v2762 = vunpack.c.l.b16 %v2451
        %v2763 = vunpack.c.l.b16 %v2452
        %v2764 = vunpack.c.l.b16 %v2453
        %v2765 = vunpack.c.l.b16 %v2454
        %v2766 = vunpack.c.l.b16 %v2455
        %v2767 = vunpack.c.l.b16 %v2456
        %v2768 = vunpack.c.l.b16 %v2457
        %v2769 = vunpack.c.l.b16 %v2458
        %v2770 = vunpack.c.l.b16 %v2459
        %v2771 = vunpack.c.l.b16 %v2460
        %v2772 = vunpack.c.l.b16 %v2461
        %v2773 = vunpack.c.l.b16 %v2462
        %v2774 = vunpack.c.l.b16 %v2463
        %v2775 = vunpack.c.l.b16 %v2464
        %v2776 = vunpack.c.l.b16 %v2465
        %v2777 = vunpack.c.l.b16 %v2466
        %v2778 = vunpack.c.l.b16 %v2467
        %v2779 = vunpack.c.l.b16 %v2468
        %v2780 = vunpack.c.l.b16 %v2469
        %v2781 = vunpack.c.l.b16 %v2470
        %v2782 = vunpack.c.l.b16 %v2471
        %v2783 = vunpack.c.l.b16 %v2472
        %v2784 = vunpack.c.l.b16 %v2473
        %v2785 = vunpack.c.l.b16 %v2474
        %v2786 = vunpack.c.l.b16 %v2475
        %v2787 = vunpack.c.l.b16 %v2476
        %v2788 = vunpack.c.l.b16 %v2477
        %v2789 = vunpack.c.l.b16 %v2478
        %v2790 = vunpack.c.l.b16 %v2479
        %v2791 = vunpack.c.l.b16 %v2480
        %v2792 = vunpack.c.l.b16 %v2481
        %v2793 = vunpack.c.l.b16 %v2482
        %v2794 = vunpack.c.l.b16 %v2483
        %v2795 = vunpack.c.l.b16 %v2484
        %v2796 = vunpack.c.l.b16 %v2485
        %v2797 = vunpack.c.l.b16 %v2486
        %v2798 = vunpack.c.l.b16 %v2487
        %v2799 = vunpack.c.l.b16 %v2488
        %v2800 = vunpack.c.l.b16 %v2489
        %v2801 = vunpack.c.l.b16 %v2490
        %v2802 = vunpack.c.l.b16 %v2491
        %v2803 = vunpack.c.l.b16 %v2492
        %v2804 = vunpack.c.l.b16 %v2493
        %v2805 = vunpack.c.l.b16 %v2494
        %v2806 = vunpack.c.l.b16 %v2495
        %v2807 = vunpack.c.l.b16 %v2496
        %v2808 = vunpack.c.l.b16 %v2497
        %v2809 = vunpack.c.l.b16 %v2498
        %v2810 = vunpack.c.l.b16 %v2499
        %v2811 = vunpack.c.l.b16 %v2500
        %v2812 = vunpack.c.l.b16 %v2501
        %v2813 = vunpack.c.l.b16 %v2502
        %v2814 = vunpack.c.l.b16 %v2503
        %v2815 = vunpack.c.l.b16 %v2504
        %v2816 = vunpack.c.l.b16 %v2505
        %v2817 = vunpack.c.l.b16 %v2506
        %v2818 = vunpack.c.l.b16 %v2507
        %v2819 = vunpack.c.l.b16 %v2508
        %v2820 = vunpack.c.l.b16 %v2509
        %v2821 = vunpack.c.l.b16 %v2510
        %v2822 = vunpack.c.l.b16 %v2511
        %v2823 = vunpack.c.l.b16 %v2512
        %v2824 = vunpack.c.l.b16 %v2513
        %v2825 = vunpack.c.l.b16 %v2514
        %v2826 = vunpack.c.l.b16 %v2515
        %v2827 = vunpack.c.l.b16 %v2516
        %v2828 = vunpack.c.l.b16 %v2517
        %v2829 = vunpack.c.l.b16 %v2518
        %v2830 = vunpack.c.l.b16 %v2519
        %v2831 = vunpack.c.l.b16 %v2520
        %v2832 = vunpack.c.l.b16 %v2521
        %v2833 = vunpack.c.l.b16 %v2522
        %v2834 = vunpack.c.l.b16 %v2523
        %v2835 = vunpack.c.l.b16 %v2524
        %v2836 = vunpack.c.l.b16 %v2525
        %v2837 = vunpack.c.l.b16 %v2526
        %v2838 = vunpack.c.l.b16 %v2527
        %v2839 = vunpack.c.l.b16 %v2528
        %v2840 = vunpack.c.l.b16 %v2529
        %v2841 = vunpack.c.l.b16 %v2530
        %v2842 = vunpack.c.l.b16 %v2531
        %v2843 = vunpack.c.l.b16 %v2532
        %v2844 = vunpack.c.l.b16 %v2533
        %v2845 = vunpack.c.l.b16 %v2534
        %v2846 = vunpack.c.l.b16 %v2535
        %v2847 = vunpack.c.l.b16 %v2536
        %v2848 = vunpack.c.l.b16 %v2537
        %v2849 = vunpack.c.l.b16 %v2538
        %v2850 = vunpack.c.l.b16 %v2539
        %v2851 = vunpack.c.l.b16 %v2540
        %v2852 = vunpack.c.l.b16 %v2541
        %v2853 = vunpack.c.l.b16 %v2542
        %v2854 = vunpack.c.l.b16 %v2543
        %v2855 = vunpack.c.l.b16 %v2544
        %v2856 = vunpack.c.l.b16 %v2545
        %v2857 = vunpack.c.l.b16 %v2546
        %v2858 = vunpack.c.l.b16 %v2547
        %v2859 = vunpack.c.l.b16 %v2548
        %v2860 = vunpack.c.l.b16 %v2549
        %v2861 = vunpack.c.l.b16 %v2550
        %v2862 = vunpack.c.l.b16 %v2551
        %v2863 = vunpack.c.l.b16 %v2552
        %v2864 = vunpack.c.l.b16 %v2553
        %v2865 = vunpack.c.l.b16 %v2554
        %v2866 = vunpack.c.l.b16 %v2555
        %v2867 = vpack.c.b16 %v2716, %v2715
        %v2868 = vpack.c.b16 %v2718, %v2717
        %v2869 = vpack.c.b16 %v2720, %v2719
        %v2870 = vpack.c.b16 %v2722, %v2721
        %v2871 = vpack.c.b16 %v2724, %v2723
        %v2872 = vpack.c.b16 %v2726, %v2725
        %v2873 = vpack.c.b16 %v2728, %v2727
        %v2874 = vpack.c.b16 %v2730, %v2729
        %v2875 = vpack.c.b16 %v2732, %v2731
        %v2876 = vpack.c.b16 %v2734, %v2733
        %v2877 = vpack.c.b16 %v2736, %v2735
        %v2878 = vpack.c.b16 %v2738, %v2737
        %v2879 = vpack.c.b16 %v2740, %v2739
        %v2880 = vpack.c.b16 %v2742, %v2741
        %v2881 = vpack.c.b16 %v2744, %v2743
        %v2882 = vpack.c.b16 %v2746, %v2745
        %v2883 = vpack.c.b16 %v2748, %v2747
        %v2884 = vpack.c.b16 %v2750, %v2749
        %v2885 = vpack.c.b16 %v2752, %v2751
        %v2886 = vpack.c.b16 %v2754, %v2753
        %v2887 = vpack.c.b16 %v2756, %v2755
        %v2888 = vpack.c.b16 %v2758, %v2757
        %v2889 = vpack.c.b16 %v2760, %v2759
        %v2890 = vpack.c.b16 %v2762, %v2761
        %v2891 = vpack.c.b16 %v2764, %v2763
        %v2892 = vpack.c.b16 %v2766, %v2765
        %v2893 = vpack.c.b16 %v2768, %v2767
        %v2894 = vpack.c.b16 %v2770, %v2769
        %v2895 = vpack.c.b16 %v2772, %v2771
        %v2896 = vpack.c.b16 %v2774, %v2773
        %v2897 = vpack.c.b16 %v2776, %v2775
        %v2898 = vpack.c.b16 %v2778, %v2777
        %v2899 = vpack.c.b16 %v2780, %v2779
        %v2900 = vpack.c.b16 %v2782, %v2781
        %v2901 = vpack.c.b16 %v2784, %v2783
        %v2902 = vpack.c.b16 %v2786, %v2785
        %v2903 = vpack.c.b16 %v2788, %v2787
        %v2904 = vpack.c.b16 %v2790, %v2789
        %v2905 = vpack.c.b16 %v2792, %v2791
        %v2906 = vpack.c.b16 %v2794, %v2793
        %v2907 = vpack.c.b16 %v2796, %v2795
        %v2908 = vpack.c.b16 %v2798, %v2797
        %v2909 = vpack.c.b16 %v2800, %v2799
        %v2910 = vpack.c.b16 %v2802, %v2801
        %v2911 = vpack.c.b16 %v2804, %v2803
        %v2912 = vpack.c.b16 %v2806, %v2805
        %v2913 = vpack.c.b16 %v2808, %v2807
        %v2914 = vpack.c.b16 %v2810, %v2809
        %v2915 = vpack.c.b16 %v2812, %v2811
        %v2916 = vpack.c.b16 %v2814, %v2813
        %v2917 = vpack.c.b16 %v2816, %v2815
        %v2918 = vpack.c.b16 %v2818, %v2817
        %v2919 = vpack.c.b16 %v2820, %v2819
        %v2920 = vpack.c.b16 %v2822, %v2821
        %v2921 = vpack.c.b16 %v2824, %v2823
        %v2922 = vpack.c.b16 %v2826, %v2825
        %v2923 = vpack.c.b16 %v2828, %v2827
        %v2924 = vpack.c.b16 %v2830, %v2829
        %v2925 = vpack.c.b16 %v2832, %v2831
        %v2926 = vpack.c.b16 %v2834, %v2833
        %v2927 = vpack.c.b16 %v2836, %v2835
        %v2928 = vpack.c.b16 %v2838, %v2837
        %v2929 = vpack.c.b16 %v2840, %v2839
        %v2930 = vpack.c.b16 %v2842, %v2841
        %v2931 = vpack.c.b16 %v2844, %v2843
        %v2932 = vpack.c.b16 %v2846, %v2845
        %v2933 = vpack.c.b16 %v2848, %v2847
        %v2934 = vpack.c.b16 %v2850, %v2849
        %v2935 = vpack.c.b16 %v2852, %v2851
        %v2936 = vpack.c.b16 %v2854, %v2853
        %v2937 = vpack.c.b16 %v2856, %v2855
        %v2938 = vpack.c.b16 %v2858, %v2857
        %v2939 = vpack.c.b16 %v2860, %v2859
        %v2940 = vpack.c.b16 %v2862, %v2861
        %v2941 = vpack.c.b16 %v2864, %v2863
        %v2942 = vpack.c.b16 %v2866, %v2865
        %v3019 = vsel %vm883, %v305, 0
        %v3021 = vsel %vm883, %v306, 0
        %v3023 = vsel %vm883, %v307, 0
        %v3025 = vsel %vm883, %v308, 0
        %v3027 = vsel %vm883, %v309, 0
        %v3029 = vsel %vm883, %v310, 0
        %v3031 = vsel %vm883, %v311, 0
        %v3033 = vsel %vm883, %v312, 0
        %v3035 = vsel %vm883, %v313, 0
        %v3037 = vsel %vm883, %v314, 0
        %v3039 = vsel %vm883, %v315, 0
        %v3041 = vsel %vm883, %v316, 0
        %v3043 = vsel %vm883, %v317, 0
        %v3045 = vsel %vm883, %v318, 0
        %v3047 = vsel %vm883, %v319, 0
        %v3049 = vsel %vm883, %v320, 0
        %3051 = vmatprep.subr.bf16.mxu0 0
        %3052 = vmatpush1.bf16.msra.mxu0 %v2867
        %3053 = vmatprep.subr.bf16.mxu0 0
        %3054 = vmatpush1.bf16.msra.mxu0 %v2868
        %3055 = vmatprep.subr.bf16.mxu0 0
        %3056 = vmatpush1.bf16.msra.mxu0 %v2869
        %3057 = vmatprep.subr.bf16.mxu0 0
        %3058 = vmatpush1.bf16.msra.mxu0 %v2870
        %3059 = vmatprep.subr.bf16.mxu0 0
        %3060 = vmatpush1.bf16.msra.mxu0 %v2871
        %3061 = vmatprep.subr.bf16.mxu0 0
        %3062 = vmatpush1.bf16.msra.mxu0 %v2872
        %3063 = vmatprep.subr.bf16.mxu0 0
        %3064 = vmatpush1.bf16.msra.mxu0 %v2873
        %3065 = vmatprep.subr.bf16.mxu0 0
        %3066 = vmatpush1.bf16.msra.mxu0 %v2874
        %3067 = vmatprep.subr.bf16.mxu0 0
        %3068 = vmatpush1.bf16.msra.mxu0 %v2875
        %3069 = vmatprep.subr.bf16.mxu0 0
        %3070 = vmatpush1.bf16.msra.mxu0 %v2876
        %3071 = vmatprep.subr.bf16.mxu0 0
        %3072 = vmatpush1.bf16.msra.mxu0 %v2877
        %3073 = vmatprep.subr.bf16.mxu0 0
        %3074 = vmatpush1.bf16.msra.mxu0 %v2878
        %3075 = vmatprep.subr.bf16.mxu0 0
        %3076 = vmatpush1.bf16.msra.mxu0 %v2879
        %3077 = vmatprep.subr.bf16.mxu0 0
        %3078 = vmatpush1.bf16.msra.mxu0 %v2880
        %3079 = vmatprep.subr.bf16.mxu0 0
        %3080 = vmatpush1.bf16.msra.mxu0 %v2881
        %3081 = vmatprep.subr.bf16.mxu0 0
        %3082 = vmatpush1.bf16.msra.mxu0 %v2882
        %3083 = vmatprep.mubr.bf16.mxu0 %v508
        %3084 = vmatmul.mubr.bf16.gmra.mrb[0].mxu0 0
        %v3085 = vpop.f32.mrb[0].mxu0
        %v3086 = vadd.f32 %v2561, %v3085
        %v3087 = vpop.f32.mrb[0].mxu0
        %v3088 = vpop.f32.mrb[0].mxu0
        %v3089 = vadd.f32 %v2561, %v3088
        %v3090 = vpop.f32.mrb[0].mxu0
        %3091 = vmatprep.mubr.bf16.mxu0 %v2109
        %3092 = vmatmul.mubr.bf16.gmra.mrb[0].mxu0 %v2066
        %v3093 = vpop.f32.mrb[0].mxu0
        %v3094 = vadd.f32 %v2561, %v3093
        %v3095 = vpop.f32.mrb[0].mxu0
        %v3096 = vpop.f32.mrb[0].mxu0
        %v3097 = vadd.f32 %v2561, %v3096
        %v3098 = vpop.f32.mrb[0].mxu0
        %3099 = vmatprep.mubr.bf16.mxu0 %v2121
        %3100 = vmatmul.mubr.bf16.gmra.mrb[0].mxu0 %v2067
        %v3101 = vpop.f32.mrb[0].mxu0
        %v3102 = vadd.f32 %v2561, %v3101
        %v3103 = vpop.f32.mrb[0].mxu0
        %v3104 = vpop.f32.mrb[0].mxu0
        %v3105 = vadd.f32 %v2561, %v3104
        %v3106 = vpop.f32.mrb[0].mxu0
        %3107 = vmatprep.mubr.bf16.mxu0 %v2133
        %3108 = vmatmul.mubr.bf16.gmra.mrb[0].mxu0 %v2068
        %v3109 = vpop.f32.mrb[0].mxu0
        %v3110 = vadd.f32 %v2561, %v3109
        %v3111 = vpop.f32.mrb[0].mxu0
        %v3112 = vpop.f32.mrb[0].mxu0
        %v3113 = vadd.f32 %v2561, %v3112
        %v3114 = vpop.f32.mrb[0].mxu0
        %3115 = vmatprep.mubr.bf16.mxu0 %v2145
        %3116 = vmatmul.mubr.bf16.gmra.mrb[0].mxu0 %v2069
        %v3117 = vpop.f32.mrb[0].mxu0
        %v3118 = vadd.f32 %v2561, %v3117
        %v3119 = vpop.f32.mrb[0].mxu0
        %v3120 = vpop.f32.mrb[0].mxu0
        %v3121 = vadd.f32 %v2561, %v3120
        %v3122 = vpop.f32.mrb[0].mxu0
        %3123 = vmatprep.mubr.bf16.mxu0 %v2157
        %3124 = vmatmul.mubr.bf16.gmra.mrb[0].mxu0 %v2070
        %v3125 = vpop.f32.mrb[0].mxu0
        %v3126 = vadd.f32 %v2561, %v3125
        %v3127 = vpop.f32.mrb[0].mxu0
        %v3128 = vpop.f32.mrb[0].mxu0
        %v3129 = vadd.f32 %v2561, %v3128
        %v3130 = vpop.f32.mrb[0].mxu0
        %3131 = vmatprep.mubr.bf16.mxu0 %v2169
        %3132 = vmatmul.mubr.bf16.gmra.mrb[0].mxu0 %v2071
        %v3133 = vpop.f32.mrb[0].mxu0
        %v3134 = vadd.f32 %v2561, %v3133
        %v3135 = vpop.f32.mrb[0].mxu0
        %v3136 = vpop.f32.mrb[0].mxu0
        %v3137 = vadd.f32 %v2561, %v3136
        %v3138 = vpop.f32.mrb[0].mxu0
        %3139 = vmatprep.mubr.bf16.mxu0 %v2181
        %3140 = vmatmul.mubr.bf16.gmra.mrb[0].mxu0 %v2072
        %v3141 = vpop.f32.mrb[0].mxu0
        %v3142 = vadd.f32 %v2561, %v3141
        %v3143 = vpop.f32.mrb[0].mxu0
        %v3144 = vpop.f32.mrb[0].mxu0
        %v3145 = vadd.f32 %v2561, %v3144
        %v3146 = vpop.f32.mrb[0].mxu0
        %3147 = vmatprep.mubr.bf16.mxu0 %v2193
        %3148 = vmatmul.mubr.bf16.gmra.mrb[0].mxu0 %v2073
        %v3149 = vpop.f32.mrb[0].mxu0
        %v3150 = vadd.f32 %v2561, %v3149
        %v3151 = vpop.f32.mrb[0].mxu0
        %v3152 = vpop.f32.mrb[0].mxu0
        %v3153 = vadd.f32 %v2561, %v3152
        %v3154 = vpop.f32.mrb[0].mxu0
        %3155 = vmatprep.mubr.bf16.mxu0 %v2205
        %3156 = vmatmul.mubr.bf16.gmra.mrb[0].mxu0 %v2074
        %v3157 = vpop.f32.mrb[0].mxu0
        %v3158 = vadd.f32 %v2561, %v3157
        %v3159 = vpop.f32.mrb[0].mxu0
        %v3160 = vpop.f32.mrb[0].mxu0
        %v3161 = vadd.f32 %v2561, %v3160
        %v3162 = vpop.f32.mrb[0].mxu0
        %3163 = vmatprep.mubr.bf16.mxu0 %v2217
        %3164 = vmatmul.mubr.bf16.gmra.mrb[0].mxu0 %v2075
        %v3165 = vpop.f32.mrb[0].mxu0
        %v3166 = vadd.f32 %v2561, %v3165
        %v3167 = vpop.f32.mrb[0].mxu0
        %v3168 = vpop.f32.mrb[0].mxu0
        %v3169 = vadd.f32 %v2561, %v3168
        %v3170 = vpop.f32.mrb[0].mxu0
        %3171 = vmatprep.mubr.bf16.mxu0 %v2229
        %3172 = vmatmul.mubr.bf16.gmra.mrb[0].mxu0 %v2076
        %v3173 = vpop.f32.mrb[0].mxu0
        %v3174 = vadd.f32 %v2561, %v3173
        %v3175 = vpop.f32.mrb[0].mxu0
        %v3176 = vpop.f32.mrb[0].mxu0
        %v3177 = vadd.f32 %v2561, %v3176
        %v3178 = vpop.f32.mrb[0].mxu0
        %3179 = vmatprep.mubr.bf16.mxu0 %v2241
        %3180 = vmatmul.mubr.bf16.gmra.mrb[0].mxu0 %v2077
        %v3181 = vpop.f32.mrb[0].mxu0
        %v3182 = vadd.f32 %v2561, %v3181
        %v3183 = vpop.f32.mrb[0].mxu0
        %v3184 = vpop.f32.mrb[0].mxu0
        %v3185 = vadd.f32 %v2561, %v3184
        %v3186 = vpop.f32.mrb[0].mxu0
        %3187 = vmatprep.mubr.bf16.mxu0 %v2253
        %3188 = vmatmul.mubr.bf16.gmra.mrb[0].mxu0 %v2078
        %v3189 = vpop.f32.mrb[0].mxu0
        %v3190 = vadd.f32 %v2561, %v3189
        %v3191 = vpop.f32.mrb[0].mxu0
        %v3192 = vpop.f32.mrb[0].mxu0
        %v3193 = vadd.f32 %v2561, %v3192
        %v3194 = vpop.f32.mrb[0].mxu0
        %3195 = vmatprep.mubr.bf16.mxu0 %v2265
        %3196 = vmatmul.mubr.bf16.gmra.mrb[0].mxu0 %v2079
        %v3197 = vpop.f32.mrb[0].mxu0
        %v3198 = vadd.f32 %v2561, %v3197
        %v3199 = vpop.f32.mrb[0].mxu0
        %v3200 = vpop.f32.mrb[0].mxu0
        %v3201 = vadd.f32 %v2561, %v3200
        %v3202 = vpop.f32.mrb[0].mxu0
        %3203 = vmatprep.mubr.bf16.mxu0 %v2277
        %3204 = vmatmul.mubr.bf16.gmra.mrb[0].mxu0 %v2080
        %v3205 = vpop.f32.mrb[0].mxu0
        %v3206 = vadd.f32 %v2561, %v3205
        %v3207 = vpop.f32.mrb[0].mxu0
        %v3208 = vpop.f32.mrb[0].mxu0
        %v3209 = vadd.f32 %v2561, %v3208
        %v3210 = vpop.f32.mrb[0].mxu0
        %3211 = vdwg.mxu0
        %3212 = vmatprep.subr.bf16.mxu0 0
        %3213 = vmatpush1.bf16.msra.mxu0 %v2883
        %3214 = vmatprep.subr.bf16.mxu0 0
        %3215 = vmatpush1.bf16.msra.mxu0 %v2884
        %3216 = vmatprep.subr.bf16.mxu0 0
        %3217 = vmatpush1.bf16.msra.mxu0 %v2885
        %3218 = vmatprep.subr.bf16.mxu0 0
        %3219 = vmatpush1.bf16.msra.mxu0 %v2886
        %3220 = vmatprep.subr.bf16.mxu0 0
        %3221 = vmatpush1.bf16.msra.mxu0 %v2887
        %3222 = vmatprep.subr.bf16.mxu0 0
        %3223 = vmatpush1.bf16.msra.mxu0 %v2888
        %3224 = vmatprep.subr.bf16.mxu0 0
        %3225 = vmatpush1.bf16.msra.mxu0 %v2889
        %3226 = vmatprep.subr.bf16.mxu0 0
        %3227 = vmatpush1.bf16.msra.mxu0 %v2890
        %3228 = vmatprep.subr.bf16.mxu0 0
        %3229 = vmatpush1.bf16.msra.mxu0 %v2891
        %3230 = vmatprep.subr.bf16.mxu0 0
        %3231 = vmatpush1.bf16.msra.mxu0 %v2892
        %3232 = vmatprep.subr.bf16.mxu0 0
        %3233 = vmatpush1.bf16.msra.mxu0 %v2893
        %3234 = vmatprep.subr.bf16.mxu0 0
        %3235 = vmatpush1.bf16.msra.mxu0 %v2894
        %3236 = vmatprep.subr.bf16.mxu0 0
        %3237 = vmatpush1.bf16.msra.mxu0 %v2895
        %3238 = vmatprep.subr.bf16.mxu0 0
        %3239 = vmatpush1.bf16.msra.mxu0 %v2896
        %3240 = vmatprep.subr.bf16.mxu0 0
        %3241 = vmatpush1.bf16.msra.mxu0 %v2897
        %3242 = vmatprep.subr.bf16.mxu0 0
        %3243 = vmatpush1.bf16.msra.mxu0 %v2898
        %3244 = vmatprep.mubr.bf16.mxu0 %v2066
        %3245 = vmatmul.mubr.bf16.gmra.mrb[0].mxu0 %v722
        %v3246 = vpop.f32.mrb[0].mxu0
        %v3247 = vadd.f32 %v3086, %v3246
        %v3248 = vpop.f32.mrb[0].mxu0
        %v3249 = vpop.f32.mrb[0].mxu0
        %v3250 = vadd.f32 %v3089, %v3249
        %v3251 = vpop.f32.mrb[0].mxu0
        %3252 = vmatprep.mubr.bf16.mxu0 %v2067
        %3253 = vmatmul.mubr.bf16.gmra.mrb[0].mxu0 %v2326
        %v3254 = vpop.f32.mrb[0].mxu0
        %v3255 = vadd.f32 %v3094, %v3254
        %v3256 = vpop.f32.mrb[0].mxu0
        %v3257 = vpop.f32.mrb[0].mxu0
        %v3258 = vadd.f32 %v3097, %v3257
        %v3259 = vpop.f32.mrb[0].mxu0
        %3260 = vmatprep.mubr.bf16.mxu0 %v2068
        %3261 = vmatmul.mubr.bf16.gmra.mrb[0].mxu0 %v2329
        %v3262 = vpop.f32.mrb[0].mxu0
        %v3263 = vadd.f32 %v3102, %v3262
        %v3264 = vpop.f32.mrb[0].mxu0
        %v3265 = vpop.f32.mrb[0].mxu0
        %v3266 = vadd.f32 %v3105, %v3265
        %v3267 = vpop.f32.mrb[0].mxu0
        %3268 = vmatprep.mubr.bf16.mxu0 %v2069
        %3269 = vmatmul.mubr.bf16.gmra.mrb[0].mxu0 %v2332
        %v3270 = vpop.f32.mrb[0].mxu0
        %v3271 = vadd.f32 %v3110, %v3270
        %v3272 = vpop.f32.mrb[0].mxu0
        %v3273 = vpop.f32.mrb[0].mxu0
        %v3274 = vadd.f32 %v3113, %v3273
        %v3275 = vpop.f32.mrb[0].mxu0
        %3276 = vmatprep.mubr.bf16.mxu0 %v2070
        %3277 = vmatmul.mubr.bf16.gmra.mrb[0].mxu0 %v2335
        %v3278 = vpop.f32.mrb[0].mxu0
        %v3279 = vadd.f32 %v3118, %v3278
        %v3280 = vpop.f32.mrb[0].mxu0
        %v3281 = vpop.f32.mrb[0].mxu0
        %v3282 = vadd.f32 %v3121, %v3281
        %v3283 = vpop.f32.mrb[0].mxu0
        %3284 = vmatprep.mubr.bf16.mxu0 %v2071
        %3285 = vmatmul.mubr.bf16.gmra.mrb[0].mxu0 %v2338
        %v3286 = vpop.f32.mrb[0].mxu0
        %v3287 = vadd.f32 %v3126, %v3286
        %v3288 = vpop.f32.mrb[0].mxu0
        %v3289 = vpop.f32.mrb[0].mxu0
        %v3290 = vadd.f32 %v3129, %v3289
        %v3291 = vpop.f32.mrb[0].mxu0
        %3292 = vmatprep.mubr.bf16.mxu0 %v2072
        %3293 = vmatmul.mubr.bf16.gmra.mrb[0].mxu0 %v2341
        %v3294 = vpop.f32.mrb[0].mxu0
        %v3295 = vadd.f32 %v3134, %v3294
        %v3296 = vpop.f32.mrb[0].mxu0
        %v3297 = vpop.f32.mrb[0].mxu0
        %v3298 = vadd.f32 %v3137, %v3297
        %v3299 = vpop.f32.mrb[0].mxu0
        %3300 = vmatprep.mubr.bf16.mxu0 %v2073
        %3301 = vmatmul.mubr.bf16.gmra.mrb[0].mxu0 %v2344
        %v3302 = vpop.f32.mrb[0].mxu0
        %v3303 = vadd.f32 %v3142, %v3302
        %v3304 = vpop.f32.mrb[0].mxu0
        %v3305 = vpop.f32.mrb[0].mxu0
        %v3306 = vadd.f32 %v3145, %v3305
        %v3307 = vpop.f32.mrb[0].mxu0
        %3308 = vmatprep.mubr.bf16.mxu0 %v2074
        %3309 = vmatmul.mubr.bf16.gmra.mrb[0].mxu0 %v2347
        %v3310 = vpop.f32.mrb[0].mxu0
        %v3311 = vadd.f32 %v3150, %v3310
        %v3312 = vpop.f32.mrb[0].mxu0
        %v3313 = vpop.f32.mrb[0].mxu0
        %v3314 = vadd.f32 %v3153, %v3313
        %v3315 = vpop.f32.mrb[0].mxu0
        %3316 = vmatprep.mubr.bf16.mxu0 %v2075
        %3317 = vmatmul.mubr.bf16.gmra.mrb[0].mxu0 %v2350
        %v3318 = vpop.f32.mrb[0].mxu0
        %v3319 = vadd.f32 %v3158, %v3318
        %v3320 = vpop.f32.mrb[0].mxu0
        %v3321 = vpop.f32.mrb[0].mxu0
        %v3322 = vadd.f32 %v3161, %v3321
        %v3323 = vpop.f32.mrb[0].mxu0
        %3324 = vmatprep.mubr.bf16.mxu0 %v2076
        %3325 = vmatmul.mubr.bf16.gmra.mrb[0].mxu0 %v2353
        %v3326 = vpop.f32.mrb[0].mxu0
        %v3327 = vadd.f32 %v3166, %v3326
        %v3328 = vpop.f32.mrb[0].mxu0
        %v3329 = vpop.f32.mrb[0].mxu0
        %v3330 = vadd.f32 %v3169, %v3329
        %v3331 = vpop.f32.mrb[0].mxu0
        %3332 = vmatprep.mubr.bf16.mxu0 %v2077
        %3333 = vmatmul.mubr.bf16.gmra.mrb[0].mxu0 %v2356
        %v3334 = vpop.f32.mrb[0].mxu0
        %v3335 = vadd.f32 %v3174, %v3334
        %v3336 = vpop.f32.mrb[0].mxu0
        %v3337 = vpop.f32.mrb[0].mxu0
        %v3338 = vadd.f32 %v3177, %v3337
        %v3339 = vpop.f32.mrb[0].mxu0
        %3340 = vmatprep.mubr.bf16.mxu0 %v2078
        %3341 = vmatmul.mubr.bf16.gmra.mrb[0].mxu0 %v2359
        %v3342 = vpop.f32.mrb[0].mxu0
        %v3343 = vadd.f32 %v3182, %v3342
        %v3344 = vpop.f32.mrb[0].mxu0
        %v3345 = vpop.f32.mrb[0].mxu0
        %v3346 = vadd.f32 %v3185, %v3345
        %v3347 = vpop.f32.mrb[0].mxu0
        %3348 = vmatprep.mubr.bf16.mxu0 %v2079
        %3349 = vmatmul.mubr.bf16.gmra.mrb[0].mxu0 %v2362
        %v3350 = vpop.f32.mrb[0].mxu0
        %v3351 = vadd.f32 %v3190, %v3350
        %v3352 = vpop.f32.mrb[0].mxu0
        %v3353 = vpop.f32.mrb[0].mxu0
        %v3354 = vadd.f32 %v3193, %v3353
        %v3355 = vpop.f32.mrb[0].mxu0
        %3356 = vmatprep.mubr.bf16.mxu0 %v2080
        %3357 = vmatmul.mubr.bf16.gmra.mrb[0].mxu0 %v2365
        %v3358 = vpop.f32.mrb[0].mxu0
        %v3359 = vadd.f32 %v3198, %v3358
        %v3360 = vpop.f32.mrb[0].mxu0
        %v3361 = vpop.f32.mrb[0].mxu0
        %v3362 = vadd.f32 %v3201, %v3361
        %v3363 = vpop.f32.mrb[0].mxu0
        %3364 = vmatprep.mubr.bf16.mxu0 %v2081
        %3365 = vmatmul.mubr.bf16.gmra.mrb[0].mxu0 %v2368
        %v3366 = vpop.f32.mrb[0].mxu0
        %v3367 = vadd.f32 %v3206, %v3366
        %v3368 = vpop.f32.mrb[0].mxu0
        %v3369 = vpop.f32.mrb[0].mxu0
        %v3370 = vadd.f32 %v3209, %v3369
        %v3371 = vpop.f32.mrb[0].mxu0
        %3372 = vdwg.mxu0
        %3373 = vmatprep.subr.bf16.mxu0 0
        %3374 = vmatpush1.bf16.msra.mxu0 %v2899
        %3375 = vmatprep.subr.bf16.mxu0 0
        %3376 = vmatpush1.bf16.msra.mxu0 %v2900
        %3377 = vmatprep.subr.bf16.mxu0 0
        %3378 = vmatpush1.bf16.msra.mxu0 %v2901
        %3379 = vmatprep.subr.bf16.mxu0 0
        %3380 = vmatpush1.bf16.msra.mxu0 %v2902
        %3381 = vmatprep.subr.bf16.mxu0 0
        %3382 = vmatpush1.bf16.msra.mxu0 %v2903
        %3383 = vmatprep.subr.bf16.mxu0 0
        %3384 = vmatpush1.bf16.msra.mxu0 %v2904
        %3385 = vmatprep.subr.bf16.mxu0 0
        %3386 = vmatpush1.bf16.msra.mxu0 %v2905
        %3387 = vmatprep.subr.bf16.mxu0 0
        %3388 = vmatpush1.bf16.msra.mxu0 %v2906
        %3389 = vmatprep.subr.bf16.mxu0 0
        %3390 = vmatpush1.bf16.msra.mxu0 %v2907
        %3391 = vmatprep.subr.bf16.mxu0 0
        %3392 = vmatpush1.bf16.msra.mxu0 %v2908
        %3393 = vmatprep.subr.bf16.mxu0 0
        %3394 = vmatpush1.bf16.msra.mxu0 %v2909
        %3395 = vmatprep.subr.bf16.mxu0 0
        %3396 = vmatpush1.bf16.msra.mxu0 %v2910
        %3397 = vmatprep.subr.bf16.mxu0 0
        %3398 = vmatpush1.bf16.msra.mxu0 %v2911
        %3399 = vmatprep.subr.bf16.mxu0 0
        %3400 = vmatpush1.bf16.msra.mxu0 %v2912
        %3401 = vmatprep.subr.bf16.mxu0 0
        %3402 = vmatpush1.bf16.msra.mxu0 %v2913
        %3403 = vmatprep.subr.bf16.mxu0 0
        %3404 = vmatpush1.bf16.msra.mxu0 %v2914
        %3405 = vmatprep.mubr.bf16.mxu0 %v2326
        %3406 = vmatmul.mubr.bf16.gmra.mrb[0].mxu0 %v2109
        %v3407 = vpop.f32.mrb[0].mxu0
        %v3408 = vadd.f32 %v3247, %v3407
        %v3409 = vpop.f32.mrb[0].mxu0
        %v3410 = vpop.f32.mrb[0].mxu0
        %v3411 = vadd.f32 %v3250, %v3410
        %v3412 = vpop.f32.mrb[0].mxu0
        %3413 = vmatprep.mubr.bf16.mxu0 %v2329
        %3414 = vmatmul.mubr.bf16.gmra.mrb[0].mxu0 %v2121
        %v3415 = vpop.f32.mrb[0].mxu0
        %v3416 = vadd.f32 %v3255, %v3415
        %v3417 = vpop.f32.mrb[0].mxu0
        %v3418 = vpop.f32.mrb[0].mxu0
        %v3419 = vadd.f32 %v3258, %v3418
        %v3420 = vpop.f32.mrb[0].mxu0
        %3421 = vmatprep.mubr.bf16.mxu0 %v2332
        %3422 = vmatmul.mubr.bf16.gmra.mrb[0].mxu0 %v2133
        %v3423 = vpop.f32.mrb[0].mxu0
        %v3424 = vadd.f32 %v3263, %v3423
        %v3425 = vpop.f32.mrb[0].mxu0
        %v3426 = vpop.f32.mrb[0].mxu0
        %v3427 = vadd.f32 %v3266, %v3426
        %v3428 = vpop.f32.mrb[0].mxu0
        %3429 = vmatprep.mubr.bf16.mxu0 %v2335
        %3430 = vmatmul.mubr.bf16.gmra.mrb[0].mxu0 %v2145
        %v3431 = vpop.f32.mrb[0].mxu0
        %v3432 = vadd.f32 %v3271, %v3431
        %v3433 = vpop.f32.mrb[0].mxu0
        %v3434 = vpop.f32.mrb[0].mxu0
        %v3435 = vadd.f32 %v3274, %v3434
        %v3436 = vpop.f32.mrb[0].mxu0
        %3437 = vmatprep.mubr.bf16.mxu0 %v2338
        %3438 = vmatmul.mubr.bf16.gmra.mrb[0].mxu0 %v2157
        %v3439 = vpop.f32.mrb[0].mxu0
        %v3440 = vadd.f32 %v3279, %v3439
        %v3441 = vpop.f32.mrb[0].mxu0
        %v3442 = vpop.f32.mrb[0].mxu0
        %v3443 = vadd.f32 %v3282, %v3442
        %v3444 = vpop.f32.mrb[0].mxu0
        %3445 = vmatprep.mubr.bf16.mxu0 %v2341
        %3446 = vmatmul.mubr.bf16.gmra.mrb[0].mxu0 %v2169
        %v3447 = vpop.f32.mrb[0].mxu0
        %v3448 = vadd.f32 %v3287, %v3447
        %v3449 = vpop.f32.mrb[0].mxu0
        %v3450 = vpop.f32.mrb[0].mxu0
        %v3451 = vadd.f32 %v3290, %v3450
        %v3452 = vpop.f32.mrb[0].mxu0
        %3453 = vmatprep.mubr.bf16.mxu0 %v2344
        %3454 = vmatmul.mubr.bf16.gmra.mrb[0].mxu0 %v2181
        %v3455 = vpop.f32.mrb[0].mxu0
        %v3456 = vadd.f32 %v3295, %v3455
        %v3457 = vpop.f32.mrb[0].mxu0
        %v3458 = vpop.f32.mrb[0].mxu0
        %v3459 = vadd.f32 %v3298, %v3458
        %v3460 = vpop.f32.mrb[0].mxu0
        %3461 = vmatprep.mubr.bf16.mxu0 %v2347
        %3462 = vmatmul.mubr.bf16.gmra.mrb[0].mxu0 %v2193
        %v3463 = vpop.f32.mrb[0].mxu0
        %v3464 = vadd.f32 %v3303, %v3463
        %v3465 = vpop.f32.mrb[0].mxu0
        %v3466 = vpop.f32.mrb[0].mxu0
        %v3467 = vadd.f32 %v3306, %v3466
        %v3468 = vpop.f32.mrb[0].mxu0
        %3469 = vmatprep.mubr.bf16.mxu0 %v2350
        %3470 = vmatmul.mubr.bf16.gmra.mrb[0].mxu0 %v2205
        %v3471 = vpop.f32.mrb[0].mxu0
        %v3472 = vadd.f32 %v3311, %v3471
        %v3473 = vpop.f32.mrb[0].mxu0
        %v3474 = vpop.f32.mrb[0].mxu0
        %v3475 = vadd.f32 %v3314, %v3474
        %v3476 = vpop.f32.mrb[0].mxu0
        %3477 = vmatprep.mubr.bf16.mxu0 %v2353
        %3478 = vmatmul.mubr.bf16.gmra.mrb[0].mxu0 %v2217
        %v3479 = vpop.f32.mrb[0].mxu0
        %v3480 = vadd.f32 %v3319, %v3479
        %v3481 = vpop.f32.mrb[0].mxu0
        %v3482 = vpop.f32.mrb[0].mxu0
        %v3483 = vadd.f32 %v3322, %v3482
        %v3484 = vpop.f32.mrb[0].mxu0
        %3485 = vmatprep.mubr.bf16.mxu0 %v2356
        %3486 = vmatmul.mubr.bf16.gmra.mrb[0].mxu0 %v2229
        %v3487 = vpop.f32.mrb[0].mxu0
        %v3488 = vadd.f32 %v3327, %v3487
        %v3489 = vpop.f32.mrb[0].mxu0
        %v3490 = vpop.f32.mrb[0].mxu0
        %v3491 = vadd.f32 %v3330, %v3490
        %v3492 = vpop.f32.mrb[0].mxu0
        %3493 = vmatprep.mubr.bf16.mxu0 %v2359
        %3494 = vmatmul.mubr.bf16.gmra.mrb[0].mxu0 %v2241
        %v3495 = vpop.f32.mrb[0].mxu0
        %v3496 = vadd.f32 %v3335, %v3495
        %v3497 = vpop.f32.mrb[0].mxu0
        %v3498 = vpop.f32.mrb[0].mxu0
        %v3499 = vadd.f32 %v3338, %v3498
        %v3500 = vpop.f32.mrb[0].mxu0
        %3501 = vmatprep.mubr.bf16.mxu0 %v2362
        %3502 = vmatmul.mubr.bf16.gmra.mrb[0].mxu0 %v2253
        %v3503 = vpop.f32.mrb[0].mxu0
        %v3504 = vadd.f32 %v3343, %v3503
        %v3505 = vpop.f32.mrb[0].mxu0
        %v3506 = vpop.f32.mrb[0].mxu0
        %v3507 = vadd.f32 %v3346, %v3506
        %v3508 = vpop.f32.mrb[0].mxu0
        %3509 = vmatprep.mubr.bf16.mxu0 %v2365
        %3510 = vmatmul.mubr.bf16.gmra.mrb[0].mxu0 %v2265
        %v3511 = vpop.f32.mrb[0].mxu0
        %v3512 = vadd.f32 %v3351, %v3511
        %v3513 = vpop.f32.mrb[0].mxu0
        %v3514 = vpop.f32.mrb[0].mxu0
        %v3515 = vadd.f32 %v3354, %v3514
        %v3516 = vpop.f32.mrb[0].mxu0
        %3517 = vmatprep.mubr.bf16.mxu0 %v2368
        %3518 = vmatmul.mubr.bf16.gmra.mrb[0].mxu0 %v2277
        %v3519 = vpop.f32.mrb[0].mxu0
        %v3520 = vadd.f32 %v3359, %v3519
        %v3521 = vpop.f32.mrb[0].mxu0
        %v3522 = vpop.f32.mrb[0].mxu0
        %v3523 = vadd.f32 %v3362, %v3522
        %v3524 = vpop.f32.mrb[0].mxu0
        %3525 = vmatprep.mubr.bf16.mxu0 %v2402
        %3526 = vmatmul.mubr.bf16.gmra.mrb[0].mxu0 %v2396
        %v3527 = vpop.f32.mrb[0].mxu0
        %v3528 = vadd.f32 %v3367, %v3527
        %v3529 = vpop.f32.mrb[0].mxu0
        %v3530 = vpop.f32.mrb[0].mxu0
        %v3531 = vadd.f32 %v3370, %v3530
        %v3532 = vpop.f32.mrb[0].mxu0
        %3533 = vdwg.mxu0
        %3534 = vmatprep.subr.bf16.mxu0 0
        %3535 = vmatpush1.bf16.msra.mxu0 %v2915
        %3536 = vmatprep.subr.bf16.mxu0 0
        %3537 = vmatpush1.bf16.msra.mxu0 %v2916
        %3538 = vmatprep.subr.bf16.mxu0 0
        %3539 = vmatpush1.bf16.msra.mxu0 %v2917
        %3540 = vmatprep.subr.bf16.mxu0 0
        %3541 = vmatpush1.bf16.msra.mxu0 %v2918
        %3542 = vmatprep.subr.bf16.mxu0 0
        %3543 = vmatpush1.bf16.msra.mxu0 %v2919
        %3544 = vmatprep.subr.bf16.mxu0 0
        %3545 = vmatpush1.bf16.msra.mxu0 %v2920
        %3546 = vmatprep.subr.bf16.mxu0 0
        %3547 = vmatpush1.bf16.msra.mxu0 %v2921
        %3548 = vmatprep.subr.bf16.mxu0 0
        %3549 = vmatpush1.bf16.msra.mxu0 %v2922
        %3550 = vmatprep.subr.bf16.mxu0 0
        %3551 = vmatpush1.bf16.msra.mxu0 %v2923
        %3552 = vmatprep.subr.bf16.mxu0 0
        %3553 = vmatpush1.bf16.msra.mxu0 %v2924
        %3554 = vmatprep.subr.bf16.mxu0 0
        %3555 = vmatpush1.bf16.msra.mxu0 %v2925
        %3556 = vmatprep.subr.bf16.mxu0 0
        %3557 = vmatpush1.bf16.msra.mxu0 %v2926
        %3558 = vmatprep.subr.bf16.mxu0 0
        %3559 = vmatpush1.bf16.msra.mxu0 %v2927
        %3560 = vmatprep.subr.bf16.mxu0 0
        %3561 = vmatpush1.bf16.msra.mxu0 %v2928
        %3562 = vmatprep.subr.bf16.mxu0 0
        %3563 = vmatpush1.bf16.msra.mxu0 %v2929
        %3564 = vmatprep.subr.bf16.mxu0 0
        %3565 = vmatpush1.bf16.msra.mxu0 %v2930
        %3566 = vmatprep.mubr.bf16.mxu0 %v2121
        %3567 = vmatmul.mubr.bf16.gmra.mrb[0].mxu0 %v2067
        %v3568 = vpop.f32.mrb[0].mxu0
        %v3569 = vadd.f32 %v3408, %v3568
        %v3570 = vpop.f32.mrb[0].mxu0
        %v3571 = vpop.f32.mrb[0].mxu0
        %v3572 = vadd.f32 %v3411, %v3571
        %v3573 = vpop.f32.mrb[0].mxu0
        %3574 = vmatprep.mubr.bf16.mxu0 %v2133
        %3575 = vmatmul.mubr.bf16.gmra.mrb[0].mxu0 %v2068
        %v3576 = vpop.f32.mrb[0].mxu0
        %v3577 = vadd.f32 %v3416, %v3576
        %v3578 = vpop.f32.mrb[0].mxu0
        %v3579 = vpop.f32.mrb[0].mxu0
        %v3580 = vadd.f32 %v3419, %v3579
        %v3581 = vpop.f32.mrb[0].mxu0
        %3582 = vmatprep.mubr.bf16.mxu0 %v2145
        %3583 = vmatmul.mubr.bf16.gmra.mrb[0].mxu0 %v2069
        %v3584 = vpop.f32.mrb[0].mxu0
        %v3585 = vadd.f32 %v3424, %v3584
        %v3586 = vpop.f32.mrb[0].mxu0
        %v3587 = vpop.f32.mrb[0].mxu0
        %v3588 = vadd.f32 %v3427, %v3587
        %v3589 = vpop.f32.mrb[0].mxu0
        %3590 = vmatprep.mubr.bf16.mxu0 %v2157
        %3591 = vmatmul.mubr.bf16.gmra.mrb[0].mxu0 %v2070
        %v3592 = vpop.f32.mrb[0].mxu0
        %v3593 = vadd.f32 %v3432, %v3592
        %v3594 = vpop.f32.mrb[0].mxu0
        %v3595 = vpop.f32.mrb[0].mxu0
        %v3596 = vadd.f32 %v3435, %v3595
        %v3597 = vpop.f32.mrb[0].mxu0
        %3598 = vmatprep.mubr.bf16.mxu0 %v2169
        %3599 = vmatmul.mubr.bf16.gmra.mrb[0].mxu0 %v2071
        %v3600 = vpop.f32.mrb[0].mxu0
        %v3601 = vadd.f32 %v3440, %v3600
        %v3602 = vpop.f32.mrb[0].mxu0
        %v3603 = vpop.f32.mrb[0].mxu0
        %v3604 = vadd.f32 %v3443, %v3603
        %v3605 = vpop.f32.mrb[0].mxu0
        %3606 = vmatprep.mubr.bf16.mxu0 %v2181
        %3607 = vmatmul.mubr.bf16.gmra.mrb[0].mxu0 %v2072
        %v3608 = vpop.f32.mrb[0].mxu0
        %v3609 = vadd.f32 %v3448, %v3608
        %v3610 = vpop.f32.mrb[0].mxu0
        %v3611 = vpop.f32.mrb[0].mxu0
        %v3612 = vadd.f32 %v3451, %v3611
        %v3613 = vpop.f32.mrb[0].mxu0
        %3614 = vmatprep.mubr.bf16.mxu0 %v2193
        %3615 = vmatmul.mubr.bf16.gmra.mrb[0].mxu0 %v2073
        %v3616 = vpop.f32.mrb[0].mxu0
        %v3617 = vadd.f32 %v3456, %v3616
        %v3618 = vpop.f32.mrb[0].mxu0
        %v3619 = vpop.f32.mrb[0].mxu0
        %v3620 = vadd.f32 %v3459, %v3619
        %v3621 = vpop.f32.mrb[0].mxu0
        %3622 = vmatprep.mubr.bf16.mxu0 %v2205
        %3623 = vmatmul.mubr.bf16.gmra.mrb[0].mxu0 %v2074
        %v3624 = vpop.f32.mrb[0].mxu0
        %v3625 = vadd.f32 %v3464, %v3624
        %v3626 = vpop.f32.mrb[0].mxu0
        %v3627 = vpop.f32.mrb[0].mxu0
        %v3628 = vadd.f32 %v3467, %v3627
        %v3629 = vpop.f32.mrb[0].mxu0
        %3630 = vmatprep.mubr.bf16.mxu0 %v2217
        %3631 = vmatmul.mubr.bf16.gmra.mrb[0].mxu0 %v2075
        %v3632 = vpop.f32.mrb[0].mxu0
        %v3633 = vadd.f32 %v3472, %v3632
        %v3634 = vpop.f32.mrb[0].mxu0
        %v3635 = vpop.f32.mrb[0].mxu0
        %v3636 = vadd.f32 %v3475, %v3635
        %v3637 = vpop.f32.mrb[0].mxu0
        %3638 = vmatprep.mubr.bf16.mxu0 %v2229
        %3639 = vmatmul.mubr.bf16.gmra.mrb[0].mxu0 %v2076
        %v3640 = vpop.f32.mrb[0].mxu0
        %v3641 = vadd.f32 %v3480, %v3640
        %v3642 = vpop.f32.mrb[0].mxu0
        %v3643 = vpop.f32.mrb[0].mxu0
        %v3644 = vadd.f32 %v3483, %v3643
        %v3645 = vpop.f32.mrb[0].mxu0
        %3646 = vmatprep.mubr.bf16.mxu0 %v2241
        %3647 = vmatmul.mubr.bf16.gmra.mrb[0].mxu0 %v2077
        %v3648 = vpop.f32.mrb[0].mxu0
        %v3649 = vadd.f32 %v3488, %v3648
        %v3650 = vpop.f32.mrb[0].mxu0
        %v3651 = vpop.f32.mrb[0].mxu0
        %v3652 = vadd.f32 %v3491, %v3651
        %v3653 = vpop.f32.mrb[0].mxu0
        %3654 = vmatprep.mubr.bf16.mxu0 %v2253
        %3655 = vmatmul.mubr.bf16.gmra.mrb[0].mxu0 %v2078
        %v3656 = vpop.f32.mrb[0].mxu0
        %v3657 = vadd.f32 %v3496, %v3656
        %v3658 = vpop.f32.mrb[0].mxu0
        %v3659 = vpop.f32.mrb[0].mxu0
        %v3660 = vadd.f32 %v3499, %v3659
        %v3661 = vpop.f32.mrb[0].mxu0
        %3662 = vmatprep.mubr.bf16.mxu0 %v2265
        %3663 = vmatmul.mubr.bf16.gmra.mrb[0].mxu0 %v2079
        %v3664 = vpop.f32.mrb[0].mxu0
        %v3665 = vadd.f32 %v3504, %v3664
        %v3666 = vpop.f32.mrb[0].mxu0
        %v3667 = vpop.f32.mrb[0].mxu0
        %v3668 = vadd.f32 %v3507, %v3667
        %v3669 = vpop.f32.mrb[0].mxu0
        %3670 = vmatprep.mubr.bf16.mxu0 %v2277
        %3671 = vmatmul.mubr.bf16.gmra.mrb[0].mxu0 %v2080
        %v3672 = vpop.f32.mrb[0].mxu0
        %v3673 = vadd.f32 %v3512, %v3672
        %v3674 = vpop.f32.mrb[0].mxu0
        %v3675 = vpop.f32.mrb[0].mxu0
        %v3676 = vadd.f32 %v3515, %v3675
        %v3677 = vpop.f32.mrb[0].mxu0
        %3678 = vmatprep.mubr.bf16.mxu0 %v2396
        %3679 = vmatmul.mubr.bf16.gmra.mrb[0].mxu0 %v2081
        %v3680 = vpop.f32.mrb[0].mxu0
        %v3681 = vadd.f32 %v3520, %v3680
        %v3682 = vpop.f32.mrb[0].mxu0
        %v3683 = vpop.f32.mrb[0].mxu0
        %v3684 = vadd.f32 %v3523, %v3683
        %v3685 = vpop.f32.mrb[0].mxu0
        %3686 = vmatprep.mubr.bf16.mxu0 %v508
        %3687 = vmatmul.mubr.bf16.gmra.mrb[0].mxu0 0
        %v3688 = vpop.f32.mrb[0].mxu0
        %v3689 = vadd.f32 %v3528, %v3688
        %v3690 = vpop.f32.mrb[0].mxu0
        %v3691 = vpop.f32.mrb[0].mxu0
        %v3692 = vadd.f32 %v3531, %v3691
        %v3693 = vpop.f32.mrb[0].mxu0
        %3694 = vdwg.mxu0
        %3695 = vmatprep.subr.bf16.mxu0 0
        %3696 = vmatpush1.bf16.msra.mxu0 %v2931
        %3697 = vmatprep.subr.bf16.mxu0 0
        %3698 = vmatpush1.bf16.msra.mxu0 %v2932
        %3699 = vmatprep.subr.bf16.mxu0 0
        %3700 = vmatpush1.bf16.msra.mxu0 %v2933
        %3701 = vmatprep.subr.bf16.mxu0 0
        %3702 = vmatpush1.bf16.msra.mxu0 %v2934
        %3703 = vmatprep.subr.bf16.mxu0 0
        %3704 = vmatpush1.bf16.msra.mxu0 %v2935
        %3705 = vmatprep.subr.bf16.mxu0 0
        %3706 = vmatpush1.bf16.msra.mxu0 %v2936
        %3707 = vmatprep.subr.bf16.mxu0 0
        %3708 = vmatpush1.bf16.msra.mxu0 %v2937
        %3709 = vmatprep.subr.bf16.mxu0 0
        %3710 = vmatpush1.bf16.msra.mxu0 %v2938
        %3711 = vmatprep.subr.bf16.mxu0 0
        %3712 = vmatpush1.bf16.msra.mxu0 %v2939
        %3713 = vmatprep.subr.bf16.mxu0 0
        %3714 = vmatpush1.bf16.msra.mxu0 %v2940
        %3715 = vmatprep.subr.bf16.mxu0 0
        %3716 = vmatpush1.bf16.msra.mxu0 %v2941
        %3717 = vmatprep.subr.bf16.mxu0 0
        %3718 = vmatpush1.bf16.msra.mxu0 %v2942
        %3719 = vmatprep.subr.bf16.mxu0 0
        %3720 = vmatpush1.bf16.msra.mxu0 0
        %3721 = vmatprep.subr.bf16.mxu0 0
        %3722 = vmatpush1.bf16.msra.mxu0 0
        %3723 = vmatprep.subr.bf16.mxu0 0
        %3724 = vmatpush1.bf16.msra.mxu0 0
        %3725 = vmatprep.subr.bf16.mxu0 0
        %3726 = vmatpush1.bf16.msra.mxu0 0
        %3727 = vmatprep.mubr.bf16.mxu0 %v3019
        %3728 = vmatmul.mubr.bf16.gmra.mrb[0].mxu0 %v2329
        %v3729 = vpop.f32.mrb[0].mxu0
        %v3730 = vadd.f32 %v3569, %v3729
        %v3731 = vpop.f32.mrb[0].mxu0
        %v3732 = vpop.f32.mrb[0].mxu0
        %v3733 = vadd.f32 %v3572, %v3732
        %v3734 = vpop.f32.mrb[0].mxu0
        %3735 = vmatprep.mubr.bf16.mxu0 %v3021
        %3736 = vmatmul.mubr.bf16.gmra.mrb[0].mxu0 %v2332
        %v3737 = vpop.f32.mrb[0].mxu0
        %v3738 = vadd.f32 %v3577, %v3737
        %v3739 = vpop.f32.mrb[0].mxu0
        %v3740 = vpop.f32.mrb[0].mxu0
        %v3741 = vadd.f32 %v3580, %v3740
        %v3742 = vpop.f32.mrb[0].mxu0
        %3743 = vmatprep.mubr.bf16.mxu0 %v3023
        %3744 = vmatmul.mubr.bf16.gmra.mrb[0].mxu0 %v2335
        %v3745 = vpop.f32.mrb[0].mxu0
        %v3746 = vadd.f32 %v3585, %v3745
        %v3747 = vpop.f32.mrb[0].mxu0
        %v3748 = vpop.f32.mrb[0].mxu0
        %v3749 = vadd.f32 %v3588, %v3748
        %v3750 = vpop.f32.mrb[0].mxu0
        %3751 = vmatprep.mubr.bf16.mxu0 %v3025
        %3752 = vmatmul.mubr.bf16.gmra.mrb[0].mxu0 %v2338
        %v3753 = vpop.f32.mrb[0].mxu0
        %v3754 = vadd.f32 %v3593, %v3753
        %v3755 = vpop.f32.mrb[0].mxu0
        %v3756 = vpop.f32.mrb[0].mxu0
        %v3757 = vadd.f32 %v3596, %v3756
        %v3758 = vpop.f32.mrb[0].mxu0
        %3759 = vmatprep.mubr.bf16.mxu0 %v3027
        %3760 = vmatmul.mubr.bf16.gmra.mrb[0].mxu0 %v2341
        %v3761 = vpop.f32.mrb[0].mxu0
        %v3762 = vadd.f32 %v3601, %v3761
        %v3763 = vpop.f32.mrb[0].mxu0
        %v3764 = vpop.f32.mrb[0].mxu0
        %v3765 = vadd.f32 %v3604, %v3764
        %v3766 = vpop.f32.mrb[0].mxu0
        %3767 = vmatprep.mubr.bf16.mxu0 %v3029
        %3768 = vmatmul.mubr.bf16.gmra.mrb[0].mxu0 %v2344
        %v3769 = vpop.f32.mrb[0].mxu0
        %v3770 = vadd.f32 %v3609, %v3769
        %v3771 = vpop.f32.mrb[0].mxu0
        %v3772 = vpop.f32.mrb[0].mxu0
        %v3773 = vadd.f32 %v3612, %v3772
        %v3774 = vpop.f32.mrb[0].mxu0
        %3775 = vmatprep.mubr.bf16.mxu0 %v3031
        %3776 = vmatmul.mubr.bf16.gmra.mrb[0].mxu0 %v2347
        %v3777 = vpop.f32.mrb[0].mxu0
        %v3778 = vadd.f32 %v3617, %v3777
        %v3779 = vpop.f32.mrb[0].mxu0
        %v3780 = vpop.f32.mrb[0].mxu0
        %v3781 = vadd.f32 %v3620, %v3780
        %v3782 = vpop.f32.mrb[0].mxu0
        %3783 = vmatprep.mubr.bf16.mxu0 %v3033
        %3784 = vmatmul.mubr.bf16.gmra.mrb[0].mxu0 %v2350
        %v3785 = vpop.f32.mrb[0].mxu0
        %v3786 = vadd.f32 %v3625, %v3785
        %v3787 = vpop.f32.mrb[0].mxu0
        %v3788 = vpop.f32.mrb[0].mxu0
        %v3789 = vadd.f32 %v3628, %v3788
        %v3790 = vpop.f32.mrb[0].mxu0
        %3791 = vmatprep.mubr.bf16.mxu0 %v3035
        %3792 = vmatmul.mubr.bf16.gmra.mrb[0].mxu0 %v2353
        %v3793 = vpop.f32.mrb[0].mxu0
        %v3794 = vadd.f32 %v3633, %v3793
        %v3795 = vpop.f32.mrb[0].mxu0
        %v3796 = vpop.f32.mrb[0].mxu0
        %v3797 = vadd.f32 %v3636, %v3796
        %v3798 = vpop.f32.mrb[0].mxu0
        %3799 = vmatprep.mubr.bf16.mxu0 %v3037
        %3800 = vmatmul.mubr.bf16.gmra.mrb[0].mxu0 %v2356
        %v3801 = vpop.f32.mrb[0].mxu0
        %v3802 = vadd.f32 %v3641, %v3801
        %v3803 = vpop.f32.mrb[0].mxu0
        %v3804 = vpop.f32.mrb[0].mxu0
        %v3805 = vadd.f32 %v3644, %v3804
        %v3806 = vpop.f32.mrb[0].mxu0
        %3807 = vmatprep.mubr.bf16.mxu0 %v3039
        %3808 = vmatmul.mubr.bf16.gmra.mrb[0].mxu0 %v2359
        %v3809 = vpop.f32.mrb[0].mxu0
        %v3810 = vadd.f32 %v3649, %v3809
        %v3811 = vpop.f32.mrb[0].mxu0
        %v3812 = vpop.f32.mrb[0].mxu0
        %v3813 = vadd.f32 %v3652, %v3812
        %v3814 = vpop.f32.mrb[0].mxu0
        %3815 = vmatprep.mubr.bf16.mxu0 %v3041
        %3816 = vmatmul.mubr.bf16.gmra.mrb[0].mxu0 %v2362
        %v3817 = vpop.f32.mrb[0].mxu0
        %v3818 = vadd.f32 %v3657, %v3817
        %v3819 = vpop.f32.mrb[0].mxu0
        %v3820 = vpop.f32.mrb[0].mxu0
        %v3821 = vadd.f32 %v3660, %v3820
        %v3822 = vpop.f32.mrb[0].mxu0
        %3823 = vmatprep.mubr.bf16.mxu0 %v3043
        %3824 = vmatmul.mubr.bf16.gmra.mrb[0].mxu0 %v2365
        %v3825 = vpop.f32.mrb[0].mxu0
        %v3826 = vadd.f32 %v3665, %v3825
        %v3827 = vpop.f32.mrb[0].mxu0
        %v3828 = vpop.f32.mrb[0].mxu0
        %v3829 = vadd.f32 %v3668, %v3828
        %v3830 = vpop.f32.mrb[0].mxu0
        %3831 = vmatprep.mubr.bf16.mxu0 %v3045
        %3832 = vmatmul.mubr.bf16.gmra.mrb[0].mxu0 %v2368
        %v3833 = vpop.f32.mrb[0].mxu0
        %v3834 = vadd.f32 %v3673, %v3833
        %v3835 = vpop.f32.mrb[0].mxu0
        %v3836 = vpop.f32.mrb[0].mxu0
        %v3837 = vadd.f32 %v3676, %v3836
        %v3838 = vpop.f32.mrb[0].mxu0
        %3839 = vmatprep.mubr.bf16.mxu0 %v3047
        %3840 = vmatmul.mubr.bf16.gmra.mrb[0].mxu0 %v2402
        %v3841 = vpop.f32.mrb[0].mxu0
        %v3842 = vadd.f32 %v3681, %v3841
        %v3843 = vpop.f32.mrb[0].mxu0
        %v3844 = vpop.f32.mrb[0].mxu0
        %v3845 = vadd.f32 %v3684, %v3844
        %v3846 = vpop.f32.mrb[0].mxu0
        %3847 = vmatprep.mubr.bf16.mxu0 %v3049
        %3848 = vmatmul.mubr.bf16.gmra.mrb[0].mxu0 %v722
        %v3849 = vpop.f32.mrb[0].mxu0
        %v3850 = vadd.f32 %v3689, %v3849
        %v3851 = vpop.f32.mrb[0].mxu0
        %v3852 = vpop.f32.mrb[0].mxu0
        %v3853 = vadd.f32 %v3692, %v3852
        %v3854 = vpop.f32.mrb[0].mxu0
        %3855 = vdwg.mxu0
        %3856 = vst [vmem:[%s271] sm:$0xff] %v3730
        %3857 = vst [vmem:[%s271 + $0x8] sm:$0xff] %v3733
        %3858 = vst [vmem:[%s271 + $0x10] sm:$0xff] %v3738
        %3859 = vst [vmem:[%s271 + $0x18] sm:$0xff] %v3741
        %3860 = vst [vmem:[%s271 + $0x20] sm:$0xff] %v3746
        %3861 = vst [vmem:[%s271 + $0x28] sm:$0xff] %v3749
        %3862 = vst [vmem:[%s271 + $0x30] sm:$0xff] %v3754
        %3863 = vst [vmem:[%s271 + $0x38] sm:$0xff] %v3757
        %3864 = vst [vmem:[%s271 + $0x40] sm:$0xff] %v3762
        %3865 = vst [vmem:[%s271 + $0x48] sm:$0xff] %v3765
        %3866 = vst [vmem:[%s271 + $0x50] sm:$0xff] %v3770
        %3867 = vst [vmem:[%s271 + $0x58] sm:$0xff] %v3773
        %3868 = vst [vmem:[%s271 + $0x60] sm:$0xff] %v3778
        %3869 = vst [vmem:[%s271 + $0x68] sm:$0xff] %v3781
        %3870 = vst [vmem:[%s271 + $0x70] sm:$0xff] %v3786
        %3871 = vst [vmem:[%s271 + $0x78] sm:$0xff] %v3789
        %3872 = vst [vmem:[%s271 + $0x80] sm:$0xff] %v3794
        %3873 = vst [vmem:[%s271 + $0x88] sm:$0xff] %v3797
        %3874 = vst [vmem:[%s271 + $0x90] sm:$0xff] %v3802
        %3875 = vst [vmem:[%s271 + $0x98] sm:$0xff] %v3805
        %3876 = vst [vmem:[%s271 + $0xa0] sm:$0xff] %v3810
        %3877 = vst [vmem:[%s271 + $0xa8] sm:$0xff] %v3813
        %3878 = vst [vmem:[%s271 + $0xb0] sm:$0xff] %v3818
        %3879 = vst [vmem:[%s271 + $0xb8] sm:$0xff] %v3821
        %3880 = vst [vmem:[%s271 + $0xc0] sm:$0xff] %v3826
        %3881 = vst [vmem:[%s271 + $0xc8] sm:$0xff] %v3829
        %3882 = vst [vmem:[%s271 + $0xd0] sm:$0xff] %v3834
        %3883 = vst [vmem:[%s271 + $0xd8] sm:$0xff] %v3837
        %3884 = vst [vmem:[%s271 + $0xe0] sm:$0xff] %v3842
        %3885 = vst [vmem:[%s271 + $0xe8] sm:$0xff] %v3845
        %3886 = vst [vmem:[%s271 + $0xf0] sm:$0xff] %v3850
        %3887 = vst [vmem:[%s271 + $0xf8] sm:$0xff] %v3853
        %s3888 = sand.u32 %s141, 1
        %s3889 = scalar_lea.sflag [#allocation4], %s3888
        %s3890 = sand.u32 %s141, 1
        %s3891 = smul.addr %s3890, 256
        %s3892 = scalar_lea.vmem [#allocation8], %s3891
        // Predicated region
        $region53: #{tpu_custom_call.1} parent=39 // pred_check
          %p3893 = pneg %p151
        $region54: #{tpu_custom_call.1} parent=39 // pred_check_branch
          %3895 = sbr.rel (%p3893) target = $region56
        $region55: #{tpu_custom_call.1} parent=39 // pred_region
          %s3897 = ssub.s32 4096, 4096
          %3898 = vsyncadd %s3889, %s3897
          %s3899 = smul.addr %s23, 32
          %s3900 = smul.addr %s3899, 128
          %s3901 = scalar_lea.hbm %s5, %s3900
          %s3902 = sshll.u32 %s3892, 4
          %s3903 = int_to_ptr.vmem [resolvable:$true] %s3902
          %3908 = dma.vmem_to_hbm [thread:$0]  %s3903, 4096, %s3901, %s3889, 128, 128, 8
        $region56: #{tpu_custom_call.1} parent=39 // pred_fallthru
          _
      $region40: #{tpu_custom_call.1} parent=5 // pred_fallthru
        _
      %p3909 = scmp.le.s32.totalorder 2, %s18
      // Predicated region
      $region57: #{tpu_custom_call.1} parent=5 // pred_check
        %p3910 = pneg %p3909
      $region58: #{tpu_custom_call.1} parent=5 // pred_check_branch
        %3912 = sbr.rel (%p3910) target = $region60
      $region59: #{tpu_custom_call.1} parent=5 // pred_region
        %s3913 = ssub.s32 %s18, 2
        // Predicated region
        $region61: #{tpu_custom_call.1} parent=59 // pred_check
          %p3914 = pneg %p157
        $region62: #{tpu_custom_call.1} parent=59 // pred_check_branch
          %3916 = sbr.rel (%p3914) target = $region64
        $region63: #{tpu_custom_call.1} parent=59 // pred_region
          %s3917 = sand.u32 %s142, 1
          %s3918 = scalar_lea.sflag [#allocation4], %s3917
          %s3919 = sand.u32 %s142, 1
          %s3920 = smul.addr %s3919, 256
          %s3921 = scalar_lea.vmem [#allocation8], %s3920
          %3922 = dma.done %s3918, 4096
        $region64: #{tpu_custom_call.1} parent=59 // pred_fallthru
          _
      $region60: #{tpu_custom_call.1} parent=5 // pred_fallthru
        _
    $region6: #{tpu_custom_call.1} parent=1 // loop_footer
      %s22 = sadd.s32 1, %s18
    $region7: #{tpu_custom_call.1} parent=1 // loop_footer_branch
      %17 = sbr.rel target = $region3
    $region8: #{tpu_custom_call.1} parent=1 // loop_exit
      _
    %3923 = vsyncpa [#allocation3], 1
    %s3924 = scalar_lea.sflag [#allocation3], 1
    %3925 = vsyncpa %s3924, 1
    %3926 = vsyncpa [#allocation6], 1
    %3927 = vsyncpa [#allocation4], 1
    %s3928 = scalar_lea.sflag [#allocation4], 1
    %3929 = vsyncpa %s3928, 1

</llo_original>
